<compile_context>
chip_gen: v5e
topology: v5e:2x2
jax: 0.10.0
libtpu: 0.0.40
codegen_flags: <defaults>
</compile_context>

<pallas_src>
import functools

import jax
import jax.numpy as jnp
from jax import lax
from jax.experimental import pallas as pl
from jax.experimental.pallas import tpu as pltpu


# -----------------------------------------------------------------------------
# Fused MILNet kernel: IClassifier + BClassifier + EHRClassifier.
# -----------------------------------------------------------------------------
def _milnet_kernel(inv_temp, eps,
                   # inputs
                   x_ref, wpack_ref, bpack_ref, wq2_ref, bq2_ref,
                   wfcc2_ref, bfcc_ref,
                   ehr_ref, emb_ref, w1c_ref, w1e_ref, b1_ref,
                   w2e_ref, b2e_ref, gamma_ref, beta_ref,
                   # outputs
                   cls_ref, a_ref, b_ref, pred_ref, ehr_ln_ref, ehr_p_ref,
                   # scratch
                   q_vmem, run_max, run_qmax, bag_acc):
    p = pl.program_id(0)            # phase: 0 = project/stream, 1 = pool
    i = pl.program_id(1)            # instance-tile index
    num_tiles = pl.num_programs(1)
    tm = x_ref.shape[0]
    hq = q_vmem.shape[1]
    c = cls_ref.shape[1]
    row0 = pl.multiple_of(i * tm, tm)

    x = x_ref[...]                                            # (TM, D) f32

    # ---- init running critical-instance stats (very first step only)
    @pl.when(jnp.logical_and(p == 0, i == 0))
    def _init():
        run_max[...] = jnp.full_like(run_max, -jnp.inf)
        run_qmax[...] = jnp.zeros_like(run_qmax)

    # ---- phase 0: streamed projections + incremental critical-instance track
    @pl.when(p == 0)
    def _stream():
        # One packed matmul: [wq1 | wi | 0-pad] -> (TM, 256), then slice.
        y = (jnp.dot(x, wpack_ref[...], preferred_element_type=jnp.float32)
             + bpack_ref[...])
        h = jnp.maximum(y[:, :hq], 0.0)                       # (TM, Hq)
        cls_tile = y[:, hq:hq + c]                            # (TM, C)
        q = jnp.tanh(
            jnp.dot(h, wq2_ref[...], preferred_element_type=jnp.float32)
            + bq2_ref[...])                                   # (TM, Hq)

        cls_ref[pl.ds(row0, tm), :] = cls_tile
        q_vmem[pl.ds(row0, tm), :] = q.astype(q_vmem.dtype)   # bf16 residency

        # Per-class running max + critical-instance Q rows (first-argmax ties).
        tile_max = jnp.max(cls_tile, axis=0, keepdims=True)             # (1, C)
        rows = lax.broadcasted_iota(jnp.int32, cls_tile.shape, 0)       # (TM, C)
        first = jnp.min(jnp.where(cls_tile >= tile_max, rows, tm),
                        axis=0, keepdims=True)                          # (1, C)
        sel = (rows == first).astype(jnp.float32)                       # (TM, C)
        tile_qmax = lax.dot_general(sel, q, (((0,), (0,)), ((), ())),
                                    preferred_element_type=jnp.float32)  # (C, Hq)
        better = (tile_max > run_max[...]).astype(jnp.float32)          # (1, C)
        dsel = better * jnp.eye(c, dtype=jnp.float32)                   # diag(better)
        run_qmax[...] += jnp.dot(dsel, tile_qmax - run_qmax[...],
                                 preferred_element_type=jnp.float32)
        run_max[...] = jnp.maximum(run_max[...], tile_max)

    # ---- phase 1, first step: attention softmax (lane-dense (C, N)), zero bag
    @pl.when(jnp.logical_and(p == 1, i == 0))
    def _attention():
        q_all = q_vmem[...]                                   # (N, Hq) bf16
        qmax = run_qmax[...].astype(q_all.dtype)              # (C, Hq)
        logits = lax.dot_general(qmax, q_all, (((1,), (1,)), ((), ())),
                                 preferred_element_type=jnp.float32)    # (C, N)
        logits = logits * (1.0 / (float(hq) ** 0.5))
        m = jnp.max(logits, axis=1, keepdims=True)
        e = jnp.exp(logits - m)
        denom = jnp.sum(e, axis=1, keepdims=True)
        a_ref[...] = e * pl.reciprocal(denom, approx=True)    # one unmasked store
        bag_acc[...] = jnp.zeros_like(bag_acc)

    # ---- phase 1: re-stream feats from HBM, accumulate B = A^T V per tile
    @pl.when(p == 1)
    def _pool():
        att = a_ref[:, pl.ds(row0, tm)]                       # (C, TM) f32
        bag_acc[...] += lax.dot_general(att, x, (((1,), (0,)), ((), ())),
                                        preferred_element_type=jnp.float32)

    # ---- last step: Conv1d head + EHR head
    @pl.when(jnp.logical_and(p == 1, i == num_tiles - 1))
    def _finalize():
        bag = bag_acc[...]                                    # (C, D)
        b_ref[...] = bag

        # Conv1d(C, C, kernel=D): one matmul (C, D)@(D, C*C), then pick the
        # C diagonal (1, C) blocks with static slices (tiny VPU adds).
        t = jnp.dot(bag, wfcc2_ref[...], preferred_element_type=jnp.float32)
        pred = bfcc_ref[...]                                  # (1, C)
        for ci in range(c):                                   # static, C=4
            pred = pred + t[ci:ci + 1, ci * c:(ci + 1) * c]
        pred_ref[...] = pred

        # EHR head: embedding lookup + 2-layer MLP + LayerNorm + sigmoid.
        xe = ehr_ref[...]                                     # (1, 2)
        cat = xe[:, 0:1]                                      # categorical
        cont = xe[:, 1:2]                                     # continuous
        # TODO(synk): assumes the categorical feature is exactly {0, 1}.
        emb = jnp.where(cat < 0.5, emb_ref[0:1, :], emb_ref[1:2, :])    # (1, E)
        he = jnp.maximum(
            cont * w1c_ref[...]
            + jnp.dot(emb, w1e_ref[...], preferred_element_type=jnp.float32)
            + b1_ref[...], 0.0)                                         # (1, 16)
        lg = (jnp.dot(he, w2e_ref[...], preferred_element_type=jnp.float32)
              + b2e_ref[...]) * inv_temp                                # (1, C)
        mu = jnp.mean(lg, axis=-1, keepdims=True)
        var = jnp.mean(jnp.square(lg - mu), axis=-1, keepdims=True)
        ln = (lg - mu) * lax.rsqrt(var + eps) * gamma_ref[...] + beta_ref[...]
        ehr_ln_ref[...] = ln
        ehr_p_ref[...] = 1.0 / (1.0 + jnp.exp(-ln))


def _pick_tile_m(n, requested=None, cap=512):
    """Instance-tile size: 128-multiple divisor of N (lane-aligned), cap ~512."""
    if requested is not None and requested > 0:
        if requested == n or (n % requested == 0 and requested % 128 == 0):
            return requested
    if n <= cap:
        return n
    t = (cap // 128) * 128
    while t >= 128:
        if n % t == 0:
            return t
        t -= 128
    return n    # ragged fallback (see TODO at top)


# -----------------------------------------------------------------------------
# MILNet forward (single fused pallas_call + thin layout plumbing).
# -----------------------------------------------------------------------------
def milnet_forward(x, params, *, temperature=1.0, tile_m=None):
    feats, ehr = x
    feats = feats.astype(jnp.float32).reshape(feats.shape[0], -1)
    ehr = ehr.reshape(1, -1).astype(jnp.float32)           # torch: ehr.view(1, -1)

    N, D = feats.shape
    C = params["wi"].shape[1]
    Hq = params["wq1"].shape[1]
    E = params["emb"].shape[1]
    Hh = params["w1"].shape[1]

    tm = _pick_tile_m(N, tile_m)
    assert N % tm == 0
    num_tiles = N // tm

    f32 = jnp.float32

    # Pack IClassifier weight into the q-MLP first layer; pad lanes to 256.
    pcols = ((Hq + C + 127) // 128) * 128
    wpack = jnp.zeros((D, pcols), f32)
    wpack = wpack.at[:, :Hq].set(params["wq1"]).at[:, Hq:Hq + C].set(params["wi"])
    bpack = jnp.zeros((1, pcols), f32)
    bpack = bpack.at[:, :Hq].set(params["bq1"]).at[:, Hq:Hq + C].set(params["bi"])

    # Conv1d weight stored here as (in_c, D, out_c) == torch weight.permute(1,2,0);
    # reshape to (D, C*C) so the head is a single matmul.
    wfcc2 = jnp.transpose(params["wfcc"], (1, 0, 2)).reshape(D, C * C)

    w1 = params["w1"]
    w1c = w1[0:1, :]           # row for the continuous EHR feature
    w1e = w1[1:, :]            # rows for the embedding features

    res = lambda p, i: (0, 0)  # resident (constant index map) blocks

    kernel = functools.partial(_milnet_kernel, 1.0 / float(temperature), 1e-5)

    cls, a_t, bag, pred, ehr_ln, ehr_p = pl.pallas_call(
        kernel,
        out_shape=(
            jax.ShapeDtypeStruct((N, C), f32),     # classes
            jax.ShapeDtypeStruct((C, N), f32),     # A^T (lane-dense in-kernel)
            jax.ShapeDtypeStruct((C, D), f32),     # B
            jax.ShapeDtypeStruct((1, C), f32),     # prediction_bag
            jax.ShapeDtypeStruct((1, C), f32),     # ehr logits (post-LN)
            jax.ShapeDtypeStruct((1, C), f32),     # ehr probabilities
        ),
        grid=(2, num_tiles),                       # (phase, instance tile)
        in_specs=[
            pl.BlockSpec((tm, D), lambda p, i: (i, 0)),   # feats, streamed twice
            pl.BlockSpec((D, pcols), res),                # packed [wq1|wi]
            pl.BlockSpec((1, pcols), res),                # packed bias
            pl.BlockSpec((Hq, Hq), res),                  # q: Linear 2
            pl.BlockSpec((1, Hq), res),
            pl.BlockSpec((D, C * C), res),                # fcc conv weight (2D)
            pl.BlockSpec((1, C), res),                    # fcc conv bias
            pl.BlockSpec((1, ehr.shape[1]), res),         # ehr input
            pl.BlockSpec((2, E), res),                    # embedding table
            pl.BlockSpec((1, Hh), res),                   # fc1 row (continuous)
            pl.BlockSpec((E, Hh), res),                   # fc1 rows (embedding)
            pl.BlockSpec((1, Hh), res),                   # fc1 bias
            pl.BlockSpec((Hh, C), res),                   # fc2 weight
            pl.BlockSpec((1, C), res),                    # fc2 bias
            pl.BlockSpec((1, C), res),                    # LN gamma
            pl.BlockSpec((1, C), res),                    # LN beta
        ],
        out_specs=[
            pl.BlockSpec((N, C), res),   # resident; written tile-by-tile
            pl.BlockSpec((C, N), res),   # resident; written once, lane-dense
            pl.BlockSpec((C, D), res),
            pl.BlockSpec((1, C), res),
            pl.BlockSpec((1, C), res),
            pl.BlockSpec((1, C), res),
        ],
        scratch_shapes=[
            pltpu.VMEM((N, Hq), jnp.bfloat16),   # Q resident (bf16: 256 B/row)
            pltpu.VMEM((1, C), jnp.float32),     # running per-class max
            pltpu.VMEM((C, Hq), jnp.float32),    # running critical-instance Q
            pltpu.VMEM((C, D), jnp.float32),     # bag accumulator
        ],
        compiler_params=pltpu.CompilerParams(
            # Sequential on both axes: cross-tile running stats + 2-phase dep.
            dimension_semantics=("arbitrary", "arbitrary"),
            # Explicit headroom: fits v5e (16 MiB default), v6e, v7x (64 MiB).
            vmem_limit_bytes=48 * 1024 * 1024,
        ),
    )(feats, wpack, bpack, params["wq2"], params["bq2"], wfcc2, params["bfcc"],
      ehr, params["emb"], w1c, w1e, params["b1"], params["w2"], params["b2"],
      params["gamma"], params["beta"])

    A = a_t.T            # back to the torch orientation (N, C)
    B = bag[None]        # torch returns B.view(1, C, D)
    # torch MILNet returns (classes, prediction_bag, A, B, ehr_feats_out, ehr_classes)
    return cls, pred, A, B, ehr_ln, ehr_p


# -----------------------------------------------------------------------------
# Parameters + pure-JAX reference (self-check).
# -----------------------------------------------------------------------------
def init_milnet_params(key, *, feature_size=1024, output_class=4, q_hidden=128,
                       ehr_emb_dim=4, ehr_hidden=16, dtype=jnp.float32):
    ks = jax.random.split(key, 7)

    def linear(k, fan_in, shape):
        bound = 1.0 / (fan_in ** 0.5)
        return jax.random.uniform(k, shape, dtype, minval=-bound, maxval=bound)

    D, C, Hq = feature_size, output_class, q_hidden
    # NOTE: wfcc is stored as (in_c, D, out_c) == torch Conv1d weight.permute(1,2,0).
    return {
        "wi": linear(ks[0], D, (D, C)), "bi": jnp.zeros((1, C), dtype),
        "wq1": linear(ks[1], D, (D, Hq)), "bq1": jnp.zeros((1, Hq), dtype),
        "wq2": linear(ks[2], Hq, (Hq, Hq)), "bq2": jnp.zeros((1, Hq), dtype),
        "wfcc": linear(ks[3], C * D, (C, D, C)), "bfcc": jnp.zeros((1, C), dtype),
        "emb": jax.random.normal(ks[4], (2, ehr_emb_dim), dtype),
        "w1": linear(ks[5], 1 + ehr_emb_dim, (1 + ehr_emb_dim, ehr_hidden)),
        "b1": jnp.zeros((1, ehr_hidden), dtype),
        "w2": linear(ks[6], ehr_hidden, (ehr_hidden, C)),
        "b2": jnp.zeros((1, C), dtype),
        "gamma": jnp.ones((1, C), dtype),
        "beta": jnp.zeros((1, C), dtype),
    }


def milnet_reference(feats, ehr, params, *, temperature=1.0):
    P = lax.Precision.HIGHEST
    classes = jnp.dot(feats, params["wi"], precision=P) + params["bi"]
    h = jnp.maximum(jnp.dot(feats, params["wq1"], precision=P) + params["bq1"], 0.0)
    Q = jnp.tanh(jnp.dot(h, params["wq2"], precision=P) + params["bq2"])
    idx = jnp.argmax(classes, axis=0)                       # m_indices[0, :]
    q_max = Q[idx, :]                                       # (C, Hq)
    A = jax.nn.softmax(
        jnp.dot(Q, q_max.T, precision=P) / jnp.sqrt(jnp.float32(Q.shape[1])),
        axis=0)
    B = jnp.dot(A.T, feats, precision=P)
    pred = jnp.einsum("cd,cdo->o", B, params["wfcc"], precision=P)[None, :] \
        + params["bfcc"]
    # EHR head
    ehr = ehr.reshape(1, -1).astype(jnp.float32)
    cat = ehr[:, 0].astype(jnp.int32)
    cont = ehr[:, 1:2]
    emb = params["emb"][cat]
    xcat = jnp.concatenate([cont, emb], axis=1)
    hh = jnp.maximum(jnp.dot(xcat, params["w1"], precision=P) + params["b1"], 0.0)
    logits = (jnp.dot(hh, params["w2"], precision=P) + params["b2"]) / temperature
    mu = jnp.mean(logits, axis=-1, keepdims=True)
    var = jnp.mean((logits - mu) ** 2, axis=-1, keepdims=True)
    ln = (logits - mu) / jnp.sqrt(var + 1e-5) * params["gamma"] + params["beta"]
    probs = 1.0 / (1.0 + jnp.exp(-ln))
    return classes, pred, A, B[None], ln, probs


if __name__ == "__main__":
    key = jax.random.PRNGKey(0)
    k_feats, k_params = jax.random.split(key)

    # Small multi-tile bag; feature/class/hidden sizes follow the module defaults.
    N, D, C, Hq = 256, 1024, 4, 128
    params = init_milnet_params(k_params, feature_size=D, output_class=C,
                                q_hidden=Hq)

    feats = jax.random.normal(k_feats, (N, D), dtype=jnp.float32) * 0.5
    # Make the critical (top-scoring) instance of every class unambiguous so the
    # kernel and the f32 reference agree on the selection under MXU rounding.
    for c_idx, row in enumerate((3, 77, 141, 230)):
        col = params["wi"][:, c_idx]
        feats = feats.at[row].add(6.0 * col / (jnp.sum(col * col) + 1e-6))

    ehr = jnp.array([[1.0, 0.37]], dtype=jnp.float32)   # (categorical, continuous)

    outs = milnet_forward((feats, ehr), params, temperature=1.0, tile_m=128)
    outs = jax.block_until_ready(outs)

    ref = milnet_reference(feats, ehr, params, temperature=1.0)
    names = ("classes", "prediction_bag", "A", "B", "ehr_feats_out", "ehr_classes")
    for name, got, want in zip(names, outs, ref):
        assert got.shape == want.shape, (name, got.shape, want.shape)
        assert jnp.allclose(got, want, rtol=2e-2, atol=2e-2), (
            name, float(jnp.max(jnp.abs(got - want))))

    print("KERNEL_OK")
</pallas_src>

<mosaic_0001>
module attributes {stable_mosaic.version = 11 : i64} {
  func.func @_milnet_kernel(%arg0: i32, %arg1: i32, %arg2: memref<128x1024xf32, #tpu.memory_space<vmem>>, %arg3: memref<1024x256xf32, #tpu.memory_space<vmem>>, %arg4: memref<1x256xf32, #tpu.memory_space<vmem>>, %arg5: memref<128x128xf32, #tpu.memory_space<vmem>>, %arg6: memref<1x128xf32, #tpu.memory_space<vmem>>, %arg7: memref<1024x16xf32, #tpu.memory_space<vmem>>, %arg8: memref<1x4xf32, #tpu.memory_space<vmem>>, %arg9: memref<1x2xf32, #tpu.memory_space<vmem>>, %arg10: memref<2x4xf32, #tpu.memory_space<vmem>>, %arg11: memref<1x16xf32, #tpu.memory_space<vmem>>, %arg12: memref<4x16xf32, #tpu.memory_space<vmem>>, %arg13: memref<1x16xf32, #tpu.memory_space<vmem>>, %arg14: memref<16x4xf32, #tpu.memory_space<vmem>>, %arg15: memref<1x4xf32, #tpu.memory_space<vmem>>, %arg16: memref<1x4xf32, #tpu.memory_space<vmem>>, %arg17: memref<1x4xf32, #tpu.memory_space<vmem>>, %arg18: memref<256x4xf32, #tpu.memory_space<vmem>>, %arg19: memref<4x256xf32, #tpu.memory_space<vmem>>, %arg20: memref<4x1024xf32, #tpu.memory_space<vmem>>, %arg21: memref<1x4xf32, #tpu.memory_space<vmem>>, %arg22: memref<1x4xf32, #tpu.memory_space<vmem>>, %arg23: memref<1x4xf32, #tpu.memory_space<vmem>>, %arg24: memref<256x128xbf16, #tpu.memory_space<vmem>>, %arg25: memref<1x4xf32, #tpu.memory_space<vmem>>, %arg26: memref<4x128xf32, #tpu.memory_space<vmem>>, %arg27: memref<4x1024xf32, #tpu.memory_space<vmem>>) attributes {dimension_semantics = [#tpu.dimension_semantics<arbitrary>, #tpu.dimension_semantics<arbitrary>], iteration_bounds = array<i64: 2, 2>, scalar_prefetch = 0 : i64, scratch_operands = 4 : i64, tpu.core_type = #tpu.core_type<tc>, window_params = [{transform_indices = @transform_0, window_bounds = array<i64: 128, 1024>}, {pipeline_mode = #tpu.pipeline_mode<synchronous>, transform_indices = @transform_1, window_bounds = array<i64: 1024, 256>}, {pipeline_mode = #tpu.pipeline_mode<synchronous>, transform_indices = @transform_2, window_bounds = array<i64: 1, 256>}, {pipeline_mode = #tpu.pipeline_mode<synchronous>, transform_indices = @transform_3, window_bounds = array<i64: 128, 128>}, {pipeline_mode = #tpu.pipeline_mode<synchronous>, transform_indices = @transform_4, window_bounds = array<i64: 1, 128>}, {pipeline_mode = #tpu.pipeline_mode<synchronous>, transform_indices = @transform_5, window_bounds = array<i64: 1024, 16>}, {pipeline_mode = #tpu.pipeline_mode<synchronous>, transform_indices = @transform_6, window_bounds = array<i64: 1, 4>}, {pipeline_mode = #tpu.pipeline_mode<synchronous>, transform_indices = @transform_7, window_bounds = array<i64: 1, 2>}, {pipeline_mode = #tpu.pipeline_mode<synchronous>, transform_indices = @transform_8, window_bounds = array<i64: 2, 4>}, {pipeline_mode = #tpu.pipeline_mode<synchronous>, transform_indices = @transform_9, window_bounds = array<i64: 1, 16>}, {pipeline_mode = #tpu.pipeline_mode<synchronous>, transform_indices = @transform_10, window_bounds = array<i64: 4, 16>}, {pipeline_mode = #tpu.pipeline_mode<synchronous>, transform_indices = @transform_11, window_bounds = array<i64: 1, 16>}, {pipeline_mode = #tpu.pipeline_mode<synchronous>, transform_indices = @transform_12, window_bounds = array<i64: 16, 4>}, {pipeline_mode = #tpu.pipeline_mode<synchronous>, transform_indices = @transform_13, window_bounds = array<i64: 1, 4>}, {pipeline_mode = #tpu.pipeline_mode<synchronous>, transform_indices = @transform_14, window_bounds = array<i64: 1, 4>}, {pipeline_mode = #tpu.pipeline_mode<synchronous>, transform_indices = @transform_15, window_bounds = array<i64: 1, 4>}, {pipeline_mode = #tpu.pipeline_mode<synchronous>, transform_indices = @transform_16, window_bounds = array<i64: 256, 4>}, {pipeline_mode = #tpu.pipeline_mode<synchronous>, transform_indices = @transform_17, window_bounds = array<i64: 4, 256>}, {pipeline_mode = #tpu.pipeline_mode<synchronous>, transform_indices = @transform_18, window_bounds = array<i64: 4, 1024>}, {pipeline_mode = #tpu.pipeline_mode<synchronous>, transform_indices = @transform_19, window_bounds = array<i64: 1, 4>}, {pipeline_mode = #tpu.pipeline_mode<synchronous>, transform_indices = @transform_20, window_bounds = array<i64: 1, 4>}, {pipeline_mode = #tpu.pipeline_mode<synchronous>, transform_indices = @transform_21, window_bounds = array<i64: 1, 4>}]} {
    %c128_i32 = arith.constant 128 : i32
    %0 = arith.muli %arg1, %c128_i32 : i32
    %1 = tpu.assume_multiple %0, 128 : i32
    %c0 = arith.constant 0 : index
    %c0_0 = arith.constant 0 : index
    %2 = vector.load %arg2[%c0, %c0_0] : memref<128x1024xf32, #tpu.memory_space<vmem>>, vector<128x1024xf32>
    %c0_i32 = arith.constant 0 : i32
    %3 = arith.cmpi eq, %arg0, %c0_i32 : i32
    %c0_i32_1 = arith.constant 0 : i32
    %4 = arith.cmpi eq, %arg1, %c0_i32_1 : i32
    %5 = arith.andi %3, %4 : i1
    %6 = arith.extui %5 : i1 to i32
    %c0_i32_2 = arith.constant 0 : i32
    %7 = arith.cmpi ne, %6, %c0_i32_2 : i32
    scf.if %7 {
      %cst = arith.constant 0xFF800000 : f32
      %24 = vector.broadcast %cst : f32 to vector<1x4xf32>
      %c0_12 = arith.constant 0 : index
      %c0_13 = arith.constant 0 : index
      %25 = vector.load %arg25[%c0_12, %c0_13] : memref<1x4xf32, #tpu.memory_space<vmem>>, vector<1x4xf32>
      tpu.vector_store %arg25[%c0_12, %c0_13], %24 {strides = array<i32>} : memref<1x4xf32, #tpu.memory_space<vmem>>, vector<1x4xf32>,
      %cst_14 = arith.constant 0.000000e+00 : f32
      %26 = vector.broadcast %cst_14 : f32 to vector<4x128xf32>
      %c0_15 = arith.constant 0 : index
      %c0_16 = arith.constant 0 : index
      %27 = vector.load %arg26[%c0_15, %c0_16] : memref<4x128xf32, #tpu.memory_space<vmem>>, vector<4x128xf32>
      tpu.vector_store %arg26[%c0_15, %c0_16], %26 {strides = array<i32>} : memref<4x128xf32, #tpu.memory_space<vmem>>, vector<4x128xf32>,
    } else {
    }
    %c0_i32_3 = arith.constant 0 : i32
    %8 = arith.cmpi eq, %arg0, %c0_i32_3 : i32
    %9 = arith.extui %8 : i1 to i32
    %c0_i32_4 = arith.constant 0 : i32
    %10 = arith.cmpi ne, %9, %c0_i32_4 : i32
    scf.if %10 {
      %c0_12 = arith.constant 0 : index
      %c0_13 = arith.constant 0 : index
      %24 = vector.load %arg3[%c0_12, %c0_13] : memref<1024x256xf32, #tpu.memory_space<vmem>>, vector<1024x256xf32>
      %cst = arith.constant dense<0.000000e+00> : vector<128x256xf32>
      %25 = tpu.matmul %2, %24, %cst {dimension_numbers = #tpu.dot_dimension_numbers<[1], [0], [0], [1], [0, 0, 1, 1], [], []>} : vector<128x1024xf32>, vector<1024x256xf32>, vector<128x256xf32> -> vector<128x256xf32>
      %c0_14 = arith.constant 0 : index
      %c0_15 = arith.constant 0 : index
      %26 = vector.load %arg4[%c0_14, %c0_15] : memref<1x256xf32, #tpu.memory_space<vmem>>, vector<1x256xf32>
      %27 = vector.broadcast %26 : vector<1x256xf32> to vector<128x256xf32>
      %28 = arith.addf %25, %27 : vector<128x256xf32>
      %29 = vector.extract_strided_slice %28 {offsets = [0, 0], sizes = [128, 128], strides = [1, 1]} : vector<128x256xf32> to vector<128x128xf32>
      %cst_16 = arith.constant 0.000000e+00 : f32
      %30 = vector.broadcast %cst_16 : f32 to vector<128x128xf32>
      %31 = arith.maximumf %29, %30 : vector<128x128xf32>
      %32 = vector.extract_strided_slice %28 {offsets = [0, 128], sizes = [128, 4], strides = [1, 1]} : vector<128x256xf32> to vector<128x4xf32>
      %c0_17 = arith.constant 0 : index
      %c0_18 = arith.constant 0 : index
      %33 = vector.load %arg5[%c0_17, %c0_18] : memref<128x128xf32, #tpu.memory_space<vmem>>, vector<128x128xf32>
      %cst_19 = arith.constant dense<0.000000e+00> : vector<128x128xf32>
      %34 = tpu.matmul %31, %33, %cst_19 {dimension_numbers = #tpu.dot_dimension_numbers<[1], [0], [0], [1], [0, 0, 1, 1], [], []>} : vector<128x128xf32>, vector<128x128xf32>, vector<128x128xf32> -> vector<128x128xf32>
      %c0_20 = arith.constant 0 : index
      %c0_21 = arith.constant 0 : index
      %35 = vector.load %arg6[%c0_20, %c0_21] : memref<1x128xf32, #tpu.memory_space<vmem>>, vector<1x128xf32>
      %36 = vector.broadcast %35 : vector<1x128xf32> to vector<128x128xf32>
      %37 = arith.addf %34, %36 : vector<128x128xf32>
      %38 = math.tanh %37 : vector<128x128xf32>
      %39 = arith.index_cast %1 : i32 to index
      %c0_22 = arith.constant 0 : index
      %40 = vector.load %arg18[%39, %c0_22] : memref<256x4xf32, #tpu.memory_space<vmem>>, vector<128x4xf32>
      tpu.vector_store %arg18[%39, %c0_22], %32 {strides = array<i32>} : memref<256x4xf32, #tpu.memory_space<vmem>>, vector<128x4xf32>,
      %41 = arith.truncf %38 : vector<128x128xf32> to vector<128x128xbf16>
      %42 = arith.index_cast %1 : i32 to index
      %c0_23 = arith.constant 0 : index
      %43 = vector.load %arg24[%42, %c0_23] : memref<256x128xbf16, #tpu.memory_space<vmem>>, vector<128x128xbf16>
      tpu.vector_store %arg24[%42, %c0_23], %41 {strides = array<i32>} : memref<256x128xbf16, #tpu.memory_space<vmem>>, vector<128x128xbf16>,
      %cst_24 = arith.constant dense<0xFF800000> : vector<4xf32>
      %44 = vector.multi_reduction <maximumf>, %32, %cst_24 [0] : vector<128x4xf32> to vector<4xf32>
      %45 = vector.shape_cast %44 : vector<4xf32> to vector<1x4xf32>
      %46 = tpu.iota {dimensions = array<i32: 0>} : vector<128x4xi32>
      %47 = vector.broadcast %45 : vector<1x4xf32> to vector<128x4xf32>
      %48 = arith.cmpf oge, %32, %47 : vector<128x4xf32>
      %c128_i32_25 = arith.constant 128 : i32
      %49 = vector.broadcast %c128_i32_25 : i32 to vector<128x4xi32>
      %50 = arith.select %48, %46, %49 : vector<128x4xi1>, vector<128x4xi32>
      %cst_26 = arith.constant dense<2147483647> : vector<4xi32>
      %51 = vector.multi_reduction <minsi>, %50, %cst_26 [0] : vector<128x4xi32> to vector<4xi32>
      %52 = vector.shape_cast %51 : vector<4xi32> to vector<1x4xi32>
      %53 = vector.broadcast %52 : vector<1x4xi32> to vector<128x4xi32>
      %54 = arith.cmpi eq, %46, %53 : vector<128x4xi32>
      %55 = arith.extui %54 : vector<128x4xi1> to vector<128x4xi32>
      %56 = arith.sitofp %55 : vector<128x4xi32> to vector<128x4xf32>
      %cst_27 = arith.constant dense<0.000000e+00> : vector<4x128xf32>
      %57 = tpu.matmul %56, %38, %cst_27 {dimension_numbers = #tpu.dot_dimension_numbers<[0], [0], [1], [1], [0, 1, 1, 1], [], []>} : vector<128x4xf32>, vector<128x128xf32>, vector<4x128xf32> -> vector<4x128xf32>
      %c0_28 = arith.constant 0 : index
      %c0_29 = arith.constant 0 : index
      %58 = vector.load %arg25[%c0_28, %c0_29] : memref<1x4xf32, #tpu.memory_space<vmem>>, vector<1x4xf32>
      %59 = arith.cmpf ogt, %45, %58 : vector<1x4xf32>
      %60 = arith.extui %59 : vector<1x4xi1> to vector<1x4xi32>
      %61 = arith.sitofp %60 : vector<1x4xi32> to vector<1x4xf32>
      %62 = tpu.iota {dimensions = array<i32: 0>} : vector<4x4xi32>
      %63 = tpu.iota {dimensions = array<i32: 1>} : vector<4x4xi32>
      %c0_i32_30 = arith.constant 0 : i32
      %64 = vector.broadcast %c0_i32_30 : i32 to vector<4x4xi32>
      %65 = arith.addi %62, %64 : vector<4x4xi32>
      %66 = arith.cmpi eq, %65, %63 : vector<4x4xi32>
      %67 = arith.extui %66 : vector<4x4xi1> to vector<4x4xi32>
      %68 = arith.sitofp %67 : vector<4x4xi32> to vector<4x4xf32>
      %69 = vector.broadcast %61 : vector<1x4xf32> to vector<4x4xf32>
      %70 = arith.mulf %69, %68 : vector<4x4xf32>
      %c0_31 = arith.constant 0 : index
      %c0_32 = arith.constant 0 : index
      %71 = vector.load %arg26[%c0_31, %c0_32] : memref<4x128xf32, #tpu.memory_space<vmem>>, vector<4x128xf32>
      %c0_33 = arith.constant 0 : index
      %c0_34 = arith.constant 0 : index
      %72 = vector.load %arg26[%c0_33, %c0_34] : memref<4x128xf32, #tpu.memory_space<vmem>>, vector<4x128xf32>
      %73 = arith.subf %57, %72 : vector<4x128xf32>
      %cst_35 = arith.constant dense<0.000000e+00> : vector<4x128xf32>
      %74 = tpu.matmul %70, %73, %cst_35 {dimension_numbers = #tpu.dot_dimension_numbers<[1], [0], [0], [1], [0, 0, 1, 1], [], []>} : vector<4x4xf32>, vector<4x128xf32>, vector<4x128xf32> -> vector<4x128xf32>
      %75 = arith.addf %71, %74 : vector<4x128xf32>
      %c0_36 = arith.constant 0 : index
      %c0_37 = arith.constant 0 : index
      %76 = vector.load %arg26[%c0_36, %c0_37] : memref<4x128xf32, #tpu.memory_space<vmem>>, vector<4x128xf32>
      tpu.vector_store %arg26[%c0_36, %c0_37], %75 {strides = array<i32>} : memref<4x128xf32, #tpu.memory_space<vmem>>, vector<4x128xf32>,
      %c0_38 = arith.constant 0 : index
      %c0_39 = arith.constant 0 : index
      %77 = vector.load %arg25[%c0_38, %c0_39] : memref<1x4xf32, #tpu.memory_space<vmem>>, vector<1x4xf32>
      %78 = arith.maximumf %77, %45 : vector<1x4xf32>
      %c0_40 = arith.constant 0 : index
      %c0_41 = arith.constant 0 : index
      %79 = vector.load %arg25[%c0_40, %c0_41] : memref<1x4xf32, #tpu.memory_space<vmem>>, vector<1x4xf32>
      tpu.vector_store %arg25[%c0_40, %c0_41], %78 {strides = array<i32>} : memref<1x4xf32, #tpu.memory_space<vmem>>, vector<1x4xf32>,
    } else {
    }
    %c1_i32 = arith.constant 1 : i32
    %11 = arith.cmpi eq, %arg0, %c1_i32 : i32
    %c0_i32_5 = arith.constant 0 : i32
    %12 = arith.cmpi eq, %arg1, %c0_i32_5 : i32
    %13 = arith.andi %11, %12 : i1
    %14 = arith.extui %13 : i1 to i32
    %c0_i32_6 = arith.constant 0 : i32
    %15 = arith.cmpi ne, %14, %c0_i32_6 : i32
    scf.if %15 {
      %c0_12 = arith.constant 0 : index
      %c0_13 = arith.constant 0 : index
      %24 = vector.load %arg24[%c0_12, %c0_13] : memref<256x128xbf16, #tpu.memory_space<vmem>>, vector<256x128xbf16>
      %c0_14 = arith.constant 0 : index
      %c0_15 = arith.constant 0 : index
      %25 = vector.load %arg26[%c0_14, %c0_15] : memref<4x128xf32, #tpu.memory_space<vmem>>, vector<4x128xf32>
      %26 = arith.truncf %25 : vector<4x128xf32> to vector<4x128xbf16>
      %cst = arith.constant dense<0.000000e+00> : vector<4x256xf32>
      %27 = tpu.matmul %26, %24, %cst {dimension_numbers = #tpu.dot_dimension_numbers<[1], [1], [0], [0], [0, 0, 1, 0], [], []>} : vector<4x128xbf16>, vector<256x128xbf16>, vector<4x256xf32> -> vector<4x256xf32>
      %cst_16 = arith.constant 0.0883883461 : f32
      %28 = vector.broadcast %cst_16 : f32 to vector<4x256xf32>
      %29 = arith.mulf %27, %28 : vector<4x256xf32>
      %cst_17 = arith.constant dense<0xFF800000> : vector<4xf32>
      %30 = vector.multi_reduction <maximumf>, %29, %cst_17 [1] : vector<4x256xf32> to vector<4xf32>
      %31 = vector.shape_cast %30 : vector<4xf32> to vector<4x1xf32>
      %32 = vector.broadcast %31 : vector<4x1xf32> to vector<4x256xf32>
      %33 = arith.subf %29, %32 : vector<4x256xf32>
      %34 = math.exp %33 : vector<4x256xf32>
      %cst_18 = arith.constant dense<0.000000e+00> : vector<4xf32>
      %35 = vector.multi_reduction <add>, %34, %cst_18 [1] : vector<4x256xf32> to vector<4xf32>
      %36 = vector.shape_cast %35 : vector<4xf32> to vector<4x1xf32>
      %37 = tpu.reciprocal %36 {approx = true} : vector<4x1xf32> -> vector<4x1xf32>
      %38 = vector.broadcast %37 : vector<4x1xf32> to vector<4x256xf32>
      %39 = arith.mulf %34, %38 : vector<4x256xf32>
      %c0_19 = arith.constant 0 : index
      %c0_20 = arith.constant 0 : index
      %40 = vector.load %arg19[%c0_19, %c0_20] : memref<4x256xf32, #tpu.memory_space<vmem>>, vector<4x256xf32>
      tpu.vector_store %arg19[%c0_19, %c0_20], %39 {strides = array<i32>} : memref<4x256xf32, #tpu.memory_space<vmem>>, vector<4x256xf32>,
      %cst_21 = arith.constant 0.000000e+00 : f32
      %41 = vector.broadcast %cst_21 : f32 to vector<4x1024xf32>
      %c0_22 = arith.constant 0 : index
      %c0_23 = arith.constant 0 : index
      %42 = vector.load %arg27[%c0_22, %c0_23] : memref<4x1024xf32, #tpu.memory_space<vmem>>, vector<4x1024xf32>
      tpu.vector_store %arg27[%c0_22, %c0_23], %41 {strides = array<i32>} : memref<4x1024xf32, #tpu.memory_space<vmem>>, vector<4x1024xf32>,
    } else {
    }
    %c1_i32_7 = arith.constant 1 : i32
    %16 = arith.cmpi eq, %arg0, %c1_i32_7 : i32
    %17 = arith.extui %16 : i1 to i32
    %c0_i32_8 = arith.constant 0 : i32
    %18 = arith.cmpi ne, %17, %c0_i32_8 : i32
    scf.if %18 {
      %c0_12 = arith.constant 0 : index
      %24 = arith.index_cast %1 : i32 to index
      %25 = vector.load %arg19[%c0_12, %24] : memref<4x256xf32, #tpu.memory_space<vmem>>, vector<4x128xf32>
      %c0_13 = arith.constant 0 : index
      %c0_14 = arith.constant 0 : index
      %26 = vector.load %arg27[%c0_13, %c0_14] : memref<4x1024xf32, #tpu.memory_space<vmem>>, vector<4x1024xf32>
      %cst = arith.constant dense<0.000000e+00> : vector<4x1024xf32>
      %27 = tpu.matmul %25, %2, %cst {dimension_numbers = #tpu.dot_dimension_numbers<[1], [0], [0], [1], [0, 0, 1, 1], [], []>} : vector<4x128xf32>, vector<128x1024xf32>, vector<4x1024xf32> -> vector<4x1024xf32>
      %28 = arith.addf %26, %27 : vector<4x1024xf32>
      %c0_15 = arith.constant 0 : index
      %c0_16 = arith.constant 0 : index
      %29 = vector.load %arg27[%c0_15, %c0_16] : memref<4x1024xf32, #tpu.memory_space<vmem>>, vector<4x1024xf32>
      tpu.vector_store %arg27[%c0_15, %c0_16], %28 {strides = array<i32>} : memref<4x1024xf32, #tpu.memory_space<vmem>>, vector<4x1024xf32>,
    } else {
    }
    %c1_i32_9 = arith.constant 1 : i32
    %19 = arith.cmpi eq, %arg0, %c1_i32_9 : i32
    %c1_i32_10 = arith.constant 1 : i32
    %20 = arith.cmpi eq, %arg1, %c1_i32_10 : i32
    %21 = arith.andi %19, %20 : i1
    %22 = arith.extui %21 : i1 to i32
    %c0_i32_11 = arith.constant 0 : i32
    %23 = arith.cmpi ne, %22, %c0_i32_11 : i32
    scf.if %23 {
      %c0_12 = arith.constant 0 : index
      %c0_13 = arith.constant 0 : index
      %24 = vector.load %arg27[%c0_12, %c0_13] : memref<4x1024xf32, #tpu.memory_space<vmem>>, vector<4x1024xf32>
      %c0_14 = arith.constant 0 : index
      %c0_15 = arith.constant 0 : index
      %25 = vector.load %arg20[%c0_14, %c0_15] : memref<4x1024xf32, #tpu.memory_space<vmem>>, vector<4x1024xf32>
      tpu.vector_store %arg20[%c0_14, %c0_15], %24 {strides = array<i32>} : memref<4x1024xf32, #tpu.memory_space<vmem>>, vector<4x1024xf32>,
      %c0_16 = arith.constant 0 : index
      %c0_17 = arith.constant 0 : index
      %26 = vector.load %arg7[%c0_16, %c0_17] : memref<1024x16xf32, #tpu.memory_space<vmem>>, vector<1024x16xf32>
      %cst = arith.constant dense<0.000000e+00> : vector<4x16xf32>
      %27 = tpu.matmul %24, %26, %cst {dimension_numbers = #tpu.dot_dimension_numbers<[1], [0], [0], [1], [0, 0, 1, 1], [], []>} : vector<4x1024xf32>, vector<1024x16xf32>, vector<4x16xf32> -> vector<4x16xf32>
      %c0_18 = arith.constant 0 : index
      %c0_19 = arith.constant 0 : index
      %28 = vector.load %arg8[%c0_18, %c0_19] : memref<1x4xf32, #tpu.memory_space<vmem>>, vector<1x4xf32>
      %29 = vector.extract_strided_slice %27 {offsets = [0, 0], sizes = [1, 4], strides = [1, 1]} : vector<4x16xf32> to vector<1x4xf32>
      %30 = arith.addf %28, %29 : vector<1x4xf32>
      %31 = vector.extract_strided_slice %27 {offsets = [1, 4], sizes = [1, 4], strides = [1, 1]} : vector<4x16xf32> to vector<1x4xf32>
      %32 = arith.addf %30, %31 : vector<1x4xf32>
      %33 = vector.extract_strided_slice %27 {offsets = [2, 8], sizes = [1, 4], strides = [1, 1]} : vector<4x16xf32> to vector<1x4xf32>
      %34 = arith.addf %32, %33 : vector<1x4xf32>
      %35 = vector.extract_strided_slice %27 {offsets = [3, 12], sizes = [1, 4], strides = [1, 1]} : vector<4x16xf32> to vector<1x4xf32>
      %36 = arith.addf %34, %35 : vector<1x4xf32>
      %c0_20 = arith.constant 0 : index
      %c0_21 = arith.constant 0 : index
      %37 = vector.load %arg21[%c0_20, %c0_21] : memref<1x4xf32, #tpu.memory_space<vmem>>, vector<1x4xf32>
      tpu.vector_store %arg21[%c0_20, %c0_21], %36 {strides = array<i32>} : memref<1x4xf32, #tpu.memory_space<vmem>>, vector<1x4xf32>,
      %c0_22 = arith.constant 0 : index
      %c0_23 = arith.constant 0 : index
      %38 = vector.load %arg9[%c0_22, %c0_23] : memref<1x2xf32, #tpu.memory_space<vmem>>, vector<1x2xf32>
      %39 = vector.extract_strided_slice %38 {offsets = [0, 0], sizes = [1, 1], strides = [1, 1]} : vector<1x2xf32> to vector<1x1xf32>
      %40 = vector.extract_strided_slice %38 {offsets = [0, 1], sizes = [1, 1], strides = [1, 1]} : vector<1x2xf32> to vector<1x1xf32>
      %cst_24 = arith.constant 5.000000e-01 : f32
      %41 = vector.broadcast %cst_24 : f32 to vector<1x1xf32>
      %42 = arith.cmpf olt, %39, %41 : vector<1x1xf32>
      %c0_25 = arith.constant 0 : index
      %c0_26 = arith.constant 0 : index
      %43 = vector.load %arg10[%c0_25, %c0_26] : memref<2x4xf32, #tpu.memory_space<vmem>>, vector<1x4xf32>
      %c1 = arith.constant 1 : index
      %c0_27 = arith.constant 0 : index
      %44 = vector.load %arg10[%c1, %c0_27] : memref<2x4xf32, #tpu.memory_space<vmem>>, vector<1x4xf32>
      %45 = vector.shape_cast %42 : vector<1x1xi1> to vector<1x1xi1>
      %46 = vector.broadcast %45 : vector<1x1xi1> to vector<1x4xi1>
      %47 = arith.select %46, %43, %44 : vector<1x4xi1>, vector<1x4xf32>
      %c0_28 = arith.constant 0 : index
      %c0_29 = arith.constant 0 : index
      %48 = vector.load %arg11[%c0_28, %c0_29] : memref<1x16xf32, #tpu.memory_space<vmem>>, vector<1x16xf32>
      %49 = vector.broadcast %40 : vector<1x1xf32> to vector<1x16xf32>
      %50 = arith.mulf %49, %48 : vector<1x16xf32>
      %c0_30 = arith.constant 0 : index
      %c0_31 = arith.constant 0 : index
      %51 = vector.load %arg12[%c0_30, %c0_31] : memref<4x16xf32, #tpu.memory_space<vmem>>, vector<4x16xf32>
      %cst_32 = arith.constant dense<0.000000e+00> : vector<1x16xf32>
      %52 = tpu.matmul %47, %51, %cst_32 {dimension_numbers = #tpu.dot_dimension_numbers<[1], [0], [0], [1], [0, 0, 1, 1], [], []>} : vector<1x4xf32>, vector<4x16xf32>, vector<1x16xf32> -> vector<1x16xf32>
      %53 = arith.addf %50, %52 : vector<1x16xf32>
      %c0_33 = arith.constant 0 : index
      %c0_34 = arith.constant 0 : index
      %54 = vector.load %arg13[%c0_33, %c0_34] : memref<1x16xf32, #tpu.memory_space<vmem>>, vector<1x16xf32>
      %55 = arith.addf %53, %54 : vector<1x16xf32>
      %cst_35 = arith.constant 0.000000e+00 : f32
      %56 = vector.broadcast %cst_35 : f32 to vector<1x16xf32>
      %57 = arith.maximumf %55, %56 : vector<1x16xf32>
      %c0_36 = arith.constant 0 : index
      %c0_37 = arith.constant 0 : index
      %58 = vector.load %arg14[%c0_36, %c0_37] : memref<16x4xf32, #tpu.memory_space<vmem>>, vector<16x4xf32>
      %cst_38 = arith.constant dense<0.000000e+00> : vector<1x4xf32>
      %59 = tpu.matmul %57, %58, %cst_38 {dimension_numbers = #tpu.dot_dimension_numbers<[1], [0], [0], [1], [0, 0, 1, 1], [], []>} : vector<1x16xf32>, vector<16x4xf32>, vector<1x4xf32> -> vector<1x4xf32>
      %c0_39 = arith.constant 0 : index
      %c0_40 = arith.constant 0 : index
      %60 = vector.load %arg15[%c0_39, %c0_40] : memref<1x4xf32, #tpu.memory_space<vmem>>, vector<1x4xf32>
      %61 = arith.addf %59, %60 : vector<1x4xf32>
      %cst_41 = arith.constant 1.000000e+00 : f32
      %62 = vector.broadcast %cst_41 : f32 to vector<1x4xf32>
      %63 = arith.mulf %61, %62 : vector<1x4xf32>
      %cst_42 = arith.constant dense<0.000000e+00> : vector<1xf32>
      %64 = vector.multi_reduction <add>, %63, %cst_42 [1] : vector<1x4xf32> to vector<1xf32>
      %65 = vector.shape_cast %64 : vector<1xf32> to vector<1x1xf32>
      %cst_43 = arith.constant 4.000000e+00 : f32
      %66 = vector.broadcast %cst_43 : f32 to vector<1x1xf32>
      %67 = arith.divf %65, %66 : vector<1x1xf32>
      %68 = vector.broadcast %67 : vector<1x1xf32> to vector<1x4xf32>
      %69 = arith.subf %63, %68 : vector<1x4xf32>
      %70 = arith.mulf %69, %69 : vector<1x4xf32>
      %cst_44 = arith.constant dense<0.000000e+00> : vector<1xf32>
      %71 = vector.multi_reduction <add>, %70, %cst_44 [1] : vector<1x4xf32> to vector<1xf32>
      %72 = vector.shape_cast %71 : vector<1xf32> to vector<1x1xf32>
      %cst_45 = arith.constant 4.000000e+00 : f32
      %73 = vector.broadcast %cst_45 : f32 to vector<1x1xf32>
      %74 = arith.divf %72, %73 : vector<1x1xf32>
      %75 = vector.broadcast %67 : vector<1x1xf32> to vector<1x4xf32>
      %76 = arith.subf %63, %75 : vector<1x4xf32>
      %cst_46 = arith.constant 9.99999974E-6 : f32
      %77 = vector.broadcast %cst_46 : f32 to vector<1x1xf32>
      %78 = arith.addf %74, %77 : vector<1x1xf32>
      %79 = math.rsqrt %78 : vector<1x1xf32>
      %80 = vector.broadcast %79 : vector<1x1xf32> to vector<1x4xf32>
      %81 = arith.mulf %76, %80 : vector<1x4xf32>
      %c0_47 = arith.constant 0 : index
      %c0_48 = arith.constant 0 : index
      %82 = vector.load %arg16[%c0_47, %c0_48] : memref<1x4xf32, #tpu.memory_space<vmem>>, vector<1x4xf32>
      %83 = arith.mulf %81, %82 : vector<1x4xf32>
      %c0_49 = arith.constant 0 : index
      %c0_50 = arith.constant 0 : index
      %84 = vector.load %arg17[%c0_49, %c0_50] : memref<1x4xf32, #tpu.memory_space<vmem>>, vector<1x4xf32>
      %85 = arith.addf %83, %84 : vector<1x4xf32>
      %c0_51 = arith.constant 0 : index
      %c0_52 = arith.constant 0 : index
      %86 = vector.load %arg22[%c0_51, %c0_52] : memref<1x4xf32, #tpu.memory_space<vmem>>, vector<1x4xf32>
      tpu.vector_store %arg22[%c0_51, %c0_52], %85 {strides = array<i32>} : memref<1x4xf32, #tpu.memory_space<vmem>>, vector<1x4xf32>,
      %cst_53 = arith.constant 0.000000e+00 : f32
      %87 = vector.broadcast %cst_53 : f32 to vector<1x4xf32>
      %88 = arith.subf %87, %85 : vector<1x4xf32>
      %89 = math.exp %88 : vector<1x4xf32>
      %cst_54 = arith.constant 1.000000e+00 : f32
      %90 = vector.broadcast %cst_54 : f32 to vector<1x4xf32>
      %91 = arith.addf %90, %89 : vector<1x4xf32>
      %cst_55 = arith.constant 1.000000e+00 : f32
      %92 = vector.broadcast %cst_55 : f32 to vector<1x4xf32>
      %93 = arith.divf %92, %91 : vector<1x4xf32>
      %c0_56 = arith.constant 0 : index
      %c0_57 = arith.constant 0 : index
      %94 = vector.load %arg23[%c0_56, %c0_57] : memref<1x4xf32, #tpu.memory_space<vmem>>, vector<1x4xf32>
      tpu.vector_store %arg23[%c0_56, %c0_57], %93 {strides = array<i32>} : memref<1x4xf32, #tpu.memory_space<vmem>>, vector<1x4xf32>,
    } else {
    }
    return
  }
  func.func @transform_0(%arg0: i32, %arg1: i32) -> (i32, i32) {
    %c0_i32 = arith.constant 0 : i32
    %c0_i32_0 = arith.constant 0 : i32
    return %arg1, %c0_i32 : i32, i32
  }
  func.func @transform_1(%arg0: i32, %arg1: i32) -> (i32, i32) {
    %c0_i32 = arith.constant 0 : i32
    %c0_i32_0 = arith.constant 0 : i32
    %c0_i32_1 = arith.constant 0 : i32
    return %c0_i32, %c0_i32_0 : i32, i32
  }
  func.func @transform_2(%arg0: i32, %arg1: i32) -> (i32, i32) {
    %c0_i32 = arith.constant 0 : i32
    %c0_i32_0 = arith.constant 0 : i32
    %c0_i32_1 = arith.constant 0 : i32
    return %c0_i32, %c0_i32_0 : i32, i32
  }
  func.func @transform_3(%arg0: i32, %arg1: i32) -> (i32, i32) {
    %c0_i32 = arith.constant 0 : i32
    %c0_i32_0 = arith.constant 0 : i32
    %c0_i32_1 = arith.constant 0 : i32
    return %c0_i32, %c0_i32_0 : i32, i32
  }
  func.func @transform_4(%arg0: i32, %arg1: i32) -> (i32, i32) {
    %c0_i32 = arith.constant 0 : i32
    %c0_i32_0 = arith.constant 0 : i32
    %c0_i32_1 = arith.constant 0 : i32
    return %c0_i32, %c0_i32_0 : i32, i32
  }
  func.func @transform_5(%arg0: i32, %arg1: i32) -> (i32, i32) {
    %c0_i32 = arith.constant 0 : i32
    %c0_i32_0 = arith.constant 0 : i32
    %c0_i32_1 = arith.constant 0 : i32
    return %c0_i32, %c0_i32_0 : i32, i32
  }
  func.func @transform_6(%arg0: i32, %arg1: i32) -> (i32, i32) {
    %c0_i32 = arith.constant 0 : i32
    %c0_i32_0 = arith.constant 0 : i32
    %c0_i32_1 = arith.constant 0 : i32
    return %c0_i32, %c0_i32_0 : i32, i32
  }
  func.func @transform_7(%arg0: i32, %arg1: i32) -> (i32, i32) {
    %c0_i32 = arith.constant 0 : i32
    %c0_i32_0 = arith.constant 0 : i32
    %c0_i32_1 = arith.constant 0 : i32
    return %c0_i32, %c0_i32_0 : i32, i32
  }
  func.func @transform_8(%arg0: i32, %arg1: i32) -> (i32, i32) {
    %c0_i32 = arith.constant 0 : i32
    %c0_i32_0 = arith.constant 0 : i32
    %c0_i32_1 = arith.constant 0 : i32
    return %c0_i32, %c0_i32_0 : i32, i32
  }
  func.func @transform_9(%arg0: i32, %arg1: i32) -> (i32, i32) {
    %c0_i32 = arith.constant 0 : i32
    %c0_i32_0 = arith.constant 0 : i32
    %c0_i32_1 = arith.constant 0 : i32
    return %c0_i32, %c0_i32_0 : i32, i32
  }
  func.func @transform_10(%arg0: i32, %arg1: i32) -> (i32, i32) {
    %c0_i32 = arith.constant 0 : i32
    %c0_i32_0 = arith.constant 0 : i32
    %c0_i32_1 = arith.constant 0 : i32
    return %c0_i32, %c0_i32_0 : i32, i32
  }
  func.func @transform_11(%arg0: i32, %arg1: i32) -> (i32, i32) {
    %c0_i32 = arith.constant 0 : i32
    %c0_i32_0 = arith.constant 0 : i32
    %c0_i32_1 = arith.constant 0 : i32
    return %c0_i32, %c0_i32_0 : i32, i32
  }
  func.func @transform_12(%arg0: i32, %arg1: i32) -> (i32, i32) {
    %c0_i32 = arith.constant 0 : i32
    %c0_i32_0 = arith.constant 0 : i32
    %c0_i32_1 = arith.constant 0 : i32
    return %c0_i32, %c0_i32_0 : i32, i32
  }
  func.func @transform_13(%arg0: i32, %arg1: i32) -> (i32, i32) {
    %c0_i32 = arith.constant 0 : i32
    %c0_i32_0 = arith.constant 0 : i32
    %c0_i32_1 = arith.constant 0 : i32
    return %c0_i32, %c0_i32_0 : i32, i32
  }
  func.func @transform_14(%arg0: i32, %arg1: i32) -> (i32, i32) {
    %c0_i32 = arith.constant 0 : i32
    %c0_i32_0 = arith.constant 0 : i32
    %c0_i32_1 = arith.constant 0 : i32
    return %c0_i32, %c0_i32_0 : i32, i32
  }
  func.func @transform_15(%arg0: i32, %arg1: i32) -> (i32, i32) {
    %c0_i32 = arith.constant 0 : i32
    %c0_i32_0 = arith.constant 0 : i32
    %c0_i32_1 = arith.constant 0 : i32
    return %c0_i32, %c0_i32_0 : i32, i32
  }
  func.func @transform_16(%arg0: i32, %arg1: i32) -> (i32, i32) {
    %c0_i32 = arith.constant 0 : i32
    %c0_i32_0 = arith.constant 0 : i32
    %c0_i32_1 = arith.constant 0 : i32
    return %c0_i32, %c0_i32_0 : i32, i32
  }
  func.func @transform_17(%arg0: i32, %arg1: i32) -> (i32, i32) {
    %c0_i32 = arith.constant 0 : i32
    %c0_i32_0 = arith.constant 0 : i32
    %c0_i32_1 = arith.constant 0 : i32
    return %c0_i32, %c0_i32_0 : i32, i32
  }
  func.func @transform_18(%arg0: i32, %arg1: i32) -> (i32, i32) {
    %c0_i32 = arith.constant 0 : i32
    %c0_i32_0 = arith.constant 0 : i32
    %c0_i32_1 = arith.constant 0 : i32
    return %c0_i32, %c0_i32_0 : i32, i32
  }
  func.func @transform_19(%arg0: i32, %arg1: i32) -> (i32, i32) {
    %c0_i32 = arith.constant 0 : i32
    %c0_i32_0 = arith.constant 0 : i32
    %c0_i32_1 = arith.constant 0 : i32
    return %c0_i32, %c0_i32_0 : i32, i32
  }
  func.func @transform_20(%arg0: i32, %arg1: i32) -> (i32, i32) {
    %c0_i32 = arith.constant 0 : i32
    %c0_i32_0 = arith.constant 0 : i32
    %c0_i32_1 = arith.constant 0 : i32
    return %c0_i32, %c0_i32_0 : i32, i32
  }
  func.func @transform_21(%arg0: i32, %arg1: i32) -> (i32, i32) {
    %c0_i32 = arith.constant 0 : i32
    %c0_i32_0 = arith.constant 0 : i32
    %c0_i32_1 = arith.constant 0 : i32
    return %c0_i32, %c0_i32_0 : i32, i32
  }
}

</mosaic_0001>

<llo_original>
// kernel: tpu_custom_call.1
$region0: #{tpu_custom_call.1}
  #allocation0 [shape = 'u32[]', space=smem, size = 0x4, offset = 0x4, fixed_abs, tag = 'smem constant byte address 0x4 - core index']
  #allocation1 [shape = 'u32[72,128]{1,0:T(1,128)}', space=vmem, size = 0x9000, scoped, tag = 'internal scratch']
  #allocation2 [shape = 'bf16[256,128]{1,0:T(8,128)(2,1)}', space=vmem, size = 0x10000, scoped, tag = 'scratch operand']
  #allocation3 [shape = 'f32[1,4]{1,0:T(1,128)}', space=vmem, size = 0x200, scoped, tag = 'scratch operand']
  #allocation4 [shape = 'f32[4,128]{1,0:T(4,128)}', space=vmem, size = 0x800, scoped, tag = 'scratch operand']
  #allocation5 [shape = 'f32[4,1024]{1,0:T(4,128)}', space=vmem, size = 0x4000, scoped, tag = 'scratch operand']
  %s0 = inlined_call_operand.hbm [shape: f32[256,1024], index: 0, kind: input, shape index: {}]
  %s1 = inlined_call_operand.hbm [shape: f32[1024,256], index: 1, kind: input, shape index: {}]
  %s2 = inlined_call_operand.vmem [shape: f32[1,256], index: 2, kind: input, shape index: {}]
  %s3 = inlined_call_operand.vmem [shape: f32[128,128], index: 3, kind: input, shape index: {}]
  %s4 = inlined_call_operand.vmem [shape: f32[1,128], index: 4, kind: input, shape index: {}]
  %s5 = inlined_call_operand.vmem [shape: f32[1024,16], index: 5, kind: input, shape index: {}]
  %s6 = inlined_call_operand.vmem [shape: f32[1,4], index: 6, kind: input, shape index: {}]
  %s7 = inlined_call_operand.vmem [shape: f32[1,2], index: 7, kind: input, shape index: {}]
  %s8 = inlined_call_operand.vmem [shape: f32[2,4], index: 8, kind: input, shape index: {}]
  %s9 = inlined_call_operand.vmem [shape: f32[1,16], index: 9, kind: input, shape index: {}]
  %s10 = inlined_call_operand.vmem [shape: f32[4,16], index: 10, kind: input, shape index: {}]
  %s11 = inlined_call_operand.vmem [shape: f32[1,16], index: 11, kind: input, shape index: {}]
  %s12 = inlined_call_operand.vmem [shape: f32[16,4], index: 12, kind: input, shape index: {}]
  %s13 = inlined_call_operand.vmem [shape: f32[1,4], index: 13, kind: input, shape index: {}]
  %s14 = inlined_call_operand.vmem [shape: f32[1,4], index: 14, kind: input, shape index: {}]
  %s15 = inlined_call_operand.vmem [shape: f32[1,4], index: 15, kind: input, shape index: {}]
  %s16 = inlined_call_operand.vmem [shape: f32[256,4], index: 16, kind: output, shape index: {0}]
  %s17 = inlined_call_operand.hbm [shape: f32[4,256], index: 17, kind: output, shape index: {1}]
  %s18 = inlined_call_operand.hbm [shape: f32[4,1024], index: 18, kind: output, shape index: {2}]
  %s19 = inlined_call_operand.hbm [shape: f32[1,4], index: 19, kind: output, shape index: {3}]
  %s20 = inlined_call_operand.hbm [shape: f32[1,4], index: 20, kind: output, shape index: {4}]
  %s21 = inlined_call_operand.hbm [shape: f32[1,4], index: 21, kind: output, shape index: {5}]
  %22 = xla_tuple %s16, %s17, %s18, %s19, %s20, %s21
  %s23 = sld [smem:[#allocation0]]
  $region165: #{tpu_custom_call.1} parent=0
    _
  %s25 = ssub.s32 1, %s23
  %s26 = scalar_select 0, %s25, %s23
  $region1: #{tpu_custom_call.1} parent=0
    #allocation6 [shape = 'u8[1048576]{0}', space=vmem, size = 0x100000, scoped, tag = 'input window, operand 0']
    #allocation7 [shape = 's32[2]{0}', space=sflag, size = 0x8, scoped, tag = 'scoped memory for tpu_custom_call.1']
    #allocation8 [shape = 's32[2]{0}', space=sflag, size = 0x8, scoped, tag = 'scoped memory for tpu_custom_call.1']
    #allocation9 [shape = 'u8[1048576]{0}', space=vmem, size = 0x100000, scoped, tag = 'input window, operand 1, single buffered']
    #allocation10 [shape = 's32[1]{0}', space=sflag, size = 0x4, scoped, tag = 'scoped memory for tpu_custom_call.1']
    #allocation11 [shape = 'u8[4096]{0}', space=vmem, size = 0x1000, scoped, tag = 'output window, operand 1, single buffered']
    #allocation12 [shape = 'u8[16384]{0}', space=vmem, size = 0x4000, scoped, tag = 'output window, operand 2, single buffered']
    #allocation13 [shape = 's32[1]{0}', space=sflag, size = 0x4, scoped, tag = 'scoped memory for tpu_custom_call.1']
    #allocation14 [shape = 'u8[512]{0}', space=vmem, size = 0x400, scoped, tag = 'output window, operand 3, single buffered']
    #allocation15 [shape = 'u8[512]{0}', space=vmem, size = 0x400, scoped, tag = 'output window, operand 4, single buffered']
    #allocation16 [shape = 's32[1]{0}', space=sflag, size = 0x4, scoped, tag = 'scoped memory for tpu_custom_call.1']
    #allocation17 [shape = 'u8[512]{0}', space=vmem, size = 0x400, scoped, tag = 'output window, operand 5, single buffered']
    %27 = vsyncpa [#allocation7], 0
    %s28 = scalar_lea.sflag [#allocation7], 1
    %29 = vsyncpa %s28, 0
    %30 = vsyncpa [#allocation10], 0
    %31 = vsyncpa [#allocation8], 0
    %32 = vsyncpa [#allocation13], 0
    %33 = vsyncpa [#allocation16], 0
    loop: start=0, step=1, limit=6
    $region2: #{tpu_custom_call.1} parent=1 // loop_pre_header
      _
    $region3: #{tpu_custom_call.1} parent=1 // loop_header
      %s35 = sphi 0, %s39
      %p36 = scmp.ge.s32.totalorder %s35, 6
      %s42 = sphi 0, %s54
      %s43 = sphi 0, %s50
      %s44 = sphi 0, %s42
      %s45 = sphi 0, %s43
      %s46 = sphi 0, %s44
      %s47 = sphi 0, %s45
      %s57 = sphi 0, %s59
      %s60 = sphi 0, %s57
      %s61 = sphi 0, %s60
      %s77 = sphi 0, %s61
      %s81 = sphi 0, %s81
      %s83 = sphi 0, %s81
      %s84 = sphi 0, %s83
      %s98 = sphi 0, %s84
      %s102 = sphi 0, %s102
      %s104 = sphi 0, %s102
      %s105 = sphi 0, %s104
      %s119 = sphi 0, %s105
      %s123 = sphi 0, %s123
      %s125 = sphi 0, %s123
      %s126 = sphi 0, %s125
      %s140 = sphi 0, %s126
      %s144 = sphi 0, %s144
      %s146 = sphi 0, %s144
      %s147 = sphi 0, %s146
      %s161 = sphi 0, %s147
      %s165 = sphi 0, %s165
      %s167 = sphi 0, %s165
      %s168 = sphi 0, %s167
      %s182 = sphi 0, %s168
      %s186 = sphi 0, %s186
      %s188 = sphi 0, %s186
      %s189 = sphi 0, %s188
      %s203 = sphi 0, %s189
      %s207 = sphi 0, %s207
      %s209 = sphi 0, %s207
      %s210 = sphi 0, %s209
      %s224 = sphi 0, %s210
      %s228 = sphi 0, %s228
      %s230 = sphi 0, %s228
      %s231 = sphi 0, %s230
      %s245 = sphi 0, %s231
      %s249 = sphi 0, %s249
      %s251 = sphi 0, %s249
      %s252 = sphi 0, %s251
      %s266 = sphi 0, %s252
      %s270 = sphi 0, %s270
      %s272 = sphi 0, %s270
      %s273 = sphi 0, %s272
      %s287 = sphi 0, %s273
      %s291 = sphi 0, %s291
      %s293 = sphi 0, %s291
      %s294 = sphi 0, %s293
      %s308 = sphi 0, %s294
      %s312 = sphi 0, %s312
      %s314 = sphi 0, %s312
      %s315 = sphi 0, %s314
      %s329 = sphi 0, %s315
      %s333 = sphi 0, %s333
      %s335 = sphi 0, %s333
      %s336 = sphi 0, %s335
      %s350 = sphi 0, %s336
      %s354 = sphi 0, %s354
      %s356 = sphi 0, %s354
      %s357 = sphi 0, %s356
      %s371 = sphi 0, %s357
      %s375 = sphi 0, %s375
      %s377 = sphi 0, %s375
      %s378 = sphi 0, %s377
      %s392 = sphi 0, %s378
      %s396 = sphi 0, %s396
      %s398 = sphi 0, %s396
      %s399 = sphi 0, %s398
      %s413 = sphi 0, %s399
      %s417 = sphi 0, %s417
      %s419 = sphi 0, %s417
      %s420 = sphi 0, %s419
      %s434 = sphi 0, %s420
      %s438 = sphi 0, %s438
      %s440 = sphi 0, %s438
      %s441 = sphi 0, %s440
      %s455 = sphi 0, %s441
      %s459 = sphi 0, %s459
      %s461 = sphi 0, %s459
      %s462 = sphi 0, %s461
      %s476 = sphi 0, %s462
      %s480 = sphi 0, %s480
      %s482 = sphi 0, %s480
      %s483 = sphi 0, %s482
      %s497 = sphi 0, %s483
      %s501 = sphi 0, %s501
      %s503 = sphi 0, %s501
      %s504 = sphi 0, %s503
      %s518 = sphi 0, %s504
    $region4: #{tpu_custom_call.1} parent=1 // loop_header_branch
      %38 = sbr.rel (%p36) target = $region8
    $region5: #{tpu_custom_call.1} parent=1 // loop_body
      %s40 = ssub.s32 %s35, 1
      %s41 = ssub.s32 %s35, 2
      %s48 = sadd.s32 1, %s43
      %p49 = scmp.ge.s32.totalorder %s48, 2
      %s50 = scalar_select %p49, 0, %s48
      %s51 = sadd.s32 1, %s42
      %s52 = scalar_select %p49, %s51, %s42
      %p53 = scmp.ge.s32.totalorder %s52, 2
      %s54 = scalar_select %p53, 0, %s52
      %s55 = ssub.s32 %s43, %s50
      %p56 = scmp.eq.s32.totalorder %s55, 0
      %s58 = sadd.s32 %s57, 1
      %s59 = scalar_select %p56, %s57, %s58
      %p62 = pneg %p56
      %p63 = scmp.eq.s32.totalorder %s35, 3
      %p64 = por %p62, %p63
      %p65 = scmp.ne.s32.totalorder %s57, %s60
      %p66 = scmp.eq.s32.totalorder %s35, 0
      %p67 = por %p65, %p66
      %p68 = scmp.ne.s32.totalorder %s57, %s60
      %p69 = scmp.eq.s32.totalorder %s40, 3
      %p70 = por %p68, %p69
      %p71 = scmp.ne.s32.totalorder %s60, %s61
      %p72 = scmp.eq.s32.totalorder %s40, 0
      %p73 = por %p71, %p72
      %p74 = scmp.ne.s32.totalorder %s60, %s61
      %p75 = scmp.eq.s32.totalorder %s41, 3
      %p76 = por %p74, %p75
      %p78 = scmp.ne.s32.totalorder %s61, %s77
      %p79 = scmp.eq.s32.totalorder %s41, 0
      %p80 = por %p78, %p79
      %s82 = sadd.s32 %s81, 1
      %p85 = scmp.eq.s32.totalorder %s35, 3
      %p86 = scmp.ne.s32.totalorder %s81, %s83
      %p87 = scmp.eq.s32.totalorder %s35, 0
      %p88 = por %p86, %p87
      %p89 = scmp.ne.s32.totalorder %s81, %s83
      %p90 = scmp.eq.s32.totalorder %s40, 3
      %p91 = por %p89, %p90
      %p92 = scmp.ne.s32.totalorder %s83, %s84
      %p93 = scmp.eq.s32.totalorder %s40, 0
      %p94 = por %p92, %p93
      %p95 = scmp.ne.s32.totalorder %s83, %s84
      %p96 = scmp.eq.s32.totalorder %s41, 3
      %p97 = por %p95, %p96
      %p99 = scmp.ne.s32.totalorder %s84, %s98
      %p100 = scmp.eq.s32.totalorder %s41, 0
      %p101 = por %p99, %p100
      %s103 = sadd.s32 %s102, 1
      %p106 = scmp.eq.s32.totalorder %s35, 3
      %p107 = scmp.ne.s32.totalorder %s102, %s104
      %p108 = scmp.eq.s32.totalorder %s35, 0
      %p109 = por %p107, %p108
      %p110 = scmp.ne.s32.totalorder %s102, %s104
      %p111 = scmp.eq.s32.totalorder %s40, 3
      %p112 = por %p110, %p111
      %p113 = scmp.ne.s32.totalorder %s104, %s105
      %p114 = scmp.eq.s32.totalorder %s40, 0
      %p115 = por %p113, %p114
      %p116 = scmp.ne.s32.totalorder %s104, %s105
      %p117 = scmp.eq.s32.totalorder %s41, 3
      %p118 = por %p116, %p117
      %p120 = scmp.ne.s32.totalorder %s105, %s119
      %p121 = scmp.eq.s32.totalorder %s41, 0
      %p122 = por %p120, %p121
      %s124 = sadd.s32 %s123, 1
      %p127 = scmp.eq.s32.totalorder %s35, 3
      %p128 = scmp.ne.s32.totalorder %s123, %s125
      %p129 = scmp.eq.s32.totalorder %s35, 0
      %p130 = por %p128, %p129
      %p131 = scmp.ne.s32.totalorder %s123, %s125
      %p132 = scmp.eq.s32.totalorder %s40, 3
      %p133 = por %p131, %p132
      %p134 = scmp.ne.s32.totalorder %s125, %s126
      %p135 = scmp.eq.s32.totalorder %s40, 0
      %p136 = por %p134, %p135
      %p137 = scmp.ne.s32.totalorder %s125, %s126
      %p138 = scmp.eq.s32.totalorder %s41, 3
      %p139 = por %p137, %p138
      %p141 = scmp.ne.s32.totalorder %s126, %s140
      %p142 = scmp.eq.s32.totalorder %s41, 0
      %p143 = por %p141, %p142
      %s145 = sadd.s32 %s144, 1
      %p148 = scmp.eq.s32.totalorder %s35, 3
      %p149 = scmp.ne.s32.totalorder %s144, %s146
      %p150 = scmp.eq.s32.totalorder %s35, 0
      %p151 = por %p149, %p150
      %p152 = scmp.ne.s32.totalorder %s144, %s146
      %p153 = scmp.eq.s32.totalorder %s40, 3
      %p154 = por %p152, %p153
      %p155 = scmp.ne.s32.totalorder %s146, %s147
      %p156 = scmp.eq.s32.totalorder %s40, 0
      %p157 = por %p155, %p156
      %p158 = scmp.ne.s32.totalorder %s146, %s147
      %p159 = scmp.eq.s32.totalorder %s41, 3
      %p160 = por %p158, %p159
      %p162 = scmp.ne.s32.totalorder %s147, %s161
      %p163 = scmp.eq.s32.totalorder %s41, 0
      %p164 = por %p162, %p163
      %s166 = sadd.s32 %s165, 1
      %p169 = scmp.eq.s32.totalorder %s35, 3
      %p170 = scmp.ne.s32.totalorder %s165, %s167
      %p171 = scmp.eq.s32.totalorder %s35, 0
      %p172 = por %p170, %p171
      %p173 = scmp.ne.s32.totalorder %s165, %s167
      %p174 = scmp.eq.s32.totalorder %s40, 3
      %p175 = por %p173, %p174
      %p176 = scmp.ne.s32.totalorder %s167, %s168
      %p177 = scmp.eq.s32.totalorder %s40, 0
      %p178 = por %p176, %p177
      %p179 = scmp.ne.s32.totalorder %s167, %s168
      %p180 = scmp.eq.s32.totalorder %s41, 3
      %p181 = por %p179, %p180
      %p183 = scmp.ne.s32.totalorder %s168, %s182
      %p184 = scmp.eq.s32.totalorder %s41, 0
      %p185 = por %p183, %p184
      %s187 = sadd.s32 %s186, 1
      %p190 = scmp.eq.s32.totalorder %s35, 3
      %p191 = scmp.ne.s32.totalorder %s186, %s188
      %p192 = scmp.eq.s32.totalorder %s35, 0
      %p193 = por %p191, %p192
      %p194 = scmp.ne.s32.totalorder %s186, %s188
      %p195 = scmp.eq.s32.totalorder %s40, 3
      %p196 = por %p194, %p195
      %p197 = scmp.ne.s32.totalorder %s188, %s189
      %p198 = scmp.eq.s32.totalorder %s40, 0
      %p199 = por %p197, %p198
      %p200 = scmp.ne.s32.totalorder %s188, %s189
      %p201 = scmp.eq.s32.totalorder %s41, 3
      %p202 = por %p200, %p201
      %p204 = scmp.ne.s32.totalorder %s189, %s203
      %p205 = scmp.eq.s32.totalorder %s41, 0
      %p206 = por %p204, %p205
      %s208 = sadd.s32 %s207, 1
      %p211 = scmp.eq.s32.totalorder %s35, 3
      %p212 = scmp.ne.s32.totalorder %s207, %s209
      %p213 = scmp.eq.s32.totalorder %s35, 0
      %p214 = por %p212, %p213
      %p215 = scmp.ne.s32.totalorder %s207, %s209
      %p216 = scmp.eq.s32.totalorder %s40, 3
      %p217 = por %p215, %p216
      %p218 = scmp.ne.s32.totalorder %s209, %s210
      %p219 = scmp.eq.s32.totalorder %s40, 0
      %p220 = por %p218, %p219
      %p221 = scmp.ne.s32.totalorder %s209, %s210
      %p222 = scmp.eq.s32.totalorder %s41, 3
      %p223 = por %p221, %p222
      %p225 = scmp.ne.s32.totalorder %s210, %s224
      %p226 = scmp.eq.s32.totalorder %s41, 0
      %p227 = por %p225, %p226
      %s229 = sadd.s32 %s228, 1
      %p232 = scmp.eq.s32.totalorder %s35, 3
      %p233 = scmp.ne.s32.totalorder %s228, %s230
      %p234 = scmp.eq.s32.totalorder %s35, 0
      %p235 = por %p233, %p234
      %p236 = scmp.ne.s32.totalorder %s228, %s230
      %p237 = scmp.eq.s32.totalorder %s40, 3
      %p238 = por %p236, %p237
      %p239 = scmp.ne.s32.totalorder %s230, %s231
      %p240 = scmp.eq.s32.totalorder %s40, 0
      %p241 = por %p239, %p240
      %p242 = scmp.ne.s32.totalorder %s230, %s231
      %p243 = scmp.eq.s32.totalorder %s41, 3
      %p244 = por %p242, %p243
      %p246 = scmp.ne.s32.totalorder %s231, %s245
      %p247 = scmp.eq.s32.totalorder %s41, 0
      %p248 = por %p246, %p247
      %s250 = sadd.s32 %s249, 1
      %p253 = scmp.eq.s32.totalorder %s35, 3
      %p254 = scmp.ne.s32.totalorder %s249, %s251
      %p255 = scmp.eq.s32.totalorder %s35, 0
      %p256 = por %p254, %p255
      %p257 = scmp.ne.s32.totalorder %s249, %s251
      %p258 = scmp.eq.s32.totalorder %s40, 3
      %p259 = por %p257, %p258
      %p260 = scmp.ne.s32.totalorder %s251, %s252
      %p261 = scmp.eq.s32.totalorder %s40, 0
      %p262 = por %p260, %p261
      %p263 = scmp.ne.s32.totalorder %s251, %s252
      %p264 = scmp.eq.s32.totalorder %s41, 3
      %p265 = por %p263, %p264
      %p267 = scmp.ne.s32.totalorder %s252, %s266
      %p268 = scmp.eq.s32.totalorder %s41, 0
      %p269 = por %p267, %p268
      %s271 = sadd.s32 %s270, 1
      %p274 = scmp.eq.s32.totalorder %s35, 3
      %p275 = scmp.ne.s32.totalorder %s270, %s272
      %p276 = scmp.eq.s32.totalorder %s35, 0
      %p277 = por %p275, %p276
      %p278 = scmp.ne.s32.totalorder %s270, %s272
      %p279 = scmp.eq.s32.totalorder %s40, 3
      %p280 = por %p278, %p279
      %p281 = scmp.ne.s32.totalorder %s272, %s273
      %p282 = scmp.eq.s32.totalorder %s40, 0
      %p283 = por %p281, %p282
      %p284 = scmp.ne.s32.totalorder %s272, %s273
      %p285 = scmp.eq.s32.totalorder %s41, 3
      %p286 = por %p284, %p285
      %p288 = scmp.ne.s32.totalorder %s273, %s287
      %p289 = scmp.eq.s32.totalorder %s41, 0
      %p290 = por %p288, %p289
      %s292 = sadd.s32 %s291, 1
      %p295 = scmp.eq.s32.totalorder %s35, 3
      %p296 = scmp.ne.s32.totalorder %s291, %s293
      %p297 = scmp.eq.s32.totalorder %s35, 0
      %p298 = por %p296, %p297
      %p299 = scmp.ne.s32.totalorder %s291, %s293
      %p300 = scmp.eq.s32.totalorder %s40, 3
      %p301 = por %p299, %p300
      %p302 = scmp.ne.s32.totalorder %s293, %s294
      %p303 = scmp.eq.s32.totalorder %s40, 0
      %p304 = por %p302, %p303
      %p305 = scmp.ne.s32.totalorder %s293, %s294
      %p306 = scmp.eq.s32.totalorder %s41, 3
      %p307 = por %p305, %p306
      %p309 = scmp.ne.s32.totalorder %s294, %s308
      %p310 = scmp.eq.s32.totalorder %s41, 0
      %p311 = por %p309, %p310
      %s313 = sadd.s32 %s312, 1
      %p316 = scmp.eq.s32.totalorder %s35, 3
      %p317 = scmp.ne.s32.totalorder %s312, %s314
      %p318 = scmp.eq.s32.totalorder %s35, 0
      %p319 = por %p317, %p318
      %p320 = scmp.ne.s32.totalorder %s312, %s314
      %p321 = scmp.eq.s32.totalorder %s40, 3
      %p322 = por %p320, %p321
      %p323 = scmp.ne.s32.totalorder %s314, %s315
      %p324 = scmp.eq.s32.totalorder %s40, 0
      %p325 = por %p323, %p324
      %p326 = scmp.ne.s32.totalorder %s314, %s315
      %p327 = scmp.eq.s32.totalorder %s41, 3
      %p328 = por %p326, %p327
      %p330 = scmp.ne.s32.totalorder %s315, %s329
      %p331 = scmp.eq.s32.totalorder %s41, 0
      %p332 = por %p330, %p331
      %s334 = sadd.s32 %s333, 1
      %p337 = scmp.eq.s32.totalorder %s35, 3
      %p338 = scmp.ne.s32.totalorder %s333, %s335
      %p339 = scmp.eq.s32.totalorder %s35, 0
      %p340 = por %p338, %p339
      %p341 = scmp.ne.s32.totalorder %s333, %s335
      %p342 = scmp.eq.s32.totalorder %s40, 3
      %p343 = por %p341, %p342
      %p344 = scmp.ne.s32.totalorder %s335, %s336
      %p345 = scmp.eq.s32.totalorder %s40, 0
      %p346 = por %p344, %p345
      %p347 = scmp.ne.s32.totalorder %s335, %s336
      %p348 = scmp.eq.s32.totalorder %s41, 3
      %p349 = por %p347, %p348
      %p351 = scmp.ne.s32.totalorder %s336, %s350
      %p352 = scmp.eq.s32.totalorder %s41, 0
      %p353 = por %p351, %p352
      %s355 = sadd.s32 %s354, 1
      %p358 = scmp.eq.s32.totalorder %s35, 3
      %p359 = scmp.ne.s32.totalorder %s354, %s356
      %p360 = scmp.eq.s32.totalorder %s35, 0
      %p361 = por %p359, %p360
      %p362 = scmp.ne.s32.totalorder %s354, %s356
      %p363 = scmp.eq.s32.totalorder %s40, 3
      %p364 = por %p362, %p363
      %p365 = scmp.ne.s32.totalorder %s356, %s357
      %p366 = scmp.eq.s32.totalorder %s40, 0
      %p367 = por %p365, %p366
      %p368 = scmp.ne.s32.totalorder %s356, %s357
      %p369 = scmp.eq.s32.totalorder %s41, 3
      %p370 = por %p368, %p369
      %p372 = scmp.ne.s32.totalorder %s357, %s371
      %p373 = scmp.eq.s32.totalorder %s41, 0
      %p374 = por %p372, %p373
      %s376 = sadd.s32 %s375, 1
      %p379 = scmp.eq.s32.totalorder %s35, 3
      %p380 = scmp.ne.s32.totalorder %s375, %s377
      %p381 = scmp.eq.s32.totalorder %s35, 0
      %p382 = por %p380, %p381
      %p383 = scmp.ne.s32.totalorder %s375, %s377
      %p384 = scmp.eq.s32.totalorder %s40, 3
      %p385 = por %p383, %p384
      %p386 = scmp.ne.s32.totalorder %s377, %s378
      %p387 = scmp.eq.s32.totalorder %s40, 0
      %p388 = por %p386, %p387
      %p389 = scmp.ne.s32.totalorder %s377, %s378
      %p390 = scmp.eq.s32.totalorder %s41, 3
      %p391 = por %p389, %p390
      %p393 = scmp.ne.s32.totalorder %s378, %s392
      %p394 = scmp.eq.s32.totalorder %s41, 0
      %p395 = por %p393, %p394
      %s397 = sadd.s32 %s396, 1
      %p400 = scmp.eq.s32.totalorder %s35, 3
      %p401 = scmp.ne.s32.totalorder %s396, %s398
      %p402 = scmp.eq.s32.totalorder %s35, 0
      %p403 = por %p401, %p402
      %p404 = scmp.ne.s32.totalorder %s396, %s398
      %p405 = scmp.eq.s32.totalorder %s40, 3
      %p406 = por %p404, %p405
      %p407 = scmp.ne.s32.totalorder %s398, %s399
      %p408 = scmp.eq.s32.totalorder %s40, 0
      %p409 = por %p407, %p408
      %p410 = scmp.ne.s32.totalorder %s398, %s399
      %p411 = scmp.eq.s32.totalorder %s41, 3
      %p412 = por %p410, %p411
      %p414 = scmp.ne.s32.totalorder %s399, %s413
      %p415 = scmp.eq.s32.totalorder %s41, 0
      %p416 = por %p414, %p415
      %s418 = sadd.s32 %s417, 1
      %p421 = scmp.eq.s32.totalorder %s35, 3
      %p422 = scmp.ne.s32.totalorder %s417, %s419
      %p423 = scmp.eq.s32.totalorder %s35, 0
      %p424 = por %p422, %p423
      %p425 = scmp.ne.s32.totalorder %s417, %s419
      %p426 = scmp.eq.s32.totalorder %s40, 3
      %p427 = por %p425, %p426
      %p428 = scmp.ne.s32.totalorder %s419, %s420
      %p429 = scmp.eq.s32.totalorder %s40, 0
      %p430 = por %p428, %p429
      %p431 = scmp.ne.s32.totalorder %s419, %s420
      %p432 = scmp.eq.s32.totalorder %s41, 3
      %p433 = por %p431, %p432
      %p435 = scmp.ne.s32.totalorder %s420, %s434
      %p436 = scmp.eq.s32.totalorder %s41, 0
      %p437 = por %p435, %p436
      %s439 = sadd.s32 %s438, 1
      %p442 = scmp.eq.s32.totalorder %s35, 3
      %p443 = scmp.ne.s32.totalorder %s438, %s440
      %p444 = scmp.eq.s32.totalorder %s35, 0
      %p445 = por %p443, %p444
      %p446 = scmp.ne.s32.totalorder %s438, %s440
      %p447 = scmp.eq.s32.totalorder %s40, 3
      %p448 = por %p446, %p447
      %p449 = scmp.ne.s32.totalorder %s440, %s441
      %p450 = scmp.eq.s32.totalorder %s40, 0
      %p451 = por %p449, %p450
      %p452 = scmp.ne.s32.totalorder %s440, %s441
      %p453 = scmp.eq.s32.totalorder %s41, 3
      %p454 = por %p452, %p453
      %p456 = scmp.ne.s32.totalorder %s441, %s455
      %p457 = scmp.eq.s32.totalorder %s41, 0
      %p458 = por %p456, %p457
      %s460 = sadd.s32 %s459, 1
      %p463 = scmp.eq.s32.totalorder %s35, 3
      %p464 = scmp.ne.s32.totalorder %s459, %s461
      %p465 = scmp.eq.s32.totalorder %s35, 0
      %p466 = por %p464, %p465
      %p467 = scmp.ne.s32.totalorder %s459, %s461
      %p468 = scmp.eq.s32.totalorder %s40, 3
      %p469 = por %p467, %p468
      %p470 = scmp.ne.s32.totalorder %s461, %s462
      %p471 = scmp.eq.s32.totalorder %s40, 0
      %p472 = por %p470, %p471
      %p473 = scmp.ne.s32.totalorder %s461, %s462
      %p474 = scmp.eq.s32.totalorder %s41, 3
      %p475 = por %p473, %p474
      %p477 = scmp.ne.s32.totalorder %s462, %s476
      %p478 = scmp.eq.s32.totalorder %s41, 0
      %p479 = por %p477, %p478
      %s481 = sadd.s32 %s480, 1
      %p484 = scmp.eq.s32.totalorder %s35, 3
      %p485 = scmp.ne.s32.totalorder %s480, %s482
      %p486 = scmp.eq.s32.totalorder %s35, 0
      %p487 = por %p485, %p486
      %p488 = scmp.ne.s32.totalorder %s480, %s482
      %p489 = scmp.eq.s32.totalorder %s40, 3
      %p490 = por %p488, %p489
      %p491 = scmp.ne.s32.totalorder %s482, %s483
      %p492 = scmp.eq.s32.totalorder %s40, 0
      %p493 = por %p491, %p492
      %p494 = scmp.ne.s32.totalorder %s482, %s483
      %p495 = scmp.eq.s32.totalorder %s41, 3
      %p496 = por %p494, %p495
      %p498 = scmp.ne.s32.totalorder %s483, %s497
      %p499 = scmp.eq.s32.totalorder %s41, 0
      %p500 = por %p498, %p499
      %s502 = sadd.s32 %s501, 1
      %p505 = scmp.eq.s32.totalorder %s35, 3
      %p506 = scmp.ne.s32.totalorder %s501, %s503
      %p507 = scmp.eq.s32.totalorder %s35, 0
      %p508 = por %p506, %p507
      %p509 = scmp.ne.s32.totalorder %s501, %s503
      %p510 = scmp.eq.s32.totalorder %s40, 3
      %p511 = por %p509, %p510
      %p512 = scmp.ne.s32.totalorder %s503, %s504
      %p513 = scmp.eq.s32.totalorder %s40, 0
      %p514 = por %p512, %p513
      %p515 = scmp.ne.s32.totalorder %s503, %s504
      %p516 = scmp.eq.s32.totalorder %s41, 3
      %p517 = por %p515, %p516
      %p519 = scmp.ne.s32.totalorder %s504, %s518
      %p520 = scmp.eq.s32.totalorder %s41, 0
      %p521 = por %p519, %p520
      %p522 = scmp.le.s32.totalorder 1, %s35
      %p523 = scmp.lt.s32.totalorder %s35, 5
      %p524 = pnand %p522, %p523
      %p525 = pneg %p524
      // Predicated region
      $region9: #{tpu_custom_call.1} parent=5 // pred_check
        _
      $region10: #{tpu_custom_call.1} parent=5 // pred_check_branch
        %527 = sbr.rel (%p524) target = $region12
      $region11: #{tpu_custom_call.1} parent=5 // pred_region
        %s528 = ssub.s32 %s35, 1
        // Predicated region
        $region13: #{tpu_custom_call.1} parent=11 // pred_check
          %p529 = pneg %p94
        $region14: #{tpu_custom_call.1} parent=11 // pred_check_branch
          %531 = sbr.rel (%p529) target = $region16
        $region15: #{tpu_custom_call.1} parent=11 // pred_region
          %533 = vsyncadd [#allocation10], 0
          %s534 = sshll.u32 %s1, 4
          %s535 = int_to_ptr.hbm [resolvable:$true] %s534
          %s536 = sshll.u32 [#allocation9], 4
          %s537 = int_to_ptr.vmem [resolvable:$true] %s536
          %542 = dma.hbm_to_vmem [thread:$0]  %s535, 32768, %s537, [#allocation10], 256, 256, 16
        $region16: #{tpu_custom_call.1} parent=11 // pred_fallthru
          _
        // Predicated region
        $region17: #{tpu_custom_call.1} parent=11 // pred_check
          %p543 = pneg %p115
        $region18: #{tpu_custom_call.1} parent=11 // pred_check_branch
          %545 = sbr.rel (%p543) target = $region20
        $region19: #{tpu_custom_call.1} parent=11 // pred_region
          _
        $region20: #{tpu_custom_call.1} parent=11 // pred_fallthru
          _
        // Predicated region
        $region21: #{tpu_custom_call.1} parent=11 // pred_check
          %p546 = pneg %p136
        $region22: #{tpu_custom_call.1} parent=11 // pred_check_branch
          %548 = sbr.rel (%p546) target = $region24
        $region23: #{tpu_custom_call.1} parent=11 // pred_region
          _
        $region24: #{tpu_custom_call.1} parent=11 // pred_fallthru
          _
        // Predicated region
        $region25: #{tpu_custom_call.1} parent=11 // pred_check
          %p549 = pneg %p157
        $region26: #{tpu_custom_call.1} parent=11 // pred_check_branch
          %551 = sbr.rel (%p549) target = $region28
        $region27: #{tpu_custom_call.1} parent=11 // pred_region
          _
        $region28: #{tpu_custom_call.1} parent=11 // pred_fallthru
          _
        // Predicated region
        $region29: #{tpu_custom_call.1} parent=11 // pred_check
          %p552 = pneg %p178
        $region30: #{tpu_custom_call.1} parent=11 // pred_check_branch
          %554 = sbr.rel (%p552) target = $region32
        $region31: #{tpu_custom_call.1} parent=11 // pred_region
          _
        $region32: #{tpu_custom_call.1} parent=11 // pred_fallthru
          _
        // Predicated region
        $region33: #{tpu_custom_call.1} parent=11 // pred_check
          %p555 = pneg %p199
        $region34: #{tpu_custom_call.1} parent=11 // pred_check_branch
          %557 = sbr.rel (%p555) target = $region36
        $region35: #{tpu_custom_call.1} parent=11 // pred_region
          _
        $region36: #{tpu_custom_call.1} parent=11 // pred_fallthru
          _
        // Predicated region
        $region37: #{tpu_custom_call.1} parent=11 // pred_check
          %p558 = pneg %p220
        $region38: #{tpu_custom_call.1} parent=11 // pred_check_branch
          %560 = sbr.rel (%p558) target = $region40
        $region39: #{tpu_custom_call.1} parent=11 // pred_region
          _
        $region40: #{tpu_custom_call.1} parent=11 // pred_fallthru
          _
        // Predicated region
        $region41: #{tpu_custom_call.1} parent=11 // pred_check
          %p561 = pneg %p241
        $region42: #{tpu_custom_call.1} parent=11 // pred_check_branch
          %563 = sbr.rel (%p561) target = $region44
        $region43: #{tpu_custom_call.1} parent=11 // pred_region
          _
        $region44: #{tpu_custom_call.1} parent=11 // pred_fallthru
          _
        // Predicated region
        $region45: #{tpu_custom_call.1} parent=11 // pred_check
          %p564 = pneg %p262
        $region46: #{tpu_custom_call.1} parent=11 // pred_check_branch
          %566 = sbr.rel (%p564) target = $region48
        $region47: #{tpu_custom_call.1} parent=11 // pred_region
          _
        $region48: #{tpu_custom_call.1} parent=11 // pred_fallthru
          _
        // Predicated region
        $region49: #{tpu_custom_call.1} parent=11 // pred_check
          %p567 = pneg %p283
        $region50: #{tpu_custom_call.1} parent=11 // pred_check_branch
          %569 = sbr.rel (%p567) target = $region52
        $region51: #{tpu_custom_call.1} parent=11 // pred_region
          _
        $region52: #{tpu_custom_call.1} parent=11 // pred_fallthru
          _
        // Predicated region
        $region53: #{tpu_custom_call.1} parent=11 // pred_check
          %p570 = pneg %p304
        $region54: #{tpu_custom_call.1} parent=11 // pred_check_branch
          %572 = sbr.rel (%p570) target = $region56
        $region55: #{tpu_custom_call.1} parent=11 // pred_region
          _
        $region56: #{tpu_custom_call.1} parent=11 // pred_fallthru
          _
        // Predicated region
        $region57: #{tpu_custom_call.1} parent=11 // pred_check
          %p573 = pneg %p325
        $region58: #{tpu_custom_call.1} parent=11 // pred_check_branch
          %575 = sbr.rel (%p573) target = $region60
        $region59: #{tpu_custom_call.1} parent=11 // pred_region
          _
        $region60: #{tpu_custom_call.1} parent=11 // pred_fallthru
          _
        // Predicated region
        $region61: #{tpu_custom_call.1} parent=11 // pred_check
          %p576 = pneg %p346
        $region62: #{tpu_custom_call.1} parent=11 // pred_check_branch
          %578 = sbr.rel (%p576) target = $region64
        $region63: #{tpu_custom_call.1} parent=11 // pred_region
          _
        $region64: #{tpu_custom_call.1} parent=11 // pred_fallthru
          _
        // Predicated region
        $region65: #{tpu_custom_call.1} parent=11 // pred_check
          %p579 = pneg %p367
        $region66: #{tpu_custom_call.1} parent=11 // pred_check_branch
          %581 = sbr.rel (%p579) target = $region68
        $region67: #{tpu_custom_call.1} parent=11 // pred_region
          _
        $region68: #{tpu_custom_call.1} parent=11 // pred_fallthru
          _
        // Predicated region
        $region69: #{tpu_custom_call.1} parent=11 // pred_check
          %p582 = pneg %p388
        $region70: #{tpu_custom_call.1} parent=11 // pred_check_branch
          %584 = sbr.rel (%p582) target = $region72
        $region71: #{tpu_custom_call.1} parent=11 // pred_region
          _
        $region72: #{tpu_custom_call.1} parent=11 // pred_fallthru
          _
      $region12: #{tpu_custom_call.1} parent=5 // pred_fallthru
        _
      %p585 = scmp.lt.s32.totalorder %s35, 4
      // Predicated region
      $region73: #{tpu_custom_call.1} parent=5 // pred_check
        %p586 = pneg %p585
      $region74: #{tpu_custom_call.1} parent=5 // pred_check_branch
        %588 = sbr.rel (%p586) target = $region76
      $region75: #{tpu_custom_call.1} parent=5 // pred_region
        // Predicated region
        $region77: #{tpu_custom_call.1} parent=75 // pred_check
          %p589 = pneg %p67
        $region78: #{tpu_custom_call.1} parent=75 // pred_check_branch
          %591 = sbr.rel (%p589) target = $region80
        $region79: #{tpu_custom_call.1} parent=75 // pred_region
          %s592 = sand.u32 %s57, 1
          %s593 = scalar_lea.sflag [#allocation7], %s592
          %s594 = sand.u32 %s57, 1
          %s595 = smul.addr %s594, 1024
          %s596 = scalar_lea.vmem [#allocation6], %s595
          %s597 = smul.u32 16, %s43
          %599 = vsyncadd %s593, 0
          %s600 = smul.addr %s597, 8
          %s601 = smul.addr %s600, 8
          %s602 = scalar_lea.hbm %s0, %s601
          %s603 = sshll.u32 %s602, 4
          %s604 = int_to_ptr.hbm [resolvable:$true] %s603
          %s605 = sshll.u32 %s596, 4
          %s606 = int_to_ptr.vmem [resolvable:$true] %s605
          %611 = dma.hbm_to_vmem [thread:$0]  %s604, 16384, %s606, %s593, 1024, 1024, 64
        $region80: #{tpu_custom_call.1} parent=75 // pred_fallthru
          _
      $region76: #{tpu_custom_call.1} parent=5 // pred_fallthru
        _
      %p612 = scmp.le.s32.totalorder 1, %s35
      %p613 = scmp.lt.s32.totalorder %s35, 5
      %p614 = pnand %p612, %p613
      %p615 = pneg %p614
      // Predicated region
      $region81: #{tpu_custom_call.1} parent=5 // pred_check
        _
      $region82: #{tpu_custom_call.1} parent=5 // pred_check_branch
        %617 = sbr.rel (%p614) target = $region84
      $region83: #{tpu_custom_call.1} parent=5 // pred_region
        %s618 = ssub.s32 %s35, 1
        %s619 = sand.u32 %s60, 1
        %s620 = scalar_lea.sflag [#allocation7], %s619
        %s621 = sand.u32 %s60, 1
        %s622 = smul.addr %s621, 1024
        %s623 = scalar_lea.vmem [#allocation6], %s622
        // Predicated region
        $region85: #{tpu_custom_call.1} parent=83 // pred_check
          %p624 = pneg %p73
        $region86: #{tpu_custom_call.1} parent=83 // pred_check_branch
          %626 = sbr.rel (%p624) target = $region88
        $region87: #{tpu_custom_call.1} parent=83 // pred_region
          %628 = dma.done %s620, 16384
        $region88: #{tpu_custom_call.1} parent=83 // pred_fallthru
          _
        // Predicated region
        $region89: #{tpu_custom_call.1} parent=83 // pred_check
          %p629 = pneg %p94
        $region90: #{tpu_custom_call.1} parent=83 // pred_check_branch
          %631 = sbr.rel (%p629) target = $region92
        $region91: #{tpu_custom_call.1} parent=83 // pred_region
          %633 = dma.done [#allocation10], 32768
        $region92: #{tpu_custom_call.1} parent=83 // pred_fallthru
          _
        %s634 = sand.u32 %s60, 1
        %s635 = scalar_lea.sflag [#allocation7], %s634
        %s636 = sand.u32 %s60, 1
        %s637 = smul.addr %s636, 1024
        %s638 = scalar_lea.vmem [#allocation6], %s637
        %p639 = pneg %p73
        %p640 = pneg %p70
        %p641 = pneg %p94
        %p642 = pneg %p91
        %p643 = pneg %p115
        %p644 = pneg %p112
        %p645 = pneg %p136
        %p646 = pneg %p133
        %p647 = pneg %p157
        %p648 = pneg %p154
        %p649 = pneg %p178
        %p650 = pneg %p175
        %p651 = pneg %p199
        %p652 = pneg %p196
        %p653 = pneg %p220
        %p654 = pneg %p217
        %p655 = pneg %p241
        %p656 = pneg %p238
        %p657 = pneg %p262
        %p658 = pneg %p259
        %p659 = pneg %p283
        %p660 = pneg %p280
        %p661 = pneg %p304
        %p662 = pneg %p301
        %p663 = pneg %p325
        %p664 = pneg %p322
        %p665 = pneg %p346
        %p666 = pneg %p343
        %p667 = pneg %p367
        %p668 = pneg %p364
        %p669 = pneg %p388
        %p670 = pneg %p385
        %p671 = pneg %p409
        %p672 = pneg %p406
        %p673 = pneg %p430
        %p674 = pneg %p427
        %p675 = pneg %p451
        %p676 = pneg %p448
        %p677 = pneg %p472
        %p678 = pneg %p469
        %p679 = pneg %p493
        %p680 = pneg %p490
        %p681 = pneg %p514
        %p682 = pneg %p511
        %s683 = smul.u32 16, %s45
        %s684 = smul.u32 %s45, 128
        %v685 = vld [vmem:[%s623] sm:$0xff]
        %v686 = vld [vmem:[%s623 + $0x8] sm:$0xff]
        %v687 = vld [vmem:[%s623 + $0x10] sm:$0xff]
        %v688 = vld [vmem:[%s623 + $0x18] sm:$0xff]
        %v689 = vld [vmem:[%s623 + $0x20] sm:$0xff]
        %v690 = vld [vmem:[%s623 + $0x28] sm:$0xff]
        %v691 = vld [vmem:[%s623 + $0x30] sm:$0xff]
        %v692 = vld [vmem:[%s623 + $0x38] sm:$0xff]
        %v693 = vld [vmem:[%s623 + $0x40] sm:$0xff]
        %v694 = vld [vmem:[%s623 + $0x48] sm:$0xff]
        %v695 = vld [vmem:[%s623 + $0x50] sm:$0xff]
        %v696 = vld [vmem:[%s623 + $0x58] sm:$0xff]
        %v697 = vld [vmem:[%s623 + $0x60] sm:$0xff]
        %v698 = vld [vmem:[%s623 + $0x68] sm:$0xff]
        %v699 = vld [vmem:[%s623 + $0x70] sm:$0xff]
        %v700 = vld [vmem:[%s623 + $0x78] sm:$0xff]
        %v701 = vld [vmem:[%s623 + $0x80] sm:$0xff]
        %v702 = vld [vmem:[%s623 + $0x88] sm:$0xff]
        %v703 = vld [vmem:[%s623 + $0x90] sm:$0xff]
        %v704 = vld [vmem:[%s623 + $0x98] sm:$0xff]
        %v705 = vld [vmem:[%s623 + $0xa0] sm:$0xff]
        %v706 = vld [vmem:[%s623 + $0xa8] sm:$0xff]
        %v707 = vld [vmem:[%s623 + $0xb0] sm:$0xff]
        %v708 = vld [vmem:[%s623 + $0xb8] sm:$0xff]
        %v709 = vld [vmem:[%s623 + $0xc0] sm:$0xff]
        %v710 = vld [vmem:[%s623 + $0xc8] sm:$0xff]
        %v711 = vld [vmem:[%s623 + $0xd0] sm:$0xff]
        %v712 = vld [vmem:[%s623 + $0xd8] sm:$0xff]
        %v713 = vld [vmem:[%s623 + $0xe0] sm:$0xff]
        %v714 = vld [vmem:[%s623 + $0xe8] sm:$0xff]
        %v715 = vld [vmem:[%s623 + $0xf0] sm:$0xff]
        %v716 = vld [vmem:[%s623 + $0xf8] sm:$0xff]
        %v717 = vld [vmem:[%s623 + $0x100] sm:$0xff]
        %v718 = vld [vmem:[%s623 + $0x108] sm:$0xff]
        %v719 = vld [vmem:[%s623 + $0x110] sm:$0xff]
        %v720 = vld [vmem:[%s623 + $0x118] sm:$0xff]
        %v721 = vld [vmem:[%s623 + $0x120] sm:$0xff]
        %v722 = vld [vmem:[%s623 + $0x128] sm:$0xff]
        %v723 = vld [vmem:[%s623 + $0x130] sm:$0xff]
        %v724 = vld [vmem:[%s623 + $0x138] sm:$0xff]
        %v725 = vld [vmem:[%s623 + $0x140] sm:$0xff]
        %v726 = vld [vmem:[%s623 + $0x148] sm:$0xff]
        %v727 = vld [vmem:[%s623 + $0x150] sm:$0xff]
        %v728 = vld [vmem:[%s623 + $0x158] sm:$0xff]
        %v729 = vld [vmem:[%s623 + $0x160] sm:$0xff]
        %v730 = vld [vmem:[%s623 + $0x168] sm:$0xff]
        %v731 = vld [vmem:[%s623 + $0x170] sm:$0xff]
        %v732 = vld [vmem:[%s623 + $0x178] sm:$0xff]
        %v733 = vld [vmem:[%s623 + $0x180] sm:$0xff]
        %v734 = vld [vmem:[%s623 + $0x188] sm:$0xff]
        %v735 = vld [vmem:[%s623 + $0x190] sm:$0xff]
        %v736 = vld [vmem:[%s623 + $0x198] sm:$0xff]
        %v737 = vld [vmem:[%s623 + $0x1a0] sm:$0xff]
        %v738 = vld [vmem:[%s623 + $0x1a8] sm:$0xff]
        %v739 = vld [vmem:[%s623 + $0x1b0] sm:$0xff]
        %v740 = vld [vmem:[%s623 + $0x1b8] sm:$0xff]
        %v741 = vld [vmem:[%s623 + $0x1c0] sm:$0xff]
        %v742 = vld [vmem:[%s623 + $0x1c8] sm:$0xff]
        %v743 = vld [vmem:[%s623 + $0x1d0] sm:$0xff]
        %v744 = vld [vmem:[%s623 + $0x1d8] sm:$0xff]
        %v745 = vld [vmem:[%s623 + $0x1e0] sm:$0xff]
        %v746 = vld [vmem:[%s623 + $0x1e8] sm:$0xff]
        %v747 = vld [vmem:[%s623 + $0x1f0] sm:$0xff]
        %v748 = vld [vmem:[%s623 + $0x1f8] sm:$0xff]
        %v749 = vld [vmem:[%s623 + $0x200] sm:$0xff]
        %v750 = vld [vmem:[%s623 + $0x208] sm:$0xff]
        %v751 = vld [vmem:[%s623 + $0x210] sm:$0xff]
        %v752 = vld [vmem:[%s623 + $0x218] sm:$0xff]
        %v753 = vld [vmem:[%s623 + $0x220] sm:$0xff]
        %v754 = vld [vmem:[%s623 + $0x228] sm:$0xff]
        %v755 = vld [vmem:[%s623 + $0x230] sm:$0xff]
        %v756 = vld [vmem:[%s623 + $0x238] sm:$0xff]
        %v757 = vld [vmem:[%s623 + $0x240] sm:$0xff]
        %v758 = vld [vmem:[%s623 + $0x248] sm:$0xff]
        %v759 = vld [vmem:[%s623 + $0x250] sm:$0xff]
        %v760 = vld [vmem:[%s623 + $0x258] sm:$0xff]
        %v761 = vld [vmem:[%s623 + $0x260] sm:$0xff]
        %v762 = vld [vmem:[%s623 + $0x268] sm:$0xff]
        %v763 = vld [vmem:[%s623 + $0x270] sm:$0xff]
        %v764 = vld [vmem:[%s623 + $0x278] sm:$0xff]
        %v765 = vld [vmem:[%s623 + $0x280] sm:$0xff]
        %v766 = vld [vmem:[%s623 + $0x288] sm:$0xff]
        %v767 = vld [vmem:[%s623 + $0x290] sm:$0xff]
        %v768 = vld [vmem:[%s623 + $0x298] sm:$0xff]
        %v769 = vld [vmem:[%s623 + $0x2a0] sm:$0xff]
        %v770 = vld [vmem:[%s623 + $0x2a8] sm:$0xff]
        %v771 = vld [vmem:[%s623 + $0x2b0] sm:$0xff]
        %v772 = vld [vmem:[%s623 + $0x2b8] sm:$0xff]
        %v773 = vld [vmem:[%s623 + $0x2c0] sm:$0xff]
        %v774 = vld [vmem:[%s623 + $0x2c8] sm:$0xff]
        %v775 = vld [vmem:[%s623 + $0x2d0] sm:$0xff]
        %v776 = vld [vmem:[%s623 + $0x2d8] sm:$0xff]
        %v777 = vld [vmem:[%s623 + $0x2e0] sm:$0xff]
        %v778 = vld [vmem:[%s623 + $0x2e8] sm:$0xff]
        %v779 = vld [vmem:[%s623 + $0x2f0] sm:$0xff]
        %v780 = vld [vmem:[%s623 + $0x2f8] sm:$0xff]
        %v781 = vld [vmem:[%s623 + $0x300] sm:$0xff]
        %v782 = vld [vmem:[%s623 + $0x308] sm:$0xff]
        %v783 = vld [vmem:[%s623 + $0x310] sm:$0xff]
        %v784 = vld [vmem:[%s623 + $0x318] sm:$0xff]
        %v785 = vld [vmem:[%s623 + $0x320] sm:$0xff]
        %v786 = vld [vmem:[%s623 + $0x328] sm:$0xff]
        %v787 = vld [vmem:[%s623 + $0x330] sm:$0xff]
        %v788 = vld [vmem:[%s623 + $0x338] sm:$0xff]
        %v789 = vld [vmem:[%s623 + $0x340] sm:$0xff]
        %v790 = vld [vmem:[%s623 + $0x348] sm:$0xff]
        %v791 = vld [vmem:[%s623 + $0x350] sm:$0xff]
        %v792 = vld [vmem:[%s623 + $0x358] sm:$0xff]
        %v793 = vld [vmem:[%s623 + $0x360] sm:$0xff]
        %v794 = vld [vmem:[%s623 + $0x368] sm:$0xff]
        %v795 = vld [vmem:[%s623 + $0x370] sm:$0xff]
        %v796 = vld [vmem:[%s623 + $0x378] sm:$0xff]
        %v797 = vld [vmem:[%s623 + $0x380] sm:$0xff]
        %v798 = vld [vmem:[%s623 + $0x388] sm:$0xff]
        %v799 = vld [vmem:[%s623 + $0x390] sm:$0xff]
        %v800 = vld [vmem:[%s623 + $0x398] sm:$0xff]
        %v801 = vld [vmem:[%s623 + $0x3a0] sm:$0xff]
        %v802 = vld [vmem:[%s623 + $0x3a8] sm:$0xff]
        %v803 = vld [vmem:[%s623 + $0x3b0] sm:$0xff]
        %v804 = vld [vmem:[%s623 + $0x3b8] sm:$0xff]
        %v805 = vld [vmem:[%s623 + $0x3c0] sm:$0xff]
        %v806 = vld [vmem:[%s623 + $0x3c8] sm:$0xff]
        %v807 = vld [vmem:[%s623 + $0x3d0] sm:$0xff]
        %v808 = vld [vmem:[%s623 + $0x3d8] sm:$0xff]
        %v809 = vld [vmem:[%s623 + $0x3e0] sm:$0xff]
        %v810 = vld [vmem:[%s623 + $0x3e8] sm:$0xff]
        %v811 = vld [vmem:[%s623 + $0x3f0] sm:$0xff]
        %v812 = vld [vmem:[%s623 + $0x3f8] sm:$0xff]
        %p813 = scmp.eq.s32.totalorder %s44, 0
        %p814 = scmp.eq.s32.totalorder %s45, 0
        %p815 = pnand %p813, %p814
        %p816 = pneg %p815
        // Predicated region
        $region93: #{tpu_custom_call.1} parent=83 // pred_check
          _
        $region94: #{tpu_custom_call.1} parent=83 // pred_check_branch
          %818 = sbr.rel (%p815) target = $region96
        $region95: #{tpu_custom_call.1} parent=83 // pred_region
          %vm819 = vcmask 24576
          %820 = vst.msk [vmem:[#allocation3] sm:$0x1] %vm819, -inf
          %821 = vst [vmem:[#allocation4] sm:$0xf] 0.0
        $region96: #{tpu_custom_call.1} parent=83 // pred_fallthru
          _
        // Predicated region
        $region97: #{tpu_custom_call.1} parent=83 // pred_check
          %p822 = pneg %p813
        $region98: #{tpu_custom_call.1} parent=83 // pred_check_branch
          %824 = sbr.rel (%p822) target = $region100
        $region99: #{tpu_custom_call.1} parent=83 // pred_region
          %v825 = vld [vmem:[#allocation9] sm:$0xff]
          %v826 = vld [vmem:[#allocation9 + $0x8] sm:$0xff]
          %v827 = vld [vmem:[#allocation9 + $0x10] sm:$0xff]
          %v828 = vld [vmem:[#allocation9 + $0x18] sm:$0xff]
          %v829 = vld [vmem:[#allocation9 + $0x20] sm:$0xff]
          %v830 = vld [vmem:[#allocation9 + $0x28] sm:$0xff]
          %v831 = vld [vmem:[#allocation9 + $0x30] sm:$0xff]
          %v832 = vld [vmem:[#allocation9 + $0x38] sm:$0xff]
          %v833 = vld [vmem:[#allocation9 + $0x40] sm:$0xff]
          %v834 = vld [vmem:[#allocation9 + $0x48] sm:$0xff]
          %v835 = vld [vmem:[#allocation9 + $0x50] sm:$0xff]
          %v836 = vld [vmem:[#allocation9 + $0x58] sm:$0xff]
          %v837 = vld [vmem:[#allocation9 + $0x60] sm:$0xff]
          %v838 = vld [vmem:[#allocation9 + $0x68] sm:$0xff]
          %v839 = vld [vmem:[#allocation9 + $0x70] sm:$0xff]
          %v840 = vld [vmem:[#allocation9 + $0x78] sm:$0xff]
          %v841 = vld [vmem:[#allocation9 + $0x80] sm:$0xff]
          %v842 = vld [vmem:[#allocation9 + $0x88] sm:$0xff]
          %v843 = vld [vmem:[#allocation9 + $0x90] sm:$0xff]
          %v844 = vld [vmem:[#allocation9 + $0x98] sm:$0xff]
          %v845 = vld [vmem:[#allocation9 + $0xa0] sm:$0xff]
          %v846 = vld [vmem:[#allocation9 + $0xa8] sm:$0xff]
          %v847 = vld [vmem:[#allocation9 + $0xb0] sm:$0xff]
          %v848 = vld [vmem:[#allocation9 + $0xb8] sm:$0xff]
          %v849 = vld [vmem:[#allocation9 + $0xc0] sm:$0xff]
          %v850 = vld [vmem:[#allocation9 + $0xc8] sm:$0xff]
          %v851 = vld [vmem:[#allocation9 + $0xd0] sm:$0xff]
          %v852 = vld [vmem:[#allocation9 + $0xd8] sm:$0xff]
          %v853 = vld [vmem:[#allocation9 + $0xe0] sm:$0xff]
          %v854 = vld [vmem:[#allocation9 + $0xe8] sm:$0xff]
          %v855 = vld [vmem:[#allocation9 + $0xf0] sm:$0xff]
          %v856 = vld [vmem:[#allocation9 + $0xf8] sm:$0xff]
          %v857 = vld [vmem:[#allocation9 + $0x100] sm:$0xff]
          %v858 = vld [vmem:[#allocation9 + $0x108] sm:$0xff]
          %v859 = vld [vmem:[#allocation9 + $0x110] sm:$0xff]
          %v860 = vld [vmem:[#allocation9 + $0x118] sm:$0xff]
          %v861 = vld [vmem:[#allocation9 + $0x120] sm:$0xff]
          %v862 = vld [vmem:[#allocation9 + $0x128] sm:$0xff]
          %v863 = vld [vmem:[#allocation9 + $0x130] sm:$0xff]
          %v864 = vld [vmem:[#allocation9 + $0x138] sm:$0xff]
          %v865 = vld [vmem:[#allocation9 + $0x140] sm:$0xff]
          %v866 = vld [vmem:[#allocation9 + $0x148] sm:$0xff]
          %v867 = vld [vmem:[#allocation9 + $0x150] sm:$0xff]
          %v868 = vld [vmem:[#allocation9 + $0x158] sm:$0xff]
          %v869 = vld [vmem:[#allocation9 + $0x160] sm:$0xff]
          %v870 = vld [vmem:[#allocation9 + $0x168] sm:$0xff]
          %v871 = vld [vmem:[#allocation9 + $0x170] sm:$0xff]
          %v872 = vld [vmem:[#allocation9 + $0x178] sm:$0xff]
          %v873 = vld [vmem:[#allocation9 + $0x180] sm:$0xff]
          %v874 = vld [vmem:[#allocation9 + $0x188] sm:$0xff]
          %v875 = vld [vmem:[#allocation9 + $0x190] sm:$0xff]
          %v876 = vld [vmem:[#allocation9 + $0x198] sm:$0xff]
          %v877 = vld [vmem:[#allocation9 + $0x1a0] sm:$0xff]
          %v878 = vld [vmem:[#allocation9 + $0x1a8] sm:$0xff]
          %v879 = vld [vmem:[#allocation9 + $0x1b0] sm:$0xff]
          %v880 = vld [vmem:[#allocation9 + $0x1b8] sm:$0xff]
          %v881 = vld [vmem:[#allocation9 + $0x1c0] sm:$0xff]
          %v882 = vld [vmem:[#allocation9 + $0x1c8] sm:$0xff]
          %v883 = vld [vmem:[#allocation9 + $0x1d0] sm:$0xff]
          %v884 = vld [vmem:[#allocation9 + $0x1d8] sm:$0xff]
          %v885 = vld [vmem:[#allocation9 + $0x1e0] sm:$0xff]
          %v886 = vld [vmem:[#allocation9 + $0x1e8] sm:$0xff]
          %v887 = vld [vmem:[#allocation9 + $0x1f0] sm:$0xff]
          %v888 = vld [vmem:[#allocation9 + $0x1f8] sm:$0xff]
          %v889 = vld [vmem:[#allocation9 + $0x200] sm:$0xff]
          %v890 = vld [vmem:[#allocation9 + $0x208] sm:$0xff]
          %v891 = vld [vmem:[#allocation9 + $0x210] sm:$0xff]
          %v892 = vld [vmem:[#allocation9 + $0x218] sm:$0xff]
          %v893 = vld [vmem:[#allocation9 + $0x220] sm:$0xff]
          %v894 = vld [vmem:[#allocation9 + $0x228] sm:$0xff]
          %v895 = vld [vmem:[#allocation9 + $0x230] sm:$0xff]
          %v896 = vld [vmem:[#allocation9 + $0x238] sm:$0xff]
          %v897 = vld [vmem:[#allocation9 + $0x240] sm:$0xff]
          %v898 = vld [vmem:[#allocation9 + $0x248] sm:$0xff]
          %v899 = vld [vmem:[#allocation9 + $0x250] sm:$0xff]
          %v900 = vld [vmem:[#allocation9 + $0x258] sm:$0xff]
          %v901 = vld [vmem:[#allocation9 + $0x260] sm:$0xff]
          %v902 = vld [vmem:[#allocation9 + $0x268] sm:$0xff]
          %v903 = vld [vmem:[#allocation9 + $0x270] sm:$0xff]
          %v904 = vld [vmem:[#allocation9 + $0x278] sm:$0xff]
          %v905 = vld [vmem:[#allocation9 + $0x280] sm:$0xff]
          %v906 = vld [vmem:[#allocation9 + $0x288] sm:$0xff]
          %v907 = vld [vmem:[#allocation9 + $0x290] sm:$0xff]
          %v908 = vld [vmem:[#allocation9 + $0x298] sm:$0xff]
          %v909 = vld [vmem:[#allocation9 + $0x2a0] sm:$0xff]
          %v910 = vld [vmem:[#allocation9 + $0x2a8] sm:$0xff]
          %v911 = vld [vmem:[#allocation9 + $0x2b0] sm:$0xff]
          %v912 = vld [vmem:[#allocation9 + $0x2b8] sm:$0xff]
          %v913 = vld [vmem:[#allocation9 + $0x2c0] sm:$0xff]
          %v914 = vld [vmem:[#allocation9 + $0x2c8] sm:$0xff]
          %v915 = vld [vmem:[#allocation9 + $0x2d0] sm:$0xff]
          %v916 = vld [vmem:[#allocation9 + $0x2d8] sm:$0xff]
          %v917 = vld [vmem:[#allocation9 + $0x2e0] sm:$0xff]
          %v918 = vld [vmem:[#allocation9 + $0x2e8] sm:$0xff]
          %v919 = vld [vmem:[#allocation9 + $0x2f0] sm:$0xff]
          %v920 = vld [vmem:[#allocation9 + $0x2f8] sm:$0xff]
          %v921 = vld [vmem:[#allocation9 + $0x300] sm:$0xff]
          %v922 = vld [vmem:[#allocation9 + $0x308] sm:$0xff]
          %v923 = vld [vmem:[#allocation9 + $0x310] sm:$0xff]
          %v924 = vld [vmem:[#allocation9 + $0x318] sm:$0xff]
          %v925 = vld [vmem:[#allocation9 + $0x320] sm:$0xff]
          %v926 = vld [vmem:[#allocation9 + $0x328] sm:$0xff]
          %v927 = vld [vmem:[#allocation9 + $0x330] sm:$0xff]
          %v928 = vld [vmem:[#allocation9 + $0x338] sm:$0xff]
          %v929 = vld [vmem:[#allocation9 + $0x340] sm:$0xff]
          %v930 = vld [vmem:[#allocation9 + $0x348] sm:$0xff]
          %v931 = vld [vmem:[#allocation9 + $0x350] sm:$0xff]
          %v932 = vld [vmem:[#allocation9 + $0x358] sm:$0xff]
          %v933 = vld [vmem:[#allocation9 + $0x360] sm:$0xff]
          %v934 = vld [vmem:[#allocation9 + $0x368] sm:$0xff]
          %v935 = vld [vmem:[#allocation9 + $0x370] sm:$0xff]
          %v936 = vld [vmem:[#allocation9 + $0x378] sm:$0xff]
          %v937 = vld [vmem:[#allocation9 + $0x380] sm:$0xff]
          %v938 = vld [vmem:[#allocation9 + $0x388] sm:$0xff]
          %v939 = vld [vmem:[#allocation9 + $0x390] sm:$0xff]
          %v940 = vld [vmem:[#allocation9 + $0x398] sm:$0xff]
          %v941 = vld [vmem:[#allocation9 + $0x3a0] sm:$0xff]
          %v942 = vld [vmem:[#allocation9 + $0x3a8] sm:$0xff]
          %v943 = vld [vmem:[#allocation9 + $0x3b0] sm:$0xff]
          %v944 = vld [vmem:[#allocation9 + $0x3b8] sm:$0xff]
          %v945 = vld [vmem:[#allocation9 + $0x3c0] sm:$0xff]
          %v946 = vld [vmem:[#allocation9 + $0x3c8] sm:$0xff]
          %v947 = vld [vmem:[#allocation9 + $0x3d0] sm:$0xff]
          %v948 = vld [vmem:[#allocation9 + $0x3d8] sm:$0xff]
          %v949 = vld [vmem:[#allocation9 + $0x3e0] sm:$0xff]
          %v950 = vld [vmem:[#allocation9 + $0x3e8] sm:$0xff]
          %v951 = vld [vmem:[#allocation9 + $0x3f0] sm:$0xff]
          %v952 = vld [vmem:[#allocation9 + $0x3f8] sm:$0xff]
          %v953 = vld [vmem:[#allocation9 + $0x400] sm:$0xff]
          %v954 = vld [vmem:[#allocation9 + $0x408] sm:$0xff]
          %v955 = vld [vmem:[#allocation9 + $0x410] sm:$0xff]
          %v956 = vld [vmem:[#allocation9 + $0x418] sm:$0xff]
          %v957 = vld [vmem:[#allocation9 + $0x420] sm:$0xff]
          %v958 = vld [vmem:[#allocation9 + $0x428] sm:$0xff]
          %v959 = vld [vmem:[#allocation9 + $0x430] sm:$0xff]
          %v960 = vld [vmem:[#allocation9 + $0x438] sm:$0xff]
          %v961 = vld [vmem:[#allocation9 + $0x440] sm:$0xff]
          %v962 = vld [vmem:[#allocation9 + $0x448] sm:$0xff]
          %v963 = vld [vmem:[#allocation9 + $0x450] sm:$0xff]
          %v964 = vld [vmem:[#allocation9 + $0x458] sm:$0xff]
          %v965 = vld [vmem:[#allocation9 + $0x460] sm:$0xff]
          %v966 = vld [vmem:[#allocation9 + $0x468] sm:$0xff]
          %v967 = vld [vmem:[#allocation9 + $0x470] sm:$0xff]
          %v968 = vld [vmem:[#allocation9 + $0x478] sm:$0xff]
          %v969 = vld [vmem:[#allocation9 + $0x480] sm:$0xff]
          %v970 = vld [vmem:[#allocation9 + $0x488] sm:$0xff]
          %v971 = vld [vmem:[#allocation9 + $0x490] sm:$0xff]
          %v972 = vld [vmem:[#allocation9 + $0x498] sm:$0xff]
          %v973 = vld [vmem:[#allocation9 + $0x4a0] sm:$0xff]
          %v974 = vld [vmem:[#allocation9 + $0x4a8] sm:$0xff]
          %v975 = vld [vmem:[#allocation9 + $0x4b0] sm:$0xff]
          %v976 = vld [vmem:[#allocation9 + $0x4b8] sm:$0xff]
          %v977 = vld [vmem:[#allocation9 + $0x4c0] sm:$0xff]
          %v978 = vld [vmem:[#allocation9 + $0x4c8] sm:$0xff]
          %v979 = vld [vmem:[#allocation9 + $0x4d0] sm:$0xff]
          %v980 = vld [vmem:[#allocation9 + $0x4d8] sm:$0xff]
          %v981 = vld [vmem:[#allocation9 + $0x4e0] sm:$0xff]
          %v982 = vld [vmem:[#allocation9 + $0x4e8] sm:$0xff]
          %v983 = vld [vmem:[#allocation9 + $0x4f0] sm:$0xff]
          %v984 = vld [vmem:[#allocation9 + $0x4f8] sm:$0xff]
          %v985 = vld [vmem:[#allocation9 + $0x500] sm:$0xff]
          %v986 = vld [vmem:[#allocation9 + $0x508] sm:$0xff]
          %v987 = vld [vmem:[#allocation9 + $0x510] sm:$0xff]
          %v988 = vld [vmem:[#allocation9 + $0x518] sm:$0xff]
          %v989 = vld [vmem:[#allocation9 + $0x520] sm:$0xff]
          %v990 = vld [vmem:[#allocation9 + $0x528] sm:$0xff]
          %v991 = vld [vmem:[#allocation9 + $0x530] sm:$0xff]
          %v992 = vld [vmem:[#allocation9 + $0x538] sm:$0xff]
          %v993 = vld [vmem:[#allocation9 + $0x540] sm:$0xff]
          %v994 = vld [vmem:[#allocation9 + $0x548] sm:$0xff]
          %v995 = vld [vmem:[#allocation9 + $0x550] sm:$0xff]
          %v996 = vld [vmem:[#allocation9 + $0x558] sm:$0xff]
          %v997 = vld [vmem:[#allocation9 + $0x560] sm:$0xff]
          %v998 = vld [vmem:[#allocation9 + $0x568] sm:$0xff]
          %v999 = vld [vmem:[#allocation9 + $0x570] sm:$0xff]
          %v1000 = vld [vmem:[#allocation9 + $0x578] sm:$0xff]
          %v1001 = vld [vmem:[#allocation9 + $0x580] sm:$0xff]
          %v1002 = vld [vmem:[#allocation9 + $0x588] sm:$0xff]
          %v1003 = vld [vmem:[#allocation9 + $0x590] sm:$0xff]
          %v1004 = vld [vmem:[#allocation9 + $0x598] sm:$0xff]
          %v1005 = vld [vmem:[#allocation9 + $0x5a0] sm:$0xff]
          %v1006 = vld [vmem:[#allocation9 + $0x5a8] sm:$0xff]
          %v1007 = vld [vmem:[#allocation9 + $0x5b0] sm:$0xff]
          %v1008 = vld [vmem:[#allocation9 + $0x5b8] sm:$0xff]
          %v1009 = vld [vmem:[#allocation9 + $0x5c0] sm:$0xff]
          %v1010 = vld [vmem:[#allocation9 + $0x5c8] sm:$0xff]
          %v1011 = vld [vmem:[#allocation9 + $0x5d0] sm:$0xff]
          %v1012 = vld [vmem:[#allocation9 + $0x5d8] sm:$0xff]
          %v1013 = vld [vmem:[#allocation9 + $0x5e0] sm:$0xff]
          %v1014 = vld [vmem:[#allocation9 + $0x5e8] sm:$0xff]
          %v1015 = vld [vmem:[#allocation9 + $0x5f0] sm:$0xff]
          %v1016 = vld [vmem:[#allocation9 + $0x5f8] sm:$0xff]
          %v1017 = vld [vmem:[#allocation9 + $0x600] sm:$0xff]
          %v1018 = vld [vmem:[#allocation9 + $0x608] sm:$0xff]
          %v1019 = vld [vmem:[#allocation9 + $0x610] sm:$0xff]
          %v1020 = vld [vmem:[#allocation9 + $0x618] sm:$0xff]
          %v1021 = vld [vmem:[#allocation9 + $0x620] sm:$0xff]
          %v1022 = vld [vmem:[#allocation9 + $0x628] sm:$0xff]
          %v1023 = vld [vmem:[#allocation9 + $0x630] sm:$0xff]
          %v1024 = vld [vmem:[#allocation9 + $0x638] sm:$0xff]
          %v1025 = vld [vmem:[#allocation9 + $0x640] sm:$0xff]
          %v1026 = vld [vmem:[#allocation9 + $0x648] sm:$0xff]
          %v1027 = vld [vmem:[#allocation9 + $0x650] sm:$0xff]
          %v1028 = vld [vmem:[#allocation9 + $0x658] sm:$0xff]
          %v1029 = vld [vmem:[#allocation9 + $0x660] sm:$0xff]
          %v1030 = vld [vmem:[#allocation9 + $0x668] sm:$0xff]
          %v1031 = vld [vmem:[#allocation9 + $0x670] sm:$0xff]
          %v1032 = vld [vmem:[#allocation9 + $0x678] sm:$0xff]
          %v1033 = vld [vmem:[#allocation9 + $0x680] sm:$0xff]
          %v1034 = vld [vmem:[#allocation9 + $0x688] sm:$0xff]
          %v1035 = vld [vmem:[#allocation9 + $0x690] sm:$0xff]
          %v1036 = vld [vmem:[#allocation9 + $0x698] sm:$0xff]
          %v1037 = vld [vmem:[#allocation9 + $0x6a0] sm:$0xff]
          %v1038 = vld [vmem:[#allocation9 + $0x6a8] sm:$0xff]
          %v1039 = vld [vmem:[#allocation9 + $0x6b0] sm:$0xff]
          %v1040 = vld [vmem:[#allocation9 + $0x6b8] sm:$0xff]
          %v1041 = vld [vmem:[#allocation9 + $0x6c0] sm:$0xff]
          %v1042 = vld [vmem:[#allocation9 + $0x6c8] sm:$0xff]
          %v1043 = vld [vmem:[#allocation9 + $0x6d0] sm:$0xff]
          %v1044 = vld [vmem:[#allocation9 + $0x6d8] sm:$0xff]
          %v1045 = vld [vmem:[#allocation9 + $0x6e0] sm:$0xff]
          %v1046 = vld [vmem:[#allocation9 + $0x6e8] sm:$0xff]
          %v1047 = vld [vmem:[#allocation9 + $0x6f0] sm:$0xff]
          %v1048 = vld [vmem:[#allocation9 + $0x6f8] sm:$0xff]
          %v1049 = vld [vmem:[#allocation9 + $0x700] sm:$0xff]
          %v1050 = vld [vmem:[#allocation9 + $0x708] sm:$0xff]
          %v1051 = vld [vmem:[#allocation9 + $0x710] sm:$0xff]
          %v1052 = vld [vmem:[#allocation9 + $0x718] sm:$0xff]
          %v1053 = vld [vmem:[#allocation9 + $0x720] sm:$0xff]
          %v1054 = vld [vmem:[#allocation9 + $0x728] sm:$0xff]
          %v1055 = vld [vmem:[#allocation9 + $0x730] sm:$0xff]
          %v1056 = vld [vmem:[#allocation9 + $0x738] sm:$0xff]
          %v1057 = vld [vmem:[#allocation9 + $0x740] sm:$0xff]
          %v1058 = vld [vmem:[#allocation9 + $0x748] sm:$0xff]
          %v1059 = vld [vmem:[#allocation9 + $0x750] sm:$0xff]
          %v1060 = vld [vmem:[#allocation9 + $0x758] sm:$0xff]
          %v1061 = vld [vmem:[#allocation9 + $0x760] sm:$0xff]
          %v1062 = vld [vmem:[#allocation9 + $0x768] sm:$0xff]
          %v1063 = vld [vmem:[#allocation9 + $0x770] sm:$0xff]
          %v1064 = vld [vmem:[#allocation9 + $0x778] sm:$0xff]
          %v1065 = vld [vmem:[#allocation9 + $0x780] sm:$0xff]
          %v1066 = vld [vmem:[#allocation9 + $0x788] sm:$0xff]
          %v1067 = vld [vmem:[#allocation9 + $0x790] sm:$0xff]
          %v1068 = vld [vmem:[#allocation9 + $0x798] sm:$0xff]
          %v1069 = vld [vmem:[#allocation9 + $0x7a0] sm:$0xff]
          %v1070 = vld [vmem:[#allocation9 + $0x7a8] sm:$0xff]
          %v1071 = vld [vmem:[#allocation9 + $0x7b0] sm:$0xff]
          %v1072 = vld [vmem:[#allocation9 + $0x7b8] sm:$0xff]
          %v1073 = vld [vmem:[#allocation9 + $0x7c0] sm:$0xff]
          %v1074 = vld [vmem:[#allocation9 + $0x7c8] sm:$0xff]
          %v1075 = vld [vmem:[#allocation9 + $0x7d0] sm:$0xff]
          %v1076 = vld [vmem:[#allocation9 + $0x7d8] sm:$0xff]
          %v1077 = vld [vmem:[#allocation9 + $0x7e0] sm:$0xff]
          %v1078 = vld [vmem:[#allocation9 + $0x7e8] sm:$0xff]
          %v1079 = vld [vmem:[#allocation9 + $0x7f0] sm:$0xff]
          %v1080 = vld [vmem:[#allocation9 + $0x7f8] sm:$0xff]
          %v1081 = vld [vmem:[%s2] sm:$0x3]
          %v1083 = vperm.slane %v1081, 0
          %v1084 = vperm.slane %v1081, 1
          %1087 = vmatpush.msra.mxu0 %v855
          %1088 = vmatpush.msra.mxu0 %v853
          %1089 = vmatpush.msra.mxu0 %v851
          %1090 = vmatpush.msra.mxu0 %v849
          %1091 = vmatpush.msra.mxu0 %v847
          %1092 = vmatpush.msra.mxu0 %v845
          %1093 = vmatpush.msra.mxu0 %v843
          %1094 = vmatpush.msra.mxu0 %v841
          %1095 = vmatpush.msra.mxu0 %v839
          %1096 = vmatpush.msra.mxu0 %v837
          %1097 = vmatpush.msra.mxu0 %v835
          %1098 = vmatpush.msra.mxu0 %v833
          %1099 = vmatpush.msra.mxu0 %v831
          %1100 = vmatpush.msra.mxu0 %v829
          %1101 = vmatpush.msra.mxu0 %v827
          %1102 = vmatpush.msra.mxu0 %v825
          %1103 = vmatmul.f32.gmra.mxu0 %v685
          %v1104 = vpop.f32.mrf.mxu0
          %v1105 = vadd.f32 %v1083, %v1104
          %1106 = vmatmul.f32.gmra.mxu0 %v693
          %v1107 = vpop.f32.mrf.mxu0
          %v1108 = vadd.f32 %v1083, %v1107
          %1109 = vmatmul.f32.gmra.mxu0 %v701
          %v1110 = vpop.f32.mrf.mxu0
          %v1111 = vadd.f32 %v1083, %v1110
          %1112 = vmatmul.f32.gmra.mxu0 %v709
          %v1113 = vpop.f32.mrf.mxu0
          %v1114 = vadd.f32 %v1083, %v1113
          %1115 = vmatmul.f32.gmra.mxu0 %v717
          %v1116 = vpop.f32.mrf.mxu0
          %v1117 = vadd.f32 %v1083, %v1116
          %1118 = vmatmul.f32.gmra.mxu0 %v725
          %v1119 = vpop.f32.mrf.mxu0
          %v1120 = vadd.f32 %v1083, %v1119
          %1121 = vmatmul.f32.gmra.mxu0 %v733
          %v1122 = vpop.f32.mrf.mxu0
          %v1123 = vadd.f32 %v1083, %v1122
          %1124 = vmatmul.f32.gmra.mxu0 %v741
          %v1125 = vpop.f32.mrf.mxu0
          %v1126 = vadd.f32 %v1083, %v1125
          %1127 = vmatmul.f32.gmra.mxu0 %v749
          %v1128 = vpop.f32.mrf.mxu0
          %v1129 = vadd.f32 %v1083, %v1128
          %1130 = vmatmul.f32.gmra.mxu0 %v757
          %v1131 = vpop.f32.mrf.mxu0
          %v1132 = vadd.f32 %v1083, %v1131
          %1133 = vmatmul.f32.gmra.mxu0 %v765
          %v1134 = vpop.f32.mrf.mxu0
          %v1135 = vadd.f32 %v1083, %v1134
          %1136 = vmatmul.f32.gmra.mxu0 %v773
          %v1137 = vpop.f32.mrf.mxu0
          %v1138 = vadd.f32 %v1083, %v1137
          %1139 = vmatmul.f32.gmra.mxu0 %v781
          %v1140 = vpop.f32.mrf.mxu0
          %v1141 = vadd.f32 %v1083, %v1140
          %1142 = vmatmul.f32.gmra.mxu0 %v789
          %v1143 = vpop.f32.mrf.mxu0
          %v1144 = vadd.f32 %v1083, %v1143
          %1145 = vmatmul.f32.gmra.mxu0 %v797
          %v1146 = vpop.f32.mrf.mxu0
          %v1147 = vadd.f32 %v1083, %v1146
          %1148 = vmatmul.f32.gmra.mxu0 %v805
          %v1149 = vpop.f32.mrf.mxu0
          %v1150 = vadd.f32 %v1083, %v1149
          %1151 = vdwg.mxu0
          %1152 = vmatpush.msra.mxu0 %v887
          %1153 = vmatpush.msra.mxu0 %v885
          %1154 = vmatpush.msra.mxu0 %v883
          %1155 = vmatpush.msra.mxu0 %v881
          %1156 = vmatpush.msra.mxu0 %v879
          %1157 = vmatpush.msra.mxu0 %v877
          %1158 = vmatpush.msra.mxu0 %v875
          %1159 = vmatpush.msra.mxu0 %v873
          %1160 = vmatpush.msra.mxu0 %v871
          %1161 = vmatpush.msra.mxu0 %v869
          %1162 = vmatpush.msra.mxu0 %v867
          %1163 = vmatpush.msra.mxu0 %v865
          %1164 = vmatpush.msra.mxu0 %v863
          %1165 = vmatpush.msra.mxu0 %v861
          %1166 = vmatpush.msra.mxu0 %v859
          %1167 = vmatpush.msra.mxu0 %v857
          %1168 = vmatmul.f32.gmra.mxu0 %v686
          %v1169 = vpop.f32.mrf.mxu0
          %v1170 = vadd.f32 %v1105, %v1169
          %1171 = vmatmul.f32.gmra.mxu0 %v694
          %v1172 = vpop.f32.mrf.mxu0
          %v1173 = vadd.f32 %v1108, %v1172
          %1174 = vmatmul.f32.gmra.mxu0 %v702
          %v1175 = vpop.f32.mrf.mxu0
          %v1176 = vadd.f32 %v1111, %v1175
          %1177 = vmatmul.f32.gmra.mxu0 %v710
          %v1178 = vpop.f32.mrf.mxu0
          %v1179 = vadd.f32 %v1114, %v1178
          %1180 = vmatmul.f32.gmra.mxu0 %v718
          %v1181 = vpop.f32.mrf.mxu0
          %v1182 = vadd.f32 %v1117, %v1181
          %1183 = vmatmul.f32.gmra.mxu0 %v726
          %v1184 = vpop.f32.mrf.mxu0
          %v1185 = vadd.f32 %v1120, %v1184
          %1186 = vmatmul.f32.gmra.mxu0 %v734
          %v1187 = vpop.f32.mrf.mxu0
          %v1188 = vadd.f32 %v1123, %v1187
          %1189 = vmatmul.f32.gmra.mxu0 %v742
          %v1190 = vpop.f32.mrf.mxu0
          %v1191 = vadd.f32 %v1126, %v1190
          %1192 = vmatmul.f32.gmra.mxu0 %v750
          %v1193 = vpop.f32.mrf.mxu0
          %v1194 = vadd.f32 %v1129, %v1193
          %1195 = vmatmul.f32.gmra.mxu0 %v758
          %v1196 = vpop.f32.mrf.mxu0
          %v1197 = vadd.f32 %v1132, %v1196
          %1198 = vmatmul.f32.gmra.mxu0 %v766
          %v1199 = vpop.f32.mrf.mxu0
          %v1200 = vadd.f32 %v1135, %v1199
          %1201 = vmatmul.f32.gmra.mxu0 %v774
          %v1202 = vpop.f32.mrf.mxu0
          %v1203 = vadd.f32 %v1138, %v1202
          %1204 = vmatmul.f32.gmra.mxu0 %v782
          %v1205 = vpop.f32.mrf.mxu0
          %v1206 = vadd.f32 %v1141, %v1205
          %1207 = vmatmul.f32.gmra.mxu0 %v790
          %v1208 = vpop.f32.mrf.mxu0
          %v1209 = vadd.f32 %v1144, %v1208
          %1210 = vmatmul.f32.gmra.mxu0 %v798
          %v1211 = vpop.f32.mrf.mxu0
          %v1212 = vadd.f32 %v1147, %v1211
          %1213 = vmatmul.f32.gmra.mxu0 %v806
          %v1214 = vpop.f32.mrf.mxu0
          %v1215 = vadd.f32 %v1150, %v1214
          %1216 = vdwg.mxu0
          %1217 = vmatpush.msra.mxu0 %v919
          %1218 = vmatpush.msra.mxu0 %v917
          %1219 = vmatpush.msra.mxu0 %v915
          %1220 = vmatpush.msra.mxu0 %v913
          %1221 = vmatpush.msra.mxu0 %v911
          %1222 = vmatpush.msra.mxu0 %v909
          %1223 = vmatpush.msra.mxu0 %v907
          %1224 = vmatpush.msra.mxu0 %v905
          %1225 = vmatpush.msra.mxu0 %v903
          %1226 = vmatpush.msra.mxu0 %v901
          %1227 = vmatpush.msra.mxu0 %v899
          %1228 = vmatpush.msra.mxu0 %v897
          %1229 = vmatpush.msra.mxu0 %v895
          %1230 = vmatpush.msra.mxu0 %v893
          %1231 = vmatpush.msra.mxu0 %v891
          %1232 = vmatpush.msra.mxu0 %v889
          %1233 = vmatmul.f32.gmra.mxu0 %v687
          %v1234 = vpop.f32.mrf.mxu0
          %v1235 = vadd.f32 %v1170, %v1234
          %1236 = vmatmul.f32.gmra.mxu0 %v695
          %v1237 = vpop.f32.mrf.mxu0
          %v1238 = vadd.f32 %v1173, %v1237
          %1239 = vmatmul.f32.gmra.mxu0 %v703
          %v1240 = vpop.f32.mrf.mxu0
          %v1241 = vadd.f32 %v1176, %v1240
          %1242 = vmatmul.f32.gmra.mxu0 %v711
          %v1243 = vpop.f32.mrf.mxu0
          %v1244 = vadd.f32 %v1179, %v1243
          %1245 = vmatmul.f32.gmra.mxu0 %v719
          %v1246 = vpop.f32.mrf.mxu0
          %v1247 = vadd.f32 %v1182, %v1246
          %1248 = vmatmul.f32.gmra.mxu0 %v727
          %v1249 = vpop.f32.mrf.mxu0
          %v1250 = vadd.f32 %v1185, %v1249
          %1251 = vmatmul.f32.gmra.mxu0 %v735
          %v1252 = vpop.f32.mrf.mxu0
          %v1253 = vadd.f32 %v1188, %v1252
          %1254 = vmatmul.f32.gmra.mxu0 %v743
          %v1255 = vpop.f32.mrf.mxu0
          %v1256 = vadd.f32 %v1191, %v1255
          %1257 = vmatmul.f32.gmra.mxu0 %v751
          %v1258 = vpop.f32.mrf.mxu0
          %v1259 = vadd.f32 %v1194, %v1258
          %1260 = vmatmul.f32.gmra.mxu0 %v759
          %v1261 = vpop.f32.mrf.mxu0
          %v1262 = vadd.f32 %v1197, %v1261
          %1263 = vmatmul.f32.gmra.mxu0 %v767
          %v1264 = vpop.f32.mrf.mxu0
          %v1265 = vadd.f32 %v1200, %v1264
          %1266 = vmatmul.f32.gmra.mxu0 %v775
          %v1267 = vpop.f32.mrf.mxu0
          %v1268 = vadd.f32 %v1203, %v1267
          %1269 = vmatmul.f32.gmra.mxu0 %v783
          %v1270 = vpop.f32.mrf.mxu0
          %v1271 = vadd.f32 %v1206, %v1270
          %1272 = vmatmul.f32.gmra.mxu0 %v791
          %v1273 = vpop.f32.mrf.mxu0
          %v1274 = vadd.f32 %v1209, %v1273
          %1275 = vmatmul.f32.gmra.mxu0 %v799
          %v1276 = vpop.f32.mrf.mxu0
          %v1277 = vadd.f32 %v1212, %v1276
          %1278 = vmatmul.f32.gmra.mxu0 %v807
          %v1279 = vpop.f32.mrf.mxu0
          %v1280 = vadd.f32 %v1215, %v1279
          %1281 = vdwg.mxu0
          %1282 = vmatpush.msra.mxu0 %v951
          %1283 = vmatpush.msra.mxu0 %v949
          %1284 = vmatpush.msra.mxu0 %v947
          %1285 = vmatpush.msra.mxu0 %v945
          %1286 = vmatpush.msra.mxu0 %v943
          %1287 = vmatpush.msra.mxu0 %v941
          %1288 = vmatpush.msra.mxu0 %v939
          %1289 = vmatpush.msra.mxu0 %v937
          %1290 = vmatpush.msra.mxu0 %v935
          %1291 = vmatpush.msra.mxu0 %v933
          %1292 = vmatpush.msra.mxu0 %v931
          %1293 = vmatpush.msra.mxu0 %v929
          %1294 = vmatpush.msra.mxu0 %v927
          %1295 = vmatpush.msra.mxu0 %v925
          %1296 = vmatpush.msra.mxu0 %v923
          %1297 = vmatpush.msra.mxu0 %v921
          %1298 = vmatmul.f32.gmra.mxu0 %v688
          %v1299 = vpop.f32.mrf.mxu0
          %v1300 = vadd.f32 %v1235, %v1299
          %1301 = vmatmul.f32.gmra.mxu0 %v696
          %v1302 = vpop.f32.mrf.mxu0
          %v1303 = vadd.f32 %v1238, %v1302
          %1304 = vmatmul.f32.gmra.mxu0 %v704
          %v1305 = vpop.f32.mrf.mxu0
          %v1306 = vadd.f32 %v1241, %v1305
          %1307 = vmatmul.f32.gmra.mxu0 %v712
          %v1308 = vpop.f32.mrf.mxu0
          %v1309 = vadd.f32 %v1244, %v1308
          %1310 = vmatmul.f32.gmra.mxu0 %v720
          %v1311 = vpop.f32.mrf.mxu0
          %v1312 = vadd.f32 %v1247, %v1311
          %1313 = vmatmul.f32.gmra.mxu0 %v728
          %v1314 = vpop.f32.mrf.mxu0
          %v1315 = vadd.f32 %v1250, %v1314
          %1316 = vmatmul.f32.gmra.mxu0 %v736
          %v1317 = vpop.f32.mrf.mxu0
          %v1318 = vadd.f32 %v1253, %v1317
          %1319 = vmatmul.f32.gmra.mxu0 %v744
          %v1320 = vpop.f32.mrf.mxu0
          %v1321 = vadd.f32 %v1256, %v1320
          %1322 = vmatmul.f32.gmra.mxu0 %v752
          %v1323 = vpop.f32.mrf.mxu0
          %v1324 = vadd.f32 %v1259, %v1323
          %1325 = vmatmul.f32.gmra.mxu0 %v760
          %v1326 = vpop.f32.mrf.mxu0
          %v1327 = vadd.f32 %v1262, %v1326
          %1328 = vmatmul.f32.gmra.mxu0 %v768
          %v1329 = vpop.f32.mrf.mxu0
          %v1330 = vadd.f32 %v1265, %v1329
          %1331 = vmatmul.f32.gmra.mxu0 %v776
          %v1332 = vpop.f32.mrf.mxu0
          %v1333 = vadd.f32 %v1268, %v1332
          %1334 = vmatmul.f32.gmra.mxu0 %v784
          %v1335 = vpop.f32.mrf.mxu0
          %v1336 = vadd.f32 %v1271, %v1335
          %1337 = vmatmul.f32.gmra.mxu0 %v792
          %v1338 = vpop.f32.mrf.mxu0
          %v1339 = vadd.f32 %v1274, %v1338
          %1340 = vmatmul.f32.gmra.mxu0 %v800
          %v1341 = vpop.f32.mrf.mxu0
          %v1342 = vadd.f32 %v1277, %v1341
          %1343 = vmatmul.f32.gmra.mxu0 %v808
          %v1344 = vpop.f32.mrf.mxu0
          %v1345 = vadd.f32 %v1280, %v1344
          %1346 = vdwg.mxu0
          %1347 = vmatpush.msra.mxu0 %v983
          %1348 = vmatpush.msra.mxu0 %v981
          %1349 = vmatpush.msra.mxu0 %v979
          %1350 = vmatpush.msra.mxu0 %v977
          %1351 = vmatpush.msra.mxu0 %v975
          %1352 = vmatpush.msra.mxu0 %v973
          %1353 = vmatpush.msra.mxu0 %v971
          %1354 = vmatpush.msra.mxu0 %v969
          %1355 = vmatpush.msra.mxu0 %v967
          %1356 = vmatpush.msra.mxu0 %v965
          %1357 = vmatpush.msra.mxu0 %v963
          %1358 = vmatpush.msra.mxu0 %v961
          %1359 = vmatpush.msra.mxu0 %v959
          %1360 = vmatpush.msra.mxu0 %v957
          %1361 = vmatpush.msra.mxu0 %v955
          %1362 = vmatpush.msra.mxu0 %v953
          %1363 = vmatmul.f32.gmra.mxu0 %v689
          %v1364 = vpop.f32.mrf.mxu0
          %v1365 = vadd.f32 %v1300, %v1364
          %1366 = vmatmul.f32.gmra.mxu0 %v697
          %v1367 = vpop.f32.mrf.mxu0
          %v1368 = vadd.f32 %v1303, %v1367
          %1369 = vmatmul.f32.gmra.mxu0 %v705
          %v1370 = vpop.f32.mrf.mxu0
          %v1371 = vadd.f32 %v1306, %v1370
          %1372 = vmatmul.f32.gmra.mxu0 %v713
          %v1373 = vpop.f32.mrf.mxu0
          %v1374 = vadd.f32 %v1309, %v1373
          %1375 = vmatmul.f32.gmra.mxu0 %v721
          %v1376 = vpop.f32.mrf.mxu0
          %v1377 = vadd.f32 %v1312, %v1376
          %1378 = vmatmul.f32.gmra.mxu0 %v729
          %v1379 = vpop.f32.mrf.mxu0
          %v1380 = vadd.f32 %v1315, %v1379
          %1381 = vmatmul.f32.gmra.mxu0 %v737
          %v1382 = vpop.f32.mrf.mxu0
          %v1383 = vadd.f32 %v1318, %v1382
          %1384 = vmatmul.f32.gmra.mxu0 %v745
          %v1385 = vpop.f32.mrf.mxu0
          %v1386 = vadd.f32 %v1321, %v1385
          %1387 = vmatmul.f32.gmra.mxu0 %v753
          %v1388 = vpop.f32.mrf.mxu0
          %v1389 = vadd.f32 %v1324, %v1388
          %1390 = vmatmul.f32.gmra.mxu0 %v761
          %v1391 = vpop.f32.mrf.mxu0
          %v1392 = vadd.f32 %v1327, %v1391
          %1393 = vmatmul.f32.gmra.mxu0 %v769
          %v1394 = vpop.f32.mrf.mxu0
          %v1395 = vadd.f32 %v1330, %v1394
          %1396 = vmatmul.f32.gmra.mxu0 %v777
          %v1397 = vpop.f32.mrf.mxu0
          %v1398 = vadd.f32 %v1333, %v1397
          %1399 = vmatmul.f32.gmra.mxu0 %v785
          %v1400 = vpop.f32.mrf.mxu0
          %v1401 = vadd.f32 %v1336, %v1400
          %1402 = vmatmul.f32.gmra.mxu0 %v793
          %v1403 = vpop.f32.mrf.mxu0
          %v1404 = vadd.f32 %v1339, %v1403
          %1405 = vmatmul.f32.gmra.mxu0 %v801
          %v1406 = vpop.f32.mrf.mxu0
          %v1407 = vadd.f32 %v1342, %v1406
          %1408 = vmatmul.f32.gmra.mxu0 %v809
          %v1409 = vpop.f32.mrf.mxu0
          %v1410 = vadd.f32 %v1345, %v1409
          %1411 = vdwg.mxu0
          %1412 = vmatpush.msra.mxu0 %v1015
          %1413 = vmatpush.msra.mxu0 %v1013
          %1414 = vmatpush.msra.mxu0 %v1011
          %1415 = vmatpush.msra.mxu0 %v1009
          %1416 = vmatpush.msra.mxu0 %v1007
          %1417 = vmatpush.msra.mxu0 %v1005
          %1418 = vmatpush.msra.mxu0 %v1003
          %1419 = vmatpush.msra.mxu0 %v1001
          %1420 = vmatpush.msra.mxu0 %v999
          %1421 = vmatpush.msra.mxu0 %v997
          %1422 = vmatpush.msra.mxu0 %v995
          %1423 = vmatpush.msra.mxu0 %v993
          %1424 = vmatpush.msra.mxu0 %v991
          %1425 = vmatpush.msra.mxu0 %v989
          %1426 = vmatpush.msra.mxu0 %v987
          %1427 = vmatpush.msra.mxu0 %v985
          %1428 = vmatmul.f32.gmra.mxu0 %v690
          %v1429 = vpop.f32.mrf.mxu0
          %v1430 = vadd.f32 %v1365, %v1429
          %1431 = vmatmul.f32.gmra.mxu0 %v698
          %v1432 = vpop.f32.mrf.mxu0
          %v1433 = vadd.f32 %v1368, %v1432
          %1434 = vmatmul.f32.gmra.mxu0 %v706
          %v1435 = vpop.f32.mrf.mxu0
          %v1436 = vadd.f32 %v1371, %v1435
          %1437 = vmatmul.f32.gmra.mxu0 %v714
          %v1438 = vpop.f32.mrf.mxu0
          %v1439 = vadd.f32 %v1374, %v1438
          %1440 = vmatmul.f32.gmra.mxu0 %v722
          %v1441 = vpop.f32.mrf.mxu0
          %v1442 = vadd.f32 %v1377, %v1441
          %1443 = vmatmul.f32.gmra.mxu0 %v730
          %v1444 = vpop.f32.mrf.mxu0
          %v1445 = vadd.f32 %v1380, %v1444
          %1446 = vmatmul.f32.gmra.mxu0 %v738
          %v1447 = vpop.f32.mrf.mxu0
          %v1448 = vadd.f32 %v1383, %v1447
          %1449 = vmatmul.f32.gmra.mxu0 %v746
          %v1450 = vpop.f32.mrf.mxu0
          %v1451 = vadd.f32 %v1386, %v1450
          %1452 = vmatmul.f32.gmra.mxu0 %v754
          %v1453 = vpop.f32.mrf.mxu0
          %v1454 = vadd.f32 %v1389, %v1453
          %1455 = vmatmul.f32.gmra.mxu0 %v762
          %v1456 = vpop.f32.mrf.mxu0
          %v1457 = vadd.f32 %v1392, %v1456
          %1458 = vmatmul.f32.gmra.mxu0 %v770
          %v1459 = vpop.f32.mrf.mxu0
          %v1460 = vadd.f32 %v1395, %v1459
          %1461 = vmatmul.f32.gmra.mxu0 %v778
          %v1462 = vpop.f32.mrf.mxu0
          %v1463 = vadd.f32 %v1398, %v1462
          %1464 = vmatmul.f32.gmra.mxu0 %v786
          %v1465 = vpop.f32.mrf.mxu0
          %v1466 = vadd.f32 %v1401, %v1465
          %1467 = vmatmul.f32.gmra.mxu0 %v794
          %v1468 = vpop.f32.mrf.mxu0
          %v1469 = vadd.f32 %v1404, %v1468
          %1470 = vmatmul.f32.gmra.mxu0 %v802
          %v1471 = vpop.f32.mrf.mxu0
          %v1472 = vadd.f32 %v1407, %v1471
          %1473 = vmatmul.f32.gmra.mxu0 %v810
          %v1474 = vpop.f32.mrf.mxu0
          %v1475 = vadd.f32 %v1410, %v1474
          %1476 = vdwg.mxu0
          %1477 = vmatpush.msra.mxu0 %v1047
          %1478 = vmatpush.msra.mxu0 %v1045
          %1479 = vmatpush.msra.mxu0 %v1043
          %1480 = vmatpush.msra.mxu0 %v1041
          %1481 = vmatpush.msra.mxu0 %v1039
          %1482 = vmatpush.msra.mxu0 %v1037
          %1483 = vmatpush.msra.mxu0 %v1035
          %1484 = vmatpush.msra.mxu0 %v1033
          %1485 = vmatpush.msra.mxu0 %v1031
          %1486 = vmatpush.msra.mxu0 %v1029
          %1487 = vmatpush.msra.mxu0 %v1027
          %1488 = vmatpush.msra.mxu0 %v1025
          %1489 = vmatpush.msra.mxu0 %v1023
          %1490 = vmatpush.msra.mxu0 %v1021
          %1491 = vmatpush.msra.mxu0 %v1019
          %1492 = vmatpush.msra.mxu0 %v1017
          %1493 = vmatmul.f32.gmra.mxu0 %v691
          %v1494 = vpop.f32.mrf.mxu0
          %v1495 = vadd.f32 %v1430, %v1494
          %1496 = vmatmul.f32.gmra.mxu0 %v699
          %v1497 = vpop.f32.mrf.mxu0
          %v1498 = vadd.f32 %v1433, %v1497
          %1499 = vmatmul.f32.gmra.mxu0 %v707
          %v1500 = vpop.f32.mrf.mxu0
          %v1501 = vadd.f32 %v1436, %v1500
          %1502 = vmatmul.f32.gmra.mxu0 %v715
          %v1503 = vpop.f32.mrf.mxu0
          %v1504 = vadd.f32 %v1439, %v1503
          %1505 = vmatmul.f32.gmra.mxu0 %v723
          %v1506 = vpop.f32.mrf.mxu0
          %v1507 = vadd.f32 %v1442, %v1506
          %1508 = vmatmul.f32.gmra.mxu0 %v731
          %v1509 = vpop.f32.mrf.mxu0
          %v1510 = vadd.f32 %v1445, %v1509
          %1511 = vmatmul.f32.gmra.mxu0 %v739
          %v1512 = vpop.f32.mrf.mxu0
          %v1513 = vadd.f32 %v1448, %v1512
          %1514 = vmatmul.f32.gmra.mxu0 %v747
          %v1515 = vpop.f32.mrf.mxu0
          %v1516 = vadd.f32 %v1451, %v1515
          %1517 = vmatmul.f32.gmra.mxu0 %v755
          %v1518 = vpop.f32.mrf.mxu0
          %v1519 = vadd.f32 %v1454, %v1518
          %1520 = vmatmul.f32.gmra.mxu0 %v763
          %v1521 = vpop.f32.mrf.mxu0
          %v1522 = vadd.f32 %v1457, %v1521
          %1523 = vmatmul.f32.gmra.mxu0 %v771
          %v1524 = vpop.f32.mrf.mxu0
          %v1525 = vadd.f32 %v1460, %v1524
          %1526 = vmatmul.f32.gmra.mxu0 %v779
          %v1527 = vpop.f32.mrf.mxu0
          %v1528 = vadd.f32 %v1463, %v1527
          %1529 = vmatmul.f32.gmra.mxu0 %v787
          %v1530 = vpop.f32.mrf.mxu0
          %v1531 = vadd.f32 %v1466, %v1530
          %1532 = vmatmul.f32.gmra.mxu0 %v795
          %v1533 = vpop.f32.mrf.mxu0
          %v1534 = vadd.f32 %v1469, %v1533
          %1535 = vmatmul.f32.gmra.mxu0 %v803
          %v1536 = vpop.f32.mrf.mxu0
          %v1537 = vadd.f32 %v1472, %v1536
          %1538 = vmatmul.f32.gmra.mxu0 %v811
          %v1539 = vpop.f32.mrf.mxu0
          %v1540 = vadd.f32 %v1475, %v1539
          %1541 = vdwg.mxu0
          %1542 = vmatpush.msra.mxu0 %v1079
          %1543 = vmatpush.msra.mxu0 %v1077
          %1544 = vmatpush.msra.mxu0 %v1075
          %1545 = vmatpush.msra.mxu0 %v1073
          %1546 = vmatpush.msra.mxu0 %v1071
          %1547 = vmatpush.msra.mxu0 %v1069
          %1548 = vmatpush.msra.mxu0 %v1067
          %1549 = vmatpush.msra.mxu0 %v1065
          %1550 = vmatpush.msra.mxu0 %v1063
          %1551 = vmatpush.msra.mxu0 %v1061
          %1552 = vmatpush.msra.mxu0 %v1059
          %1553 = vmatpush.msra.mxu0 %v1057
          %1554 = vmatpush.msra.mxu0 %v1055
          %1555 = vmatpush.msra.mxu0 %v1053
          %1556 = vmatpush.msra.mxu0 %v1051
          %1557 = vmatpush.msra.mxu0 %v1049
          %1558 = vmatmul.f32.gmra.mxu0 %v692
          %v1559 = vpop.f32.mrf.mxu0
          %v1560 = vadd.f32 %v1495, %v1559
          %1561 = vmatmul.f32.gmra.mxu0 %v700
          %v1562 = vpop.f32.mrf.mxu0
          %v1563 = vadd.f32 %v1498, %v1562
          %1564 = vmatmul.f32.gmra.mxu0 %v708
          %v1565 = vpop.f32.mrf.mxu0
          %v1566 = vadd.f32 %v1501, %v1565
          %1567 = vmatmul.f32.gmra.mxu0 %v716
          %v1568 = vpop.f32.mrf.mxu0
          %v1569 = vadd.f32 %v1504, %v1568
          %1570 = vmatmul.f32.gmra.mxu0 %v724
          %v1571 = vpop.f32.mrf.mxu0
          %v1572 = vadd.f32 %v1507, %v1571
          %1573 = vmatmul.f32.gmra.mxu0 %v732
          %v1574 = vpop.f32.mrf.mxu0
          %v1575 = vadd.f32 %v1510, %v1574
          %1576 = vmatmul.f32.gmra.mxu0 %v740
          %v1577 = vpop.f32.mrf.mxu0
          %v1578 = vadd.f32 %v1513, %v1577
          %1579 = vmatmul.f32.gmra.mxu0 %v748
          %v1580 = vpop.f32.mrf.mxu0
          %v1581 = vadd.f32 %v1516, %v1580
          %1582 = vmatmul.f32.gmra.mxu0 %v756
          %v1583 = vpop.f32.mrf.mxu0
          %v1584 = vadd.f32 %v1519, %v1583
          %1585 = vmatmul.f32.gmra.mxu0 %v764
          %v1586 = vpop.f32.mrf.mxu0
          %v1587 = vadd.f32 %v1522, %v1586
          %1588 = vmatmul.f32.gmra.mxu0 %v772
          %v1589 = vpop.f32.mrf.mxu0
          %v1590 = vadd.f32 %v1525, %v1589
          %1591 = vmatmul.f32.gmra.mxu0 %v780
          %v1592 = vpop.f32.mrf.mxu0
          %v1593 = vadd.f32 %v1528, %v1592
          %1594 = vmatmul.f32.gmra.mxu0 %v788
          %v1595 = vpop.f32.mrf.mxu0
          %v1596 = vadd.f32 %v1531, %v1595
          %1597 = vmatmul.f32.gmra.mxu0 %v796
          %v1598 = vpop.f32.mrf.mxu0
          %v1599 = vadd.f32 %v1534, %v1598
          %1600 = vmatmul.f32.gmra.mxu0 %v804
          %v1601 = vpop.f32.mrf.mxu0
          %v1602 = vadd.f32 %v1537, %v1601
          %1603 = vmatmul.f32.gmra.mxu0 %v812
          %v1604 = vpop.f32.mrf.mxu0
          %v1605 = vadd.f32 %v1540, %v1604
          %1606 = vdwg.mxu0
          %1607 = vmatpush.msra.mxu0 %v856
          %1608 = vmatpush.msra.mxu0 %v854
          %1609 = vmatpush.msra.mxu0 %v852
          %1610 = vmatpush.msra.mxu0 %v850
          %1611 = vmatpush.msra.mxu0 %v848
          %1612 = vmatpush.msra.mxu0 %v846
          %1613 = vmatpush.msra.mxu0 %v844
          %1614 = vmatpush.msra.mxu0 %v842
          %1615 = vmatpush.msra.mxu0 %v840
          %1616 = vmatpush.msra.mxu0 %v838
          %1617 = vmatpush.msra.mxu0 %v836
          %1618 = vmatpush.msra.mxu0 %v834
          %1619 = vmatpush.msra.mxu0 %v832
          %1620 = vmatpush.msra.mxu0 %v830
          %1621 = vmatpush.msra.mxu0 %v828
          %1622 = vmatpush.msra.mxu0 %v826
          %1623 = vmatmul.f32.gmra.mxu0 %v685
          %v1624 = vpop.f32.mrf.mxu0
          %v1625 = vadd.f32 %v1084, %v1624
          %1626 = vmatmul.f32.gmra.mxu0 %v693
          %v1627 = vpop.f32.mrf.mxu0
          %v1628 = vadd.f32 %v1084, %v1627
          %1629 = vmatmul.f32.gmra.mxu0 %v701
          %v1630 = vpop.f32.mrf.mxu0
          %v1631 = vadd.f32 %v1084, %v1630
          %1632 = vmatmul.f32.gmra.mxu0 %v709
          %v1633 = vpop.f32.mrf.mxu0
          %v1634 = vadd.f32 %v1084, %v1633
          %1635 = vmatmul.f32.gmra.mxu0 %v717
          %v1636 = vpop.f32.mrf.mxu0
          %v1637 = vadd.f32 %v1084, %v1636
          %1638 = vmatmul.f32.gmra.mxu0 %v725
          %v1639 = vpop.f32.mrf.mxu0
          %v1640 = vadd.f32 %v1084, %v1639
          %1641 = vmatmul.f32.gmra.mxu0 %v733
          %v1642 = vpop.f32.mrf.mxu0
          %v1643 = vadd.f32 %v1084, %v1642
          %1644 = vmatmul.f32.gmra.mxu0 %v741
          %v1645 = vpop.f32.mrf.mxu0
          %v1646 = vadd.f32 %v1084, %v1645
          %1647 = vmatmul.f32.gmra.mxu0 %v749
          %v1648 = vpop.f32.mrf.mxu0
          %v1649 = vadd.f32 %v1084, %v1648
          %1650 = vmatmul.f32.gmra.mxu0 %v757
          %v1651 = vpop.f32.mrf.mxu0
          %v1652 = vadd.f32 %v1084, %v1651
          %1653 = vmatmul.f32.gmra.mxu0 %v765
          %v1654 = vpop.f32.mrf.mxu0
          %v1655 = vadd.f32 %v1084, %v1654
          %1656 = vmatmul.f32.gmra.mxu0 %v773
          %v1657 = vpop.f32.mrf.mxu0
          %v1658 = vadd.f32 %v1084, %v1657
          %1659 = vmatmul.f32.gmra.mxu0 %v781
          %v1660 = vpop.f32.mrf.mxu0
          %v1661 = vadd.f32 %v1084, %v1660
          %1662 = vmatmul.f32.gmra.mxu0 %v789
          %v1663 = vpop.f32.mrf.mxu0
          %v1664 = vadd.f32 %v1084, %v1663
          %1665 = vmatmul.f32.gmra.mxu0 %v797
          %v1666 = vpop.f32.mrf.mxu0
          %v1667 = vadd.f32 %v1084, %v1666
          %1668 = vmatmul.f32.gmra.mxu0 %v805
          %v1669 = vpop.f32.mrf.mxu0
          %v1670 = vadd.f32 %v1084, %v1669
          %1671 = vdwg.mxu0
          %1672 = vmatpush.msra.mxu0 %v888
          %1673 = vmatpush.msra.mxu0 %v886
          %1674 = vmatpush.msra.mxu0 %v884
          %1675 = vmatpush.msra.mxu0 %v882
          %1676 = vmatpush.msra.mxu0 %v880
          %1677 = vmatpush.msra.mxu0 %v878
          %1678 = vmatpush.msra.mxu0 %v876
          %1679 = vmatpush.msra.mxu0 %v874
          %1680 = vmatpush.msra.mxu0 %v872
          %1681 = vmatpush.msra.mxu0 %v870
          %1682 = vmatpush.msra.mxu0 %v868
          %1683 = vmatpush.msra.mxu0 %v866
          %1684 = vmatpush.msra.mxu0 %v864
          %1685 = vmatpush.msra.mxu0 %v862
          %1686 = vmatpush.msra.mxu0 %v860
          %1687 = vmatpush.msra.mxu0 %v858
          %1688 = vmatmul.f32.gmra.mxu0 %v686
          %v1689 = vpop.f32.mrf.mxu0
          %v1690 = vadd.f32 %v1625, %v1689
          %1691 = vmatmul.f32.gmra.mxu0 %v694
          %v1692 = vpop.f32.mrf.mxu0
          %v1693 = vadd.f32 %v1628, %v1692
          %1694 = vmatmul.f32.gmra.mxu0 %v702
          %v1695 = vpop.f32.mrf.mxu0
          %v1696 = vadd.f32 %v1631, %v1695
          %1697 = vmatmul.f32.gmra.mxu0 %v710
          %v1698 = vpop.f32.mrf.mxu0
          %v1699 = vadd.f32 %v1634, %v1698
          %1700 = vmatmul.f32.gmra.mxu0 %v718
          %v1701 = vpop.f32.mrf.mxu0
          %v1702 = vadd.f32 %v1637, %v1701
          %1703 = vmatmul.f32.gmra.mxu0 %v726
          %v1704 = vpop.f32.mrf.mxu0
          %v1705 = vadd.f32 %v1640, %v1704
          %1706 = vmatmul.f32.gmra.mxu0 %v734
          %v1707 = vpop.f32.mrf.mxu0
          %v1708 = vadd.f32 %v1643, %v1707
          %1709 = vmatmul.f32.gmra.mxu0 %v742
          %v1710 = vpop.f32.mrf.mxu0
          %v1711 = vadd.f32 %v1646, %v1710
          %1712 = vmatmul.f32.gmra.mxu0 %v750
          %v1713 = vpop.f32.mrf.mxu0
          %v1714 = vadd.f32 %v1649, %v1713
          %1715 = vmatmul.f32.gmra.mxu0 %v758
          %v1716 = vpop.f32.mrf.mxu0
          %v1717 = vadd.f32 %v1652, %v1716
          %1718 = vmatmul.f32.gmra.mxu0 %v766
          %v1719 = vpop.f32.mrf.mxu0
          %v1720 = vadd.f32 %v1655, %v1719
          %1721 = vmatmul.f32.gmra.mxu0 %v774
          %v1722 = vpop.f32.mrf.mxu0
          %v1723 = vadd.f32 %v1658, %v1722
          %1724 = vmatmul.f32.gmra.mxu0 %v782
          %v1725 = vpop.f32.mrf.mxu0
          %v1726 = vadd.f32 %v1661, %v1725
          %1727 = vmatmul.f32.gmra.mxu0 %v790
          %v1728 = vpop.f32.mrf.mxu0
          %v1729 = vadd.f32 %v1664, %v1728
          %1730 = vmatmul.f32.gmra.mxu0 %v798
          %v1731 = vpop.f32.mrf.mxu0
          %v1732 = vadd.f32 %v1667, %v1731
          %1733 = vmatmul.f32.gmra.mxu0 %v806
          %v1734 = vpop.f32.mrf.mxu0
          %v1735 = vadd.f32 %v1670, %v1734
          %1736 = vdwg.mxu0
          %1737 = vmatpush.msra.mxu0 %v920
          %1738 = vmatpush.msra.mxu0 %v918
          %1739 = vmatpush.msra.mxu0 %v916
          %1740 = vmatpush.msra.mxu0 %v914
          %1741 = vmatpush.msra.mxu0 %v912
          %1742 = vmatpush.msra.mxu0 %v910
          %1743 = vmatpush.msra.mxu0 %v908
          %1744 = vmatpush.msra.mxu0 %v906
          %1745 = vmatpush.msra.mxu0 %v904
          %1746 = vmatpush.msra.mxu0 %v902
          %1747 = vmatpush.msra.mxu0 %v900
          %1748 = vmatpush.msra.mxu0 %v898
          %1749 = vmatpush.msra.mxu0 %v896
          %1750 = vmatpush.msra.mxu0 %v894
          %1751 = vmatpush.msra.mxu0 %v892
          %1752 = vmatpush.msra.mxu0 %v890
          %1753 = vmatmul.f32.gmra.mxu0 %v687
          %v1754 = vpop.f32.mrf.mxu0
          %v1755 = vadd.f32 %v1690, %v1754
          %1756 = vmatmul.f32.gmra.mxu0 %v695
          %v1757 = vpop.f32.mrf.mxu0
          %v1758 = vadd.f32 %v1693, %v1757
          %1759 = vmatmul.f32.gmra.mxu0 %v703
          %v1760 = vpop.f32.mrf.mxu0
          %v1761 = vadd.f32 %v1696, %v1760
          %1762 = vmatmul.f32.gmra.mxu0 %v711
          %v1763 = vpop.f32.mrf.mxu0
          %v1764 = vadd.f32 %v1699, %v1763
          %1765 = vmatmul.f32.gmra.mxu0 %v719
          %v1766 = vpop.f32.mrf.mxu0
          %v1767 = vadd.f32 %v1702, %v1766
          %1768 = vmatmul.f32.gmra.mxu0 %v727
          %v1769 = vpop.f32.mrf.mxu0
          %v1770 = vadd.f32 %v1705, %v1769
          %1771 = vmatmul.f32.gmra.mxu0 %v735
          %v1772 = vpop.f32.mrf.mxu0
          %v1773 = vadd.f32 %v1708, %v1772
          %1774 = vmatmul.f32.gmra.mxu0 %v743
          %v1775 = vpop.f32.mrf.mxu0
          %v1776 = vadd.f32 %v1711, %v1775
          %1777 = vmatmul.f32.gmra.mxu0 %v751
          %v1778 = vpop.f32.mrf.mxu0
          %v1779 = vadd.f32 %v1714, %v1778
          %1780 = vmatmul.f32.gmra.mxu0 %v759
          %v1781 = vpop.f32.mrf.mxu0
          %v1782 = vadd.f32 %v1717, %v1781
          %1783 = vmatmul.f32.gmra.mxu0 %v767
          %v1784 = vpop.f32.mrf.mxu0
          %v1785 = vadd.f32 %v1720, %v1784
          %1786 = vmatmul.f32.gmra.mxu0 %v775
          %v1787 = vpop.f32.mrf.mxu0
          %v1788 = vadd.f32 %v1723, %v1787
          %1789 = vmatmul.f32.gmra.mxu0 %v783
          %v1790 = vpop.f32.mrf.mxu0
          %v1791 = vadd.f32 %v1726, %v1790
          %1792 = vmatmul.f32.gmra.mxu0 %v791
          %v1793 = vpop.f32.mrf.mxu0
          %v1794 = vadd.f32 %v1729, %v1793
          %1795 = vmatmul.f32.gmra.mxu0 %v799
          %v1796 = vpop.f32.mrf.mxu0
          %v1797 = vadd.f32 %v1732, %v1796
          %1798 = vmatmul.f32.gmra.mxu0 %v807
          %v1799 = vpop.f32.mrf.mxu0
          %v1800 = vadd.f32 %v1735, %v1799
          %1801 = vdwg.mxu0
          %1802 = vmatpush.msra.mxu0 %v952
          %1803 = vmatpush.msra.mxu0 %v950
          %1804 = vmatpush.msra.mxu0 %v948
          %1805 = vmatpush.msra.mxu0 %v946
          %1806 = vmatpush.msra.mxu0 %v944
          %1807 = vmatpush.msra.mxu0 %v942
          %1808 = vmatpush.msra.mxu0 %v940
          %1809 = vmatpush.msra.mxu0 %v938
          %1810 = vmatpush.msra.mxu0 %v936
          %1811 = vmatpush.msra.mxu0 %v934
          %1812 = vmatpush.msra.mxu0 %v932
          %1813 = vmatpush.msra.mxu0 %v930
          %1814 = vmatpush.msra.mxu0 %v928
          %1815 = vmatpush.msra.mxu0 %v926
          %1816 = vmatpush.msra.mxu0 %v924
          %1817 = vmatpush.msra.mxu0 %v922
          %1818 = vmatmul.f32.gmra.mxu0 %v688
          %v1819 = vpop.f32.mrf.mxu0
          %v1820 = vadd.f32 %v1755, %v1819
          %1821 = vmatmul.f32.gmra.mxu0 %v696
          %v1822 = vpop.f32.mrf.mxu0
          %v1823 = vadd.f32 %v1758, %v1822
          %1824 = vmatmul.f32.gmra.mxu0 %v704
          %v1825 = vpop.f32.mrf.mxu0
          %v1826 = vadd.f32 %v1761, %v1825
          %1827 = vmatmul.f32.gmra.mxu0 %v712
          %v1828 = vpop.f32.mrf.mxu0
          %v1829 = vadd.f32 %v1764, %v1828
          %1830 = vmatmul.f32.gmra.mxu0 %v720
          %v1831 = vpop.f32.mrf.mxu0
          %v1832 = vadd.f32 %v1767, %v1831
          %1833 = vmatmul.f32.gmra.mxu0 %v728
          %v1834 = vpop.f32.mrf.mxu0
          %v1835 = vadd.f32 %v1770, %v1834
          %1836 = vmatmul.f32.gmra.mxu0 %v736
          %v1837 = vpop.f32.mrf.mxu0
          %v1838 = vadd.f32 %v1773, %v1837
          %1839 = vmatmul.f32.gmra.mxu0 %v744
          %v1840 = vpop.f32.mrf.mxu0
          %v1841 = vadd.f32 %v1776, %v1840
          %1842 = vmatmul.f32.gmra.mxu0 %v752
          %v1843 = vpop.f32.mrf.mxu0
          %v1844 = vadd.f32 %v1779, %v1843
          %1845 = vmatmul.f32.gmra.mxu0 %v760
          %v1846 = vpop.f32.mrf.mxu0
          %v1847 = vadd.f32 %v1782, %v1846
          %1848 = vmatmul.f32.gmra.mxu0 %v768
          %v1849 = vpop.f32.mrf.mxu0
          %v1850 = vadd.f32 %v1785, %v1849
          %1851 = vmatmul.f32.gmra.mxu0 %v776
          %v1852 = vpop.f32.mrf.mxu0
          %v1853 = vadd.f32 %v1788, %v1852
          %1854 = vmatmul.f32.gmra.mxu0 %v784
          %v1855 = vpop.f32.mrf.mxu0
          %v1856 = vadd.f32 %v1791, %v1855
          %1857 = vmatmul.f32.gmra.mxu0 %v792
          %v1858 = vpop.f32.mrf.mxu0
          %v1859 = vadd.f32 %v1794, %v1858
          %1860 = vmatmul.f32.gmra.mxu0 %v800
          %v1861 = vpop.f32.mrf.mxu0
          %v1862 = vadd.f32 %v1797, %v1861
          %1863 = vmatmul.f32.gmra.mxu0 %v808
          %v1864 = vpop.f32.mrf.mxu0
          %v1865 = vadd.f32 %v1800, %v1864
          %1866 = vdwg.mxu0
          %1867 = vmatpush.msra.mxu0 %v984
          %1868 = vmatpush.msra.mxu0 %v982
          %1869 = vmatpush.msra.mxu0 %v980
          %1870 = vmatpush.msra.mxu0 %v978
          %1871 = vmatpush.msra.mxu0 %v976
          %1872 = vmatpush.msra.mxu0 %v974
          %1873 = vmatpush.msra.mxu0 %v972
          %1874 = vmatpush.msra.mxu0 %v970
          %1875 = vmatpush.msra.mxu0 %v968
          %1876 = vmatpush.msra.mxu0 %v966
          %1877 = vmatpush.msra.mxu0 %v964
          %1878 = vmatpush.msra.mxu0 %v962
          %1879 = vmatpush.msra.mxu0 %v960
          %1880 = vmatpush.msra.mxu0 %v958
          %1881 = vmatpush.msra.mxu0 %v956
          %1882 = vmatpush.msra.mxu0 %v954
          %1883 = vmatmul.f32.gmra.mxu0 %v689
          %v1884 = vpop.f32.mrf.mxu0
          %v1885 = vadd.f32 %v1820, %v1884
          %1886 = vmatmul.f32.gmra.mxu0 %v697
          %v1887 = vpop.f32.mrf.mxu0
          %v1888 = vadd.f32 %v1823, %v1887
          %1889 = vmatmul.f32.gmra.mxu0 %v705
          %v1890 = vpop.f32.mrf.mxu0
          %v1891 = vadd.f32 %v1826, %v1890
          %1892 = vmatmul.f32.gmra.mxu0 %v713
          %v1893 = vpop.f32.mrf.mxu0
          %v1894 = vadd.f32 %v1829, %v1893
          %1895 = vmatmul.f32.gmra.mxu0 %v721
          %v1896 = vpop.f32.mrf.mxu0
          %v1897 = vadd.f32 %v1832, %v1896
          %1898 = vmatmul.f32.gmra.mxu0 %v729
          %v1899 = vpop.f32.mrf.mxu0
          %v1900 = vadd.f32 %v1835, %v1899
          %1901 = vmatmul.f32.gmra.mxu0 %v737
          %v1902 = vpop.f32.mrf.mxu0
          %v1903 = vadd.f32 %v1838, %v1902
          %1904 = vmatmul.f32.gmra.mxu0 %v745
          %v1905 = vpop.f32.mrf.mxu0
          %v1906 = vadd.f32 %v1841, %v1905
          %1907 = vmatmul.f32.gmra.mxu0 %v753
          %v1908 = vpop.f32.mrf.mxu0
          %v1909 = vadd.f32 %v1844, %v1908
          %1910 = vmatmul.f32.gmra.mxu0 %v761
          %v1911 = vpop.f32.mrf.mxu0
          %v1912 = vadd.f32 %v1847, %v1911
          %1913 = vmatmul.f32.gmra.mxu0 %v769
          %v1914 = vpop.f32.mrf.mxu0
          %v1915 = vadd.f32 %v1850, %v1914
          %1916 = vmatmul.f32.gmra.mxu0 %v777
          %v1917 = vpop.f32.mrf.mxu0
          %v1918 = vadd.f32 %v1853, %v1917
          %1919 = vmatmul.f32.gmra.mxu0 %v785
          %v1920 = vpop.f32.mrf.mxu0
          %v1921 = vadd.f32 %v1856, %v1920
          %1922 = vmatmul.f32.gmra.mxu0 %v793
          %v1923 = vpop.f32.mrf.mxu0
          %v1924 = vadd.f32 %v1859, %v1923
          %1925 = vmatmul.f32.gmra.mxu0 %v801
          %v1926 = vpop.f32.mrf.mxu0
          %v1927 = vadd.f32 %v1862, %v1926
          %1928 = vmatmul.f32.gmra.mxu0 %v809
          %v1929 = vpop.f32.mrf.mxu0
          %v1930 = vadd.f32 %v1865, %v1929
          %1931 = vdwg.mxu0
          %1932 = vmatpush.msra.mxu0 %v1016
          %1933 = vmatpush.msra.mxu0 %v1014
          %1934 = vmatpush.msra.mxu0 %v1012
          %1935 = vmatpush.msra.mxu0 %v1010
          %1936 = vmatpush.msra.mxu0 %v1008
          %1937 = vmatpush.msra.mxu0 %v1006
          %1938 = vmatpush.msra.mxu0 %v1004
          %1939 = vmatpush.msra.mxu0 %v1002
          %1940 = vmatpush.msra.mxu0 %v1000
          %1941 = vmatpush.msra.mxu0 %v998
          %1942 = vmatpush.msra.mxu0 %v996
          %1943 = vmatpush.msra.mxu0 %v994
          %1944 = vmatpush.msra.mxu0 %v992
          %1945 = vmatpush.msra.mxu0 %v990
          %1946 = vmatpush.msra.mxu0 %v988
          %1947 = vmatpush.msra.mxu0 %v986
          %1948 = vmatmul.f32.gmra.mxu0 %v690
          %v1949 = vpop.f32.mrf.mxu0
          %v1950 = vadd.f32 %v1885, %v1949
          %1951 = vmatmul.f32.gmra.mxu0 %v698
          %v1952 = vpop.f32.mrf.mxu0
          %v1953 = vadd.f32 %v1888, %v1952
          %1954 = vmatmul.f32.gmra.mxu0 %v706
          %v1955 = vpop.f32.mrf.mxu0
          %v1956 = vadd.f32 %v1891, %v1955
          %1957 = vmatmul.f32.gmra.mxu0 %v714
          %v1958 = vpop.f32.mrf.mxu0
          %v1959 = vadd.f32 %v1894, %v1958
          %1960 = vmatmul.f32.gmra.mxu0 %v722
          %v1961 = vpop.f32.mrf.mxu0
          %v1962 = vadd.f32 %v1897, %v1961
          %1963 = vmatmul.f32.gmra.mxu0 %v730
          %v1964 = vpop.f32.mrf.mxu0
          %v1965 = vadd.f32 %v1900, %v1964
          %1966 = vmatmul.f32.gmra.mxu0 %v738
          %v1967 = vpop.f32.mrf.mxu0
          %v1968 = vadd.f32 %v1903, %v1967
          %1969 = vmatmul.f32.gmra.mxu0 %v746
          %v1970 = vpop.f32.mrf.mxu0
          %v1971 = vadd.f32 %v1906, %v1970
          %1972 = vmatmul.f32.gmra.mxu0 %v754
          %v1973 = vpop.f32.mrf.mxu0
          %v1974 = vadd.f32 %v1909, %v1973
          %1975 = vmatmul.f32.gmra.mxu0 %v762
          %v1976 = vpop.f32.mrf.mxu0
          %v1977 = vadd.f32 %v1912, %v1976
          %1978 = vmatmul.f32.gmra.mxu0 %v770
          %v1979 = vpop.f32.mrf.mxu0
          %v1980 = vadd.f32 %v1915, %v1979
          %1981 = vmatmul.f32.gmra.mxu0 %v778
          %v1982 = vpop.f32.mrf.mxu0
          %v1983 = vadd.f32 %v1918, %v1982
          %1984 = vmatmul.f32.gmra.mxu0 %v786
          %v1985 = vpop.f32.mrf.mxu0
          %v1986 = vadd.f32 %v1921, %v1985
          %1987 = vmatmul.f32.gmra.mxu0 %v794
          %v1988 = vpop.f32.mrf.mxu0
          %v1989 = vadd.f32 %v1924, %v1988
          %1990 = vmatmul.f32.gmra.mxu0 %v802
          %v1991 = vpop.f32.mrf.mxu0
          %v1992 = vadd.f32 %v1927, %v1991
          %1993 = vmatmul.f32.gmra.mxu0 %v810
          %v1994 = vpop.f32.mrf.mxu0
          %v1995 = vadd.f32 %v1930, %v1994
          %1996 = vdwg.mxu0
          %1997 = vmatpush.msra.mxu0 %v1048
          %1998 = vmatpush.msra.mxu0 %v1046
          %1999 = vmatpush.msra.mxu0 %v1044
          %2000 = vmatpush.msra.mxu0 %v1042
          %2001 = vmatpush.msra.mxu0 %v1040
          %2002 = vmatpush.msra.mxu0 %v1038
          %2003 = vmatpush.msra.mxu0 %v1036
          %2004 = vmatpush.msra.mxu0 %v1034
          %2005 = vmatpush.msra.mxu0 %v1032
          %2006 = vmatpush.msra.mxu0 %v1030
          %2007 = vmatpush.msra.mxu0 %v1028
          %2008 = vmatpush.msra.mxu0 %v1026
          %2009 = vmatpush.msra.mxu0 %v1024
          %2010 = vmatpush.msra.mxu0 %v1022
          %2011 = vmatpush.msra.mxu0 %v1020
          %2012 = vmatpush.msra.mxu0 %v1018
          %2013 = vmatmul.f32.gmra.mxu0 %v691
          %v2014 = vpop.f32.mrf.mxu0
          %v2015 = vadd.f32 %v1950, %v2014
          %2016 = vmatmul.f32.gmra.mxu0 %v699
          %v2017 = vpop.f32.mrf.mxu0
          %v2018 = vadd.f32 %v1953, %v2017
          %2019 = vmatmul.f32.gmra.mxu0 %v707
          %v2020 = vpop.f32.mrf.mxu0
          %v2021 = vadd.f32 %v1956, %v2020
          %2022 = vmatmul.f32.gmra.mxu0 %v715
          %v2023 = vpop.f32.mrf.mxu0
          %v2024 = vadd.f32 %v1959, %v2023
          %2025 = vmatmul.f32.gmra.mxu0 %v723
          %v2026 = vpop.f32.mrf.mxu0
          %v2027 = vadd.f32 %v1962, %v2026
          %2028 = vmatmul.f32.gmra.mxu0 %v731
          %v2029 = vpop.f32.mrf.mxu0
          %v2030 = vadd.f32 %v1965, %v2029
          %2031 = vmatmul.f32.gmra.mxu0 %v739
          %v2032 = vpop.f32.mrf.mxu0
          %v2033 = vadd.f32 %v1968, %v2032
          %2034 = vmatmul.f32.gmra.mxu0 %v747
          %v2035 = vpop.f32.mrf.mxu0
          %v2036 = vadd.f32 %v1971, %v2035
          %2037 = vmatmul.f32.gmra.mxu0 %v755
          %v2038 = vpop.f32.mrf.mxu0
          %v2039 = vadd.f32 %v1974, %v2038
          %2040 = vmatmul.f32.gmra.mxu0 %v763
          %v2041 = vpop.f32.mrf.mxu0
          %v2042 = vadd.f32 %v1977, %v2041
          %2043 = vmatmul.f32.gmra.mxu0 %v771
          %v2044 = vpop.f32.mrf.mxu0
          %v2045 = vadd.f32 %v1980, %v2044
          %2046 = vmatmul.f32.gmra.mxu0 %v779
          %v2047 = vpop.f32.mrf.mxu0
          %v2048 = vadd.f32 %v1983, %v2047
          %2049 = vmatmul.f32.gmra.mxu0 %v787
          %v2050 = vpop.f32.mrf.mxu0
          %v2051 = vadd.f32 %v1986, %v2050
          %2052 = vmatmul.f32.gmra.mxu0 %v795
          %v2053 = vpop.f32.mrf.mxu0
          %v2054 = vadd.f32 %v1989, %v2053
          %2055 = vmatmul.f32.gmra.mxu0 %v803
          %v2056 = vpop.f32.mrf.mxu0
          %v2057 = vadd.f32 %v1992, %v2056
          %2058 = vmatmul.f32.gmra.mxu0 %v811
          %v2059 = vpop.f32.mrf.mxu0
          %v2060 = vadd.f32 %v1995, %v2059
          %2061 = vdwg.mxu0
          %2062 = vmatpush.msra.mxu0 %v1080
          %2063 = vmatpush.msra.mxu0 %v1078
          %2064 = vmatpush.msra.mxu0 %v1076
          %2065 = vmatpush.msra.mxu0 %v1074
          %2066 = vmatpush.msra.mxu0 %v1072
          %2067 = vmatpush.msra.mxu0 %v1070
          %2068 = vmatpush.msra.mxu0 %v1068
          %2069 = vmatpush.msra.mxu0 %v1066
          %2070 = vmatpush.msra.mxu0 %v1064
          %2071 = vmatpush.msra.mxu0 %v1062
          %2072 = vmatpush.msra.mxu0 %v1060
          %2073 = vmatpush.msra.mxu0 %v1058
          %2074 = vmatpush.msra.mxu0 %v1056
          %2075 = vmatpush.msra.mxu0 %v1054
          %2076 = vmatpush.msra.mxu0 %v1052
          %2077 = vmatpush.msra.mxu0 %v1050
          %2078 = vmatmul.f32.gmra.mxu0 %v692
          %v2079 = vpop.f32.mrf.mxu0
          %v2080 = vadd.f32 %v2015, %v2079
          %2081 = vmatmul.f32.gmra.mxu0 %v700
          %v2082 = vpop.f32.mrf.mxu0
          %v2083 = vadd.f32 %v2018, %v2082
          %2084 = vmatmul.f32.gmra.mxu0 %v708
          %v2085 = vpop.f32.mrf.mxu0
          %v2086 = vadd.f32 %v2021, %v2085
          %2087 = vmatmul.f32.gmra.mxu0 %v716
          %v2088 = vpop.f32.mrf.mxu0
          %v2089 = vadd.f32 %v2024, %v2088
          %2090 = vmatmul.f32.gmra.mxu0 %v724
          %v2091 = vpop.f32.mrf.mxu0
          %v2092 = vadd.f32 %v2027, %v2091
          %2093 = vmatmul.f32.gmra.mxu0 %v732
          %v2094 = vpop.f32.mrf.mxu0
          %v2095 = vadd.f32 %v2030, %v2094
          %2096 = vmatmul.f32.gmra.mxu0 %v740
          %v2097 = vpop.f32.mrf.mxu0
          %v2098 = vadd.f32 %v2033, %v2097
          %2099 = vmatmul.f32.gmra.mxu0 %v748
          %v2100 = vpop.f32.mrf.mxu0
          %v2101 = vadd.f32 %v2036, %v2100
          %2102 = vmatmul.f32.gmra.mxu0 %v756
          %v2103 = vpop.f32.mrf.mxu0
          %v2104 = vadd.f32 %v2039, %v2103
          %2105 = vmatmul.f32.gmra.mxu0 %v764
          %v2106 = vpop.f32.mrf.mxu0
          %v2107 = vadd.f32 %v2042, %v2106
          %2108 = vmatmul.f32.gmra.mxu0 %v772
          %v2109 = vpop.f32.mrf.mxu0
          %v2110 = vadd.f32 %v2045, %v2109
          %2111 = vmatmul.f32.gmra.mxu0 %v780
          %v2112 = vpop.f32.mrf.mxu0
          %v2113 = vadd.f32 %v2048, %v2112
          %2114 = vmatmul.f32.gmra.mxu0 %v788
          %v2115 = vpop.f32.mrf.mxu0
          %v2116 = vadd.f32 %v2051, %v2115
          %2117 = vmatmul.f32.gmra.mxu0 %v796
          %v2118 = vpop.f32.mrf.mxu0
          %v2119 = vadd.f32 %v2054, %v2118
          %2120 = vmatmul.f32.gmra.mxu0 %v804
          %v2121 = vpop.f32.mrf.mxu0
          %v2122 = vadd.f32 %v2057, %v2121
          %2123 = vmatmul.f32.gmra.mxu0 %v812
          %v2124 = vpop.f32.mrf.mxu0
          %v2125 = vadd.f32 %v2060, %v2124
          %2126 = vdwg.mxu0
          %v2127 = vmax.f32 %v1560, 0.0
          %v2128 = vmax.f32 %v1563, 0.0
          %v2129 = vmax.f32 %v1566, 0.0
          %v2130 = vmax.f32 %v1569, 0.0
          %v2131 = vmax.f32 %v1572, 0.0
          %v2132 = vmax.f32 %v1575, 0.0
          %v2133 = vmax.f32 %v1578, 0.0
          %v2134 = vmax.f32 %v1581, 0.0
          %v2135 = vmax.f32 %v1584, 0.0
          %v2136 = vmax.f32 %v1587, 0.0
          %v2137 = vmax.f32 %v1590, 0.0
          %v2138 = vmax.f32 %v1593, 0.0
          %v2139 = vmax.f32 %v1596, 0.0
          %v2140 = vmax.f32 %v1599, 0.0
          %v2141 = vmax.f32 %v1602, 0.0
          %v2142 = vmax.f32 %v1605, 0.0
          %v2143 = vld [vmem:[%s3] sm:$0xff]
          %v2144 = vld [vmem:[%s3 + $0x8] sm:$0xff]
          %v2145 = vld [vmem:[%s3 + $0x10] sm:$0xff]
          %v2146 = vld [vmem:[%s3 + $0x18] sm:$0xff]
          %v2147 = vld [vmem:[%s3 + $0x20] sm:$0xff]
          %v2148 = vld [vmem:[%s3 + $0x28] sm:$0xff]
          %v2149 = vld [vmem:[%s3 + $0x30] sm:$0xff]
          %v2150 = vld [vmem:[%s3 + $0x38] sm:$0xff]
          %v2151 = vld [vmem:[%s3 + $0x40] sm:$0xff]
          %v2152 = vld [vmem:[%s3 + $0x48] sm:$0xff]
          %v2153 = vld [vmem:[%s3 + $0x50] sm:$0xff]
          %v2154 = vld [vmem:[%s3 + $0x58] sm:$0xff]
          %v2155 = vld [vmem:[%s3 + $0x60] sm:$0xff]
          %v2156 = vld [vmem:[%s3 + $0x68] sm:$0xff]
          %v2157 = vld [vmem:[%s3 + $0x70] sm:$0xff]
          %v2158 = vld [vmem:[%s3 + $0x78] sm:$0xff]
          %v2159 = vld [vmem:[%s4] sm:$0x1]
          %v2161 = vperm.slane %v2159, 0
          %2163 = vmatpush.msra.mxu0 %v2158
          %2164 = vmatpush.msra.mxu0 %v2157
          %2165 = vmatpush.msra.mxu0 %v2156
          %2166 = vmatpush.msra.mxu0 %v2155
          %2167 = vmatpush.msra.mxu0 %v2154
          %2168 = vmatpush.msra.mxu0 %v2153
          %2169 = vmatpush.msra.mxu0 %v2152
          %2170 = vmatpush.msra.mxu0 %v2151
          %2171 = vmatpush.msra.mxu0 %v2150
          %2172 = vmatpush.msra.mxu0 %v2149
          %2173 = vmatpush.msra.mxu0 %v2148
          %2174 = vmatpush.msra.mxu0 %v2147
          %2175 = vmatpush.msra.mxu0 %v2146
          %2176 = vmatpush.msra.mxu0 %v2145
          %2177 = vmatpush.msra.mxu0 %v2144
          %2178 = vmatpush.msra.mxu0 %v2143
          %2179 = vmatmul.f32.gmra.mxu0 %v2127
          %v2180 = vpop.f32.mrf.mxu0
          %v2181 = vadd.f32 %v2161, %v2180
          %2182 = vmatmul.f32.gmra.mxu0 %v2128
          %v2183 = vpop.f32.mrf.mxu0
          %v2184 = vadd.f32 %v2161, %v2183
          %2185 = vmatmul.f32.gmra.mxu0 %v2129
          %v2186 = vpop.f32.mrf.mxu0
          %v2187 = vadd.f32 %v2161, %v2186
          %2188 = vmatmul.f32.gmra.mxu0 %v2130
          %v2189 = vpop.f32.mrf.mxu0
          %v2190 = vadd.f32 %v2161, %v2189
          %2191 = vmatmul.f32.gmra.mxu0 %v2131
          %v2192 = vpop.f32.mrf.mxu0
          %v2193 = vadd.f32 %v2161, %v2192
          %2194 = vmatmul.f32.gmra.mxu0 %v2132
          %v2195 = vpop.f32.mrf.mxu0
          %v2196 = vadd.f32 %v2161, %v2195
          %2197 = vmatmul.f32.gmra.mxu0 %v2133
          %v2198 = vpop.f32.mrf.mxu0
          %v2199 = vadd.f32 %v2161, %v2198
          %2200 = vmatmul.f32.gmra.mxu0 %v2134
          %v2201 = vpop.f32.mrf.mxu0
          %v2202 = vadd.f32 %v2161, %v2201
          %2203 = vmatmul.f32.gmra.mxu0 %v2135
          %v2204 = vpop.f32.mrf.mxu0
          %v2205 = vadd.f32 %v2161, %v2204
          %2206 = vmatmul.f32.gmra.mxu0 %v2136
          %v2207 = vpop.f32.mrf.mxu0
          %v2208 = vadd.f32 %v2161, %v2207
          %2209 = vmatmul.f32.gmra.mxu0 %v2137
          %v2210 = vpop.f32.mrf.mxu0
          %v2211 = vadd.f32 %v2161, %v2210
          %2212 = vmatmul.f32.gmra.mxu0 %v2138
          %v2213 = vpop.f32.mrf.mxu0
          %v2214 = vadd.f32 %v2161, %v2213
          %2215 = vmatmul.f32.gmra.mxu0 %v2139
          %v2216 = vpop.f32.mrf.mxu0
          %v2217 = vadd.f32 %v2161, %v2216
          %2218 = vmatmul.f32.gmra.mxu0 %v2140
          %v2219 = vpop.f32.mrf.mxu0
          %v2220 = vadd.f32 %v2161, %v2219
          %2221 = vmatmul.f32.gmra.mxu0 %v2141
          %v2222 = vpop.f32.mrf.mxu0
          %v2223 = vadd.f32 %v2161, %v2222
          %2224 = vmatmul.f32.gmra.mxu0 %v2142
          %v2225 = vpop.f32.mrf.mxu0
          %v2226 = vadd.f32 %v2161, %v2225
          %2227 = vdwg.mxu0
          %v2228 = vtanh.pop %v2181
          %v2229 = vtanh.pop %v2184
          %v2230 = vtanh.pop %v2187
          %v2231 = vtanh.pop %v2190
          %v2232 = vtanh.pop %v2193
          %v2233 = vtanh.pop %v2196
          %v2234 = vtanh.pop %v2199
          %v2235 = vtanh.pop %v2202
          %v2236 = vtanh.pop %v2205
          %v2237 = vtanh.pop %v2208
          %v2238 = vtanh.pop %v2211
          %v2239 = vtanh.pop %v2214
          %v2240 = vtanh.pop %v2217
          %v2241 = vtanh.pop %v2220
          %v2242 = vtanh.pop %v2223
          %v2243 = vtanh.pop %v2226
          %s2244 = scalar_lea.vmem %s16, %s684
          %vm2245 = vcmask 31744
          %2246 = vst.msk [vmem:[%s2244] sm:$0xff] %vm2245, %v2080
          %2247 = vst.msk [vmem:[%s2244 + $0x8] sm:$0xff] %vm2245, %v2083
          %2248 = vst.msk [vmem:[%s2244 + $0x10] sm:$0xff] %vm2245, %v2086
          %2249 = vst.msk [vmem:[%s2244 + $0x18] sm:$0xff] %vm2245, %v2089
          %2250 = vst.msk [vmem:[%s2244 + $0x20] sm:$0xff] %vm2245, %v2092
          %2251 = vst.msk [vmem:[%s2244 + $0x28] sm:$0xff] %vm2245, %v2095
          %2252 = vst.msk [vmem:[%s2244 + $0x30] sm:$0xff] %vm2245, %v2098
          %2253 = vst.msk [vmem:[%s2244 + $0x38] sm:$0xff] %vm2245, %v2101
          %2254 = vst.msk [vmem:[%s2244 + $0x40] sm:$0xff] %vm2245, %v2104
          %2255 = vst.msk [vmem:[%s2244 + $0x48] sm:$0xff] %vm2245, %v2107
          %2256 = vst.msk [vmem:[%s2244 + $0x50] sm:$0xff] %vm2245, %v2110
          %2257 = vst.msk [vmem:[%s2244 + $0x58] sm:$0xff] %vm2245, %v2113
          %2258 = vst.msk [vmem:[%s2244 + $0x60] sm:$0xff] %vm2245, %v2116
          %2259 = vst.msk [vmem:[%s2244 + $0x68] sm:$0xff] %vm2245, %v2119
          %2260 = vst.msk [vmem:[%s2244 + $0x70] sm:$0xff] %vm2245, %v2122
          %2261 = vst.msk [vmem:[%s2244 + $0x78] sm:$0xff] %vm2245, %v2125
          %v2262 = vpack.c.bf16 %v2228, %v2228
          %v2263 = vpack.c.bf16 %v2229, %v2229
          %v2264 = vpack.c.bf16 %v2230, %v2230
          %v2265 = vpack.c.bf16 %v2231, %v2231
          %v2266 = vpack.c.bf16 %v2232, %v2232
          %v2267 = vpack.c.bf16 %v2233, %v2233
          %v2268 = vpack.c.bf16 %v2234, %v2234
          %v2269 = vpack.c.bf16 %v2235, %v2235
          %v2270 = vpack.c.bf16 %v2236, %v2236
          %v2271 = vpack.c.bf16 %v2237, %v2237
          %v2272 = vpack.c.bf16 %v2238, %v2238
          %v2273 = vpack.c.bf16 %v2239, %v2239
          %v2274 = vpack.c.bf16 %v2240, %v2240
          %v2275 = vpack.c.bf16 %v2241, %v2241
          %v2276 = vpack.c.bf16 %v2242, %v2242
          %v2277 = vpack.c.bf16 %v2243, %v2243
          %s2278 = sshra.s32 %s684, 3
          %s2279 = sand.u32 %s684, 7
          %s2280 = smul.addr %s2278, 4
          %s2281 = scalar_lea.vmem [#allocation2], %s2280
          %2282 = vst [vmem:[%s2281] sm:$0xf] %v2262
          %2283 = vst [vmem:[%s2281 + $0x4] sm:$0xf] %v2263
          %2284 = vst [vmem:[%s2281 + $0x8] sm:$0xf] %v2264
          %2285 = vst [vmem:[%s2281 + $0xc] sm:$0xf] %v2265
          %2286 = vst [vmem:[%s2281 + $0x10] sm:$0xf] %v2266
          %2287 = vst [vmem:[%s2281 + $0x14] sm:$0xf] %v2267
          %2288 = vst [vmem:[%s2281 + $0x18] sm:$0xf] %v2268
          %2289 = vst [vmem:[%s2281 + $0x1c] sm:$0xf] %v2269
          %2290 = vst [vmem:[%s2281 + $0x20] sm:$0xf] %v2270
          %2291 = vst [vmem:[%s2281 + $0x24] sm:$0xf] %v2271
          %2292 = vst [vmem:[%s2281 + $0x28] sm:$0xf] %v2272
          %2293 = vst [vmem:[%s2281 + $0x2c] sm:$0xf] %v2273
          %2294 = vst [vmem:[%s2281 + $0x30] sm:$0xf] %v2274
          %2295 = vst [vmem:[%s2281 + $0x34] sm:$0xf] %v2275
          %2296 = vst [vmem:[%s2281 + $0x38] sm:$0xf] %v2276
          %2297 = vst [vmem:[%s2281 + $0x3c] sm:$0xf] %v2277
          %v2298 = vsel %vm2245, %v2080, -inf
          %v2299 = vsel %vm2245, %v2083, -inf
          %v2300 = vsel %vm2245, %v2086, -inf
          %v2301 = vsel %vm2245, %v2089, -inf
          %v2302 = vsel %vm2245, %v2092, -inf
          %v2303 = vmax.f32 %v2298, %v2302
          %v2304 = vsel %vm2245, %v2095, -inf
          %v2305 = vmax.f32 %v2299, %v2304
          %v2306 = vsel %vm2245, %v2098, -inf
          %v2307 = vmax.f32 %v2300, %v2306
          %v2308 = vsel %vm2245, %v2101, -inf
          %v2309 = vmax.f32 %v2301, %v2308
          %v2310 = vsel %vm2245, %v2104, -inf
          %v2311 = vmax.f32 %v2303, %v2310
          %v2312 = vsel %vm2245, %v2107, -inf
          %v2313 = vmax.f32 %v2305, %v2312
          %v2314 = vsel %vm2245, %v2110, -inf
          %v2315 = vmax.f32 %v2307, %v2314
          %v2316 = vsel %vm2245, %v2113, -inf
          %v2317 = vmax.f32 %v2309, %v2316
          %v2318 = vsel %vm2245, %v2116, -inf
          %v2319 = vmax.f32 %v2311, %v2318
          %v2320 = vsel %vm2245, %v2119, -inf
          %v2321 = vmax.f32 %v2313, %v2320
          %v2322 = vsel %vm2245, %v2122, -inf
          %v2323 = vmax.f32 %v2315, %v2322
          %v2324 = vsel %vm2245, %v2125, -inf
          %v2325 = vmax.f32 %v2317, %v2324
          %v2326 = vmax.f32 %v2319, %v2321
          %v2327 = vmax.f32 %v2323, %v2325
          %v2328 = vmax.f32 %v2326, %v2327
          %v2329 = vrot.slane %v2328, 4
          %v2330 = vmax.f32 %v2328, %v2329
          %v2331 = vrot.slane %v2330, 2
          %v2332 = vmax.f32 %v2330, %v2331
          %v2333 = vrot.slane %v2332, 1
          %v2334 = vmax.f32 %v2332, %v2333
          %v2335 = vlaneseq
          %v2336 = vshrl.u32 %v2335, 7
          %v2337 = vadd.s32 %v2336, 8
          %v2338 = vadd.s32 %v2336, 16
          %v2339 = vadd.s32 %v2336, 24
          %v2340 = vadd.s32 %v2336, 32
          %v2341 = vadd.s32 %v2336, 40
          %v2342 = vadd.s32 %v2336, 48
          %v2343 = vadd.s32 %v2336, 56
          %v2344 = vadd.s32 %v2336, 64
          %v2345 = vadd.s32 %v2336, 72
          %v2346 = vadd.s32 %v2336, 80
          %v2347 = vadd.s32 %v2336, 88
          %v2348 = vadd.s32 %v2336, 96
          %v2349 = vadd.s32 %v2336, 104
          %v2350 = vadd.s32 %v2336, 112
          %v2351 = vadd.s32 %v2336, 120
          %vm2352 = vcmp.ge.f32.partialorder %v2080, %v2334
          %vm2353 = vcmp.ge.f32.partialorder %v2083, %v2334
          %vm2354 = vcmp.ge.f32.partialorder %v2086, %v2334
          %vm2355 = vcmp.ge.f32.partialorder %v2089, %v2334
          %vm2356 = vcmp.ge.f32.partialorder %v2092, %v2334
          %vm2357 = vcmp.ge.f32.partialorder %v2095, %v2334
          %vm2358 = vcmp.ge.f32.partialorder %v2098, %v2334
          %vm2359 = vcmp.ge.f32.partialorder %v2101, %v2334
          %vm2360 = vcmp.ge.f32.partialorder %v2104, %v2334
          %vm2361 = vcmp.ge.f32.partialorder %v2107, %v2334
          %vm2362 = vcmp.ge.f32.partialorder %v2110, %v2334
          %vm2363 = vcmp.ge.f32.partialorder %v2113, %v2334
          %vm2364 = vcmp.ge.f32.partialorder %v2116, %v2334
          %vm2365 = vcmp.ge.f32.partialorder %v2119, %v2334
          %vm2366 = vcmp.ge.f32.partialorder %v2122, %v2334
          %vm2367 = vcmp.ge.f32.partialorder %v2125, %v2334
          %v2368 = vsel %vm2352, %v2336, 128
          %v2369 = vsel %vm2353, %v2337, 128
          %v2370 = vsel %vm2354, %v2338, 128
          %v2371 = vsel %vm2355, %v2339, 128
          %v2372 = vsel %vm2356, %v2340, 128
          %v2373 = vsel %vm2357, %v2341, 128
          %v2374 = vsel %vm2358, %v2342, 128
          %v2375 = vsel %vm2359, %v2343, 128
          %v2376 = vsel %vm2360, %v2344, 128
          %v2377 = vsel %vm2361, %v2345, 128
          %v2378 = vsel %vm2362, %v2346, 128
          %v2379 = vsel %vm2363, %v2347, 128
          %v2380 = vsel %vm2364, %v2348, 128
          %v2381 = vsel %vm2365, %v2349, 128
          %v2382 = vsel %vm2366, %v2350, 128
          %v2383 = vsel %vm2367, %v2351, 128
          %v2384 = vsel %vm2245, %v2368, 2147483647
          %v2385 = vsel %vm2245, %v2369, 2147483647
          %v2386 = vsel %vm2245, %v2370, 2147483647
          %v2387 = vsel %vm2245, %v2371, 2147483647
          %v2388 = vsel %vm2245, %v2372, 2147483647
          %vm2389 = vcmp.lt.s32.totalorder %v2384, %v2388
          %v2390 = vsel %vm2389, %v2384, %v2388
          %v2391 = vsel %vm2245, %v2373, 2147483647
          %vm2392 = vcmp.lt.s32.totalorder %v2385, %v2391
          %v2393 = vsel %vm2392, %v2385, %v2391
          %v2394 = vsel %vm2245, %v2374, 2147483647
          %vm2395 = vcmp.lt.s32.totalorder %v2386, %v2394
          %v2396 = vsel %vm2395, %v2386, %v2394
          %v2397 = vsel %vm2245, %v2375, 2147483647
          %vm2398 = vcmp.lt.s32.totalorder %v2387, %v2397
          %v2399 = vsel %vm2398, %v2387, %v2397
          %v2400 = vsel %vm2245, %v2376, 2147483647
          %vm2401 = vcmp.lt.s32.totalorder %v2390, %v2400
          %v2402 = vsel %vm2401, %v2390, %v2400
          %v2403 = vsel %vm2245, %v2377, 2147483647
          %vm2404 = vcmp.lt.s32.totalorder %v2393, %v2403
          %v2405 = vsel %vm2404, %v2393, %v2403
          %v2406 = vsel %vm2245, %v2378, 2147483647
          %vm2407 = vcmp.lt.s32.totalorder %v2396, %v2406
          %v2408 = vsel %vm2407, %v2396, %v2406
          %v2409 = vsel %vm2245, %v2379, 2147483647
          %vm2410 = vcmp.lt.s32.totalorder %v2399, %v2409
          %v2411 = vsel %vm2410, %v2399, %v2409
          %v2412 = vsel %vm2245, %v2380, 2147483647
          %vm2413 = vcmp.lt.s32.totalorder %v2402, %v2412
          %v2414 = vsel %vm2413, %v2402, %v2412
          %v2415 = vsel %vm2245, %v2381, 2147483647
          %vm2416 = vcmp.lt.s32.totalorder %v2405, %v2415
          %v2417 = vsel %vm2416, %v2405, %v2415
          %v2418 = vsel %vm2245, %v2382, 2147483647
          %vm2419 = vcmp.lt.s32.totalorder %v2408, %v2418
          %v2420 = vsel %vm2419, %v2408, %v2418
          %v2421 = vsel %vm2245, %v2383, 2147483647
          %vm2422 = vcmp.lt.s32.totalorder %v2411, %v2421
          %v2423 = vsel %vm2422, %v2411, %v2421
          %vm2424 = vcmp.lt.s32.totalorder %v2414, %v2417
          %v2425 = vsel %vm2424, %v2414, %v2417
          %vm2426 = vcmp.lt.s32.totalorder %v2420, %v2423
          %v2427 = vsel %vm2426, %v2420, %v2423
          %vm2428 = vcmp.lt.s32.totalorder %v2425, %v2427
          %v2429 = vsel %vm2428, %v2425, %v2427
          %v2430 = vrot.slane %v2429, 4
          %vm2431 = vcmp.lt.s32.totalorder %v2429, %v2430
          %v2432 = vsel %vm2431, %v2429, %v2430
          %v2433 = vrot.slane %v2432, 2
          %vm2434 = vcmp.lt.s32.totalorder %v2432, %v2433
          %v2435 = vsel %vm2434, %v2432, %v2433
          %v2436 = vrot.slane %v2435, 1
          %vm2437 = vcmp.lt.s32.totalorder %v2435, %v2436
          %v2438 = vsel %vm2437, %v2435, %v2436
          %vm2439 = vcmp.eq.s32.totalorder %v2336, %v2438
          %vm2440 = vcmp.eq.s32.totalorder %v2337, %v2438
          %vm2441 = vcmp.eq.s32.totalorder %v2338, %v2438
          %vm2442 = vcmp.eq.s32.totalorder %v2339, %v2438
          %vm2443 = vcmp.eq.s32.totalorder %v2340, %v2438
          %vm2444 = vcmp.eq.s32.totalorder %v2341, %v2438
          %vm2445 = vcmp.eq.s32.totalorder %v2342, %v2438
          %vm2446 = vcmp.eq.s32.totalorder %v2343, %v2438
          %vm2447 = vcmp.eq.s32.totalorder %v2344, %v2438
          %vm2448 = vcmp.eq.s32.totalorder %v2345, %v2438
          %vm2449 = vcmp.eq.s32.totalorder %v2346, %v2438
          %vm2450 = vcmp.eq.s32.totalorder %v2347, %v2438
          %vm2451 = vcmp.eq.s32.totalorder %v2348, %v2438
          %vm2452 = vcmp.eq.s32.totalorder %v2349, %v2438
          %vm2453 = vcmp.eq.s32.totalorder %v2350, %v2438
          %vm2454 = vcmp.eq.s32.totalorder %v2351, %v2438
          %v2455 = vsel %vm2439, 1, 0
          %v2456 = vsel %vm2440, 1, 0
          %v2457 = vsel %vm2441, 1, 0
          %v2458 = vsel %vm2442, 1, 0
          %v2459 = vsel %vm2443, 1, 0
          %v2460 = vsel %vm2444, 1, 0
          %v2461 = vsel %vm2445, 1, 0
          %v2462 = vsel %vm2446, 1, 0
          %v2463 = vsel %vm2447, 1, 0
          %v2464 = vsel %vm2448, 1, 0
          %v2465 = vsel %vm2449, 1, 0
          %v2466 = vsel %vm2450, 1, 0
          %v2467 = vsel %vm2451, 1, 0
          %v2468 = vsel %vm2452, 1, 0
          %v2469 = vsel %vm2453, 1, 0
          %v2470 = vsel %vm2454, 1, 0
          %v2471 = vcvt.s32.f32 %v2455
          %v2472 = vcvt.s32.f32 %v2456
          %v2473 = vcvt.s32.f32 %v2457
          %v2474 = vcvt.s32.f32 %v2458
          %v2475 = vcvt.s32.f32 %v2459
          %v2476 = vcvt.s32.f32 %v2460
          %v2477 = vcvt.s32.f32 %v2461
          %v2478 = vcvt.s32.f32 %v2462
          %v2479 = vcvt.s32.f32 %v2463
          %v2480 = vcvt.s32.f32 %v2464
          %v2481 = vcvt.s32.f32 %v2465
          %v2482 = vcvt.s32.f32 %v2466
          %v2483 = vcvt.s32.f32 %v2467
          %v2484 = vcvt.s32.f32 %v2468
          %v2485 = vcvt.s32.f32 %v2469
          %v2486 = vcvt.s32.f32 %v2470
          %2487 = vxpose.xlu0.b32.start [1/16] %v2471, 128
          %2488 = vxpose.xlu0.b32.cont [2/16] %v2472, 128
          %2489 = vxpose.xlu0.b32.cont [3/16] %v2473, 128
          %2490 = vxpose.xlu0.b32.cont [4/16] %v2474, 128
          %2491 = vxpose.xlu0.b32.cont [5/16] %v2475, 128
          %2492 = vxpose.xlu0.b32.cont [6/16] %v2476, 128
          %2493 = vxpose.xlu0.b32.cont [7/16] %v2477, 128
          %2494 = vxpose.xlu0.b32.cont [8/16] %v2478, 128
          %2495 = vxpose.xlu0.b32.cont [9/16] %v2479, 128
          %2496 = vxpose.xlu0.b32.cont [10/16] %v2480, 128
          %2497 = vxpose.xlu0.b32.cont [11/16] %v2481, 128
          %2498 = vxpose.xlu0.b32.cont [12/16] %v2482, 128
          %2499 = vxpose.xlu0.b32.cont [13/16] %v2483, 128
          %2500 = vxpose.xlu0.b32.cont [14/16] %v2484, 128
          %2501 = vxpose.xlu0.b32.cont [15/16] %v2485, 128
          %2502 = vxpose.xlu0.b32.end [16/16] %v2486, 128
          %v2503 = vpop.trf.xlu0
          %v2504 = vpop.trf.xlu0
          %v2505 = vpop.trf.xlu0
          %v2506 = vpop.trf.xlu0
          %v2507 = vpop.trf.xlu0
          %v2508 = vpop.trf.xlu0
          %v2509 = vpop.trf.xlu0
          %v2510 = vpop.trf.xlu0
          %v2511 = vpop.trf.xlu0
          %v2512 = vpop.trf.xlu0
          %v2513 = vpop.trf.xlu0
          %v2514 = vpop.trf.xlu0
          %v2515 = vpop.trf.xlu0
          %v2516 = vpop.trf.xlu0
          %v2517 = vpop.trf.xlu0
          %v2518 = vpop.trf.xlu0
          %2519 = vmatpush.msra.mxu0 %v2243
          %2520 = vmatpush.msra.mxu0 %v2242
          %2521 = vmatpush.msra.mxu0 %v2241
          %2522 = vmatpush.msra.mxu0 %v2240
          %2523 = vmatpush.msra.mxu0 %v2239
          %2524 = vmatpush.msra.mxu0 %v2238
          %2525 = vmatpush.msra.mxu0 %v2237
          %2526 = vmatpush.msra.mxu0 %v2236
          %2527 = vmatpush.msra.mxu0 %v2235
          %2528 = vmatpush.msra.mxu0 %v2234
          %2529 = vmatpush.msra.mxu0 %v2233
          %2530 = vmatpush.msra.mxu0 %v2232
          %2531 = vmatpush.msra.mxu0 %v2231
          %2532 = vmatpush.msra.mxu0 %v2230
          %2533 = vmatpush.msra.mxu0 %v2229
          %2534 = vmatpush.msra.mxu0 %v2228
          %2535 = vmatmul.f32.gmra.mxu0 %v2503
          %v2536 = vpop.f32.mrf.mxu0
          %v2537 = vadd.f32 0.0, %v2536
          %2538 = vdwg.mxu0
          %v2539 = vld [vmem:[#allocation3] sm:$0x1]
          %vm2540 = vcmp.gt.f32.partialorder %v2334, %v2539
          %v2541 = vsel %vm2540, 1, 0
          %v2542 = vcvt.s32.f32 %v2541
          %v2543 = vlaneseq
          %v2544 = vand.u32 %v2543, 127
          %vm2545 = vcmp.eq.s32.totalorder %v2336, %v2544
          %v2546 = vsel %vm2545, 1, 0
          %v2547 = vcvt.s32.f32 %v2546
          %v2548 = vperm.slane %v2542, 0
          %v2549 = vmul.f32 %v2548, %v2547
          %v2550 = vld [vmem:[#allocation4] sm:$0xf]
          %v2551 = vsub.f32 %v2537, %v2550
          %v2553 = vsel %vm2245, %v2549, 0
          %vm2555 = vcmask 1043456
          %v2557 = vsel %vm2555, %v2551, 0
          %2559 = vmatpush.msra.mxu0 0.0
          %2560 = vmatpush.msra.mxu0 0.0
          %2561 = vmatpush.msra.mxu0 0.0
          %2562 = vmatpush.msra.mxu0 0.0
          %2563 = vmatpush.msra.mxu0 0.0
          %2564 = vmatpush.msra.mxu0 0.0
          %2565 = vmatpush.msra.mxu0 0.0
          %2566 = vmatpush.msra.mxu0 0.0
          %2567 = vmatpush.msra.mxu0 0.0
          %2568 = vmatpush.msra.mxu0 0.0
          %2569 = vmatpush.msra.mxu0 0.0
          %2570 = vmatpush.msra.mxu0 0.0
          %2571 = vmatpush.msra.mxu0 0.0
          %2572 = vmatpush.msra.mxu0 0.0
          %2573 = vmatpush.msra.mxu0 0.0
          %2574 = vmatpush.msra.mxu0 %v2557
          %2575 = vmatmul.f32.gmra.mxu0 %v2553
          %v2576 = vpop.f32.mrf.mxu0
          %v2577 = vadd.f32 0.0, %v2576
          %2578 = vdwg.mxu0
          %v2579 = vadd.f32 %v2550, %v2577
          %2580 = vst [vmem:[#allocation4] sm:$0xf] %v2579
          %v2581 = vld [vmem:[#allocation3] sm:$0x1]
          %v2582 = vmax.f32 %v2581, %v2334
          %vm2583 = vcmask 24576
          %2584 = vst.msk [vmem:[#allocation3] sm:$0x1] %vm2583, %v2582
        $region100: #{tpu_custom_call.1} parent=83 // pred_fallthru
          _
        %p2585 = scmp.eq.s32.totalorder %s44, 1
        %p2586 = pnand %p2585, %p814
        %p2587 = pneg %p2586
        // Predicated region
        $region101: #{tpu_custom_call.1} parent=83 // pred_check
          _
        $region102: #{tpu_custom_call.1} parent=83 // pred_check_branch
          %2589 = sbr.rel (%p2586) target = $region104
        $region103: #{tpu_custom_call.1} parent=83 // pred_region
          %v2590 = vld [vmem:[#allocation2] sm:$0xf]
          %v2591 = vld [vmem:[#allocation2 + $0x4] sm:$0xf]
          %v2592 = vld [vmem:[#allocation2 + $0x8] sm:$0xf]
          %v2593 = vld [vmem:[#allocation2 + $0xc] sm:$0xf]
          %v2594 = vld [vmem:[#allocation2 + $0x10] sm:$0xf]
          %v2595 = vld [vmem:[#allocation2 + $0x14] sm:$0xf]
          %v2596 = vld [vmem:[#allocation2 + $0x18] sm:$0xf]
          %v2597 = vld [vmem:[#allocation2 + $0x1c] sm:$0xf]
          %v2598 = vld [vmem:[#allocation2 + $0x20] sm:$0xf]
          %v2599 = vld [vmem:[#allocation2 + $0x24] sm:$0xf]
          %v2600 = vld [vmem:[#allocation2 + $0x28] sm:$0xf]
          %v2601 = vld [vmem:[#allocation2 + $0x2c] sm:$0xf]
          %v2602 = vld [vmem:[#allocation2 + $0x30] sm:$0xf]
          %v2603 = vld [vmem:[#allocation2 + $0x34] sm:$0xf]
          %v2604 = vld [vmem:[#allocation2 + $0x38] sm:$0xf]
          %v2605 = vld [vmem:[#allocation2 + $0x3c] sm:$0xf]
          %v2606 = vld [vmem:[#allocation2 + $0x40] sm:$0xf]
          %v2607 = vld [vmem:[#allocation2 + $0x44] sm:$0xf]
          %v2608 = vld [vmem:[#allocation2 + $0x48] sm:$0xf]
          %v2609 = vld [vmem:[#allocation2 + $0x4c] sm:$0xf]
          %v2610 = vld [vmem:[#allocation2 + $0x50] sm:$0xf]
          %v2611 = vld [vmem:[#allocation2 + $0x54] sm:$0xf]
          %v2612 = vld [vmem:[#allocation2 + $0x58] sm:$0xf]
          %v2613 = vld [vmem:[#allocation2 + $0x5c] sm:$0xf]
          %v2614 = vld [vmem:[#allocation2 + $0x60] sm:$0xf]
          %v2615 = vld [vmem:[#allocation2 + $0x64] sm:$0xf]
          %v2616 = vld [vmem:[#allocation2 + $0x68] sm:$0xf]
          %v2617 = vld [vmem:[#allocation2 + $0x6c] sm:$0xf]
          %v2618 = vld [vmem:[#allocation2 + $0x70] sm:$0xf]
          %v2619 = vld [vmem:[#allocation2 + $0x74] sm:$0xf]
          %v2620 = vld [vmem:[#allocation2 + $0x78] sm:$0xf]
          %v2621 = vld [vmem:[#allocation2 + $0x7c] sm:$0xf]
          %v2622 = vld [vmem:[#allocation4] sm:$0xf]
          %v2623 = vpack.c.bf16 %v2622, %v2622
          %v2656 = vunpack.c.l.b16 %v2590
          %v2657 = vunpack.c.l.b16 %v2591
          %v2658 = vunpack.c.l.b16 %v2592
          %v2659 = vunpack.c.l.b16 %v2593
          %v2660 = vunpack.c.l.b16 %v2594
          %v2661 = vunpack.c.l.b16 %v2595
          %v2662 = vunpack.c.l.b16 %v2596
          %v2663 = vunpack.c.l.b16 %v2597
          %v2664 = vunpack.c.l.b16 %v2598
          %v2665 = vunpack.c.l.b16 %v2599
          %v2666 = vunpack.c.l.b16 %v2600
          %v2667 = vunpack.c.l.b16 %v2601
          %v2668 = vunpack.c.l.b16 %v2602
          %v2669 = vunpack.c.l.b16 %v2603
          %v2670 = vunpack.c.l.b16 %v2604
          %v2671 = vunpack.c.l.b16 %v2605
          %v2672 = vunpack.c.l.b16 %v2606
          %v2673 = vunpack.c.l.b16 %v2607
          %v2674 = vunpack.c.l.b16 %v2608
          %v2675 = vunpack.c.l.b16 %v2609
          %v2676 = vunpack.c.l.b16 %v2610
          %v2677 = vunpack.c.l.b16 %v2611
          %v2678 = vunpack.c.l.b16 %v2612
          %v2679 = vunpack.c.l.b16 %v2613
          %v2680 = vunpack.c.l.b16 %v2614
          %v2681 = vunpack.c.l.b16 %v2615
          %v2682 = vunpack.c.l.b16 %v2616
          %v2683 = vunpack.c.l.b16 %v2617
          %v2684 = vunpack.c.l.b16 %v2618
          %v2685 = vunpack.c.l.b16 %v2619
          %v2686 = vunpack.c.l.b16 %v2620
          %v2687 = vunpack.c.l.b16 %v2621
          %v2688 = vpack.c.b16 %v2657, %v2656
          %v2689 = vpack.c.b16 %v2659, %v2658
          %v2690 = vpack.c.b16 %v2661, %v2660
          %v2691 = vpack.c.b16 %v2663, %v2662
          %v2692 = vpack.c.b16 %v2665, %v2664
          %v2693 = vpack.c.b16 %v2667, %v2666
          %v2694 = vpack.c.b16 %v2669, %v2668
          %v2695 = vpack.c.b16 %v2671, %v2670
          %v2696 = vpack.c.b16 %v2673, %v2672
          %v2697 = vpack.c.b16 %v2675, %v2674
          %v2698 = vpack.c.b16 %v2677, %v2676
          %v2699 = vpack.c.b16 %v2679, %v2678
          %v2700 = vpack.c.b16 %v2681, %v2680
          %v2701 = vpack.c.b16 %v2683, %v2682
          %v2702 = vpack.c.b16 %v2685, %v2684
          %v2703 = vpack.c.b16 %v2687, %v2686
          %2720 = vmatpush.bf16.xpose.msra.mxu0 %v2695
          %2721 = vmatpush.bf16.xpose.msra.mxu0 %v2694
          %2722 = vmatpush.bf16.xpose.msra.mxu0 %v2693
          %2723 = vmatpush.bf16.xpose.msra.mxu0 %v2692
          %2724 = vmatpush.bf16.xpose.msra.mxu0 %v2691
          %2725 = vmatpush.bf16.xpose.msra.mxu0 %v2690
          %2726 = vmatpush.bf16.xpose.msra.mxu0 %v2689
          %2727 = vmatpush.bf16.xpose.msra.mxu0 %v2688
          %2728 = vmatmul.bf16.gmra.mxu0 %v2623
          %v2729 = vpop.f32.mrf.mxu0
          %v2730 = vadd.f32 0.0, %v2729
          %v2731 = vpop.f32.mrf.mxu0
          %2732 = vdwg.mxu0
          %2733 = vmatpush.bf16.xpose.msra.mxu0 %v2703
          %2734 = vmatpush.bf16.xpose.msra.mxu0 %v2702
          %2735 = vmatpush.bf16.xpose.msra.mxu0 %v2701
          %2736 = vmatpush.bf16.xpose.msra.mxu0 %v2700
          %2737 = vmatpush.bf16.xpose.msra.mxu0 %v2699
          %2738 = vmatpush.bf16.xpose.msra.mxu0 %v2698
          %2739 = vmatpush.bf16.xpose.msra.mxu0 %v2697
          %2740 = vmatpush.bf16.xpose.msra.mxu0 %v2696
          %2741 = vmatmul.bf16.gmra.mxu0 %v2623
          %v2742 = vpop.f32.mrf.mxu0
          %v2743 = vadd.f32 0.0, %v2742
          %v2744 = vpop.f32.mrf.mxu0
          %2745 = vdwg.mxu0
          %v2746 = vmul.f32 %v2730, 0.088388346
          %v2747 = vmul.f32 %v2743, 0.088388346
          %vm2748 = vcmask 1043456
          %v2749 = vsel %vm2748, %v2746, -inf
          %v2750 = vsel %vm2748, %v2747, -inf
          %v2751 = vmax.f32 %v2749, %v2750
          %2752 = vmax.xlane.f32.xlu0 %v2751
          %v2753 = vpop.xlane.xlu0 %2752
          %v2754 = vsub.f32 %v2746, %v2753
          %v2755 = vsub.f32 %v2747, %v2753
          %v2756 = vmul.f32 %v2754, 1.442695
          %v2757 = vpow.pop %v2756
          %v2758 = vmul.f32 %v2755, 1.442695
          %v2759 = vpow.pop %v2758
          %v2760 = vsel %vm2748, %v2757, 0.0
          %v2761 = vsel %vm2748, %v2759, 0.0
          %v2762 = vadd.f32 %v2760, %v2761
          %2763 = vadd.xlane.f32.xlu0 %v2762
          %v2764 = vpop.xlane.xlu0 %2763
          %v2765 = vrcp.pop %v2764
          %v2766 = vmul.f32 %v2757, %v2765
          %v2767 = vmul.f32 %v2759, %v2765
          %v2770 = vrot.slane %v2767, 4
          %v2771 = vsel %vm2748, %v2766, %v2770
          %2773 = vst [vmem:[#allocation11] sm:$0xff] %v2771
          %2774 = vst [vmem:[#allocation5] sm:$0xff] 0.0
          %2775 = vst [vmem:[#allocation5 + $0x8] sm:$0xff] 0.0
          %2776 = vst [vmem:[#allocation5 + $0x10] sm:$0xff] 0.0
          %2777 = vst [vmem:[#allocation5 + $0x18] sm:$0xff] 0.0
        $region104: #{tpu_custom_call.1} parent=83 // pred_fallthru
          _
        // Predicated region
        $region105: #{tpu_custom_call.1} parent=83 // pred_check
          %p2778 = pneg %p2585
        $region106: #{tpu_custom_call.1} parent=83 // pred_check_branch
          %2780 = sbr.rel (%p2778) target = $region108
        $region107: #{tpu_custom_call.1} parent=83 // pred_region
          %s2781 = sshra.s32 %s684, 7
          %s2782 = sand.u32 %s684, 127
          %s2783 = smul.addr %s2781, 4
          %s2784 = scalar_lea.vmem [#allocation11], %s2783
          %v2785 = vld [vmem:[%s2784] sm:$0xf]
          %v2786 = vld [vmem:[#allocation5] sm:$0xff]
          %v2787 = vld [vmem:[#allocation5 + $0x8] sm:$0xff]
          %v2788 = vld [vmem:[#allocation5 + $0x10] sm:$0xff]
          %v2789 = vld [vmem:[#allocation5 + $0x18] sm:$0xff]
          %2790 = vmatpush.msra.mxu0 %v805
          %2791 = vmatpush.msra.mxu0 %v797
          %2792 = vmatpush.msra.mxu0 %v789
          %2793 = vmatpush.msra.mxu0 %v781
          %2794 = vmatpush.msra.mxu0 %v773
          %2795 = vmatpush.msra.mxu0 %v765
          %2796 = vmatpush.msra.mxu0 %v757
          %2797 = vmatpush.msra.mxu0 %v749
          %2798 = vmatpush.msra.mxu0 %v741
          %2799 = vmatpush.msra.mxu0 %v733
          %2800 = vmatpush.msra.mxu0 %v725
          %2801 = vmatpush.msra.mxu0 %v717
          %2802 = vmatpush.msra.mxu0 %v709
          %2803 = vmatpush.msra.mxu0 %v701
          %2804 = vmatpush.msra.mxu0 %v693
          %2805 = vmatpush.msra.mxu0 %v685
          %2806 = vmatmul.f32.gmra.mxu0 %v2785
          %v2807 = vpop.f32.mrf.mxu0
          %v2808 = vadd.f32 0.0, %v2807
          %2809 = vdwg.mxu0
          %2810 = vmatpush.msra.mxu0 %v806
          %2811 = vmatpush.msra.mxu0 %v798
          %2812 = vmatpush.msra.mxu0 %v790
          %2813 = vmatpush.msra.mxu0 %v782
          %2814 = vmatpush.msra.mxu0 %v774
          %2815 = vmatpush.msra.mxu0 %v766
          %2816 = vmatpush.msra.mxu0 %v758
          %2817 = vmatpush.msra.mxu0 %v750
          %2818 = vmatpush.msra.mxu0 %v742
          %2819 = vmatpush.msra.mxu0 %v734
          %2820 = vmatpush.msra.mxu0 %v726
          %2821 = vmatpush.msra.mxu0 %v718
          %2822 = vmatpush.msra.mxu0 %v710
          %2823 = vmatpush.msra.mxu0 %v702
          %2824 = vmatpush.msra.mxu0 %v694
          %2825 = vmatpush.msra.mxu0 %v686
          %2826 = vmatmul.f32.gmra.mxu0 %v2785
          %v2827 = vpop.f32.mrf.mxu0
          %v2828 = vadd.f32 0.0, %v2827
          %2829 = vdwg.mxu0
          %2830 = vmatpush.msra.mxu0 %v807
          %2831 = vmatpush.msra.mxu0 %v799
          %2832 = vmatpush.msra.mxu0 %v791
          %2833 = vmatpush.msra.mxu0 %v783
          %2834 = vmatpush.msra.mxu0 %v775
          %2835 = vmatpush.msra.mxu0 %v767
          %2836 = vmatpush.msra.mxu0 %v759
          %2837 = vmatpush.msra.mxu0 %v751
          %2838 = vmatpush.msra.mxu0 %v743
          %2839 = vmatpush.msra.mxu0 %v735
          %2840 = vmatpush.msra.mxu0 %v727
          %2841 = vmatpush.msra.mxu0 %v719
          %2842 = vmatpush.msra.mxu0 %v711
          %2843 = vmatpush.msra.mxu0 %v703
          %2844 = vmatpush.msra.mxu0 %v695
          %2845 = vmatpush.msra.mxu0 %v687
          %2846 = vmatmul.f32.gmra.mxu0 %v2785
          %v2847 = vpop.f32.mrf.mxu0
          %v2848 = vadd.f32 0.0, %v2847
          %2849 = vdwg.mxu0
          %2850 = vmatpush.msra.mxu0 %v808
          %2851 = vmatpush.msra.mxu0 %v800
          %2852 = vmatpush.msra.mxu0 %v792
          %2853 = vmatpush.msra.mxu0 %v784
          %2854 = vmatpush.msra.mxu0 %v776
          %2855 = vmatpush.msra.mxu0 %v768
          %2856 = vmatpush.msra.mxu0 %v760
          %2857 = vmatpush.msra.mxu0 %v752
          %2858 = vmatpush.msra.mxu0 %v744
          %2859 = vmatpush.msra.mxu0 %v736
          %2860 = vmatpush.msra.mxu0 %v728
          %2861 = vmatpush.msra.mxu0 %v720
          %2862 = vmatpush.msra.mxu0 %v712
          %2863 = vmatpush.msra.mxu0 %v704
          %2864 = vmatpush.msra.mxu0 %v696
          %2865 = vmatpush.msra.mxu0 %v688
          %2866 = vmatmul.f32.gmra.mxu0 %v2785
          %v2867 = vpop.f32.mrf.mxu0
          %v2868 = vadd.f32 0.0, %v2867
          %2869 = vdwg.mxu0
          %2870 = vmatpush.msra.mxu0 %v809
          %2871 = vmatpush.msra.mxu0 %v801
          %2872 = vmatpush.msra.mxu0 %v793
          %2873 = vmatpush.msra.mxu0 %v785
          %2874 = vmatpush.msra.mxu0 %v777
          %2875 = vmatpush.msra.mxu0 %v769
          %2876 = vmatpush.msra.mxu0 %v761
          %2877 = vmatpush.msra.mxu0 %v753
          %2878 = vmatpush.msra.mxu0 %v745
          %2879 = vmatpush.msra.mxu0 %v737
          %2880 = vmatpush.msra.mxu0 %v729
          %2881 = vmatpush.msra.mxu0 %v721
          %2882 = vmatpush.msra.mxu0 %v713
          %2883 = vmatpush.msra.mxu0 %v705
          %2884 = vmatpush.msra.mxu0 %v697
          %2885 = vmatpush.msra.mxu0 %v689
          %2886 = vmatmul.f32.gmra.mxu0 %v2785
          %v2887 = vpop.f32.mrf.mxu0
          %v2888 = vadd.f32 0.0, %v2887
          %2889 = vdwg.mxu0
          %2890 = vmatpush.msra.mxu0 %v810
          %2891 = vmatpush.msra.mxu0 %v802
          %2892 = vmatpush.msra.mxu0 %v794
          %2893 = vmatpush.msra.mxu0 %v786
          %2894 = vmatpush.msra.mxu0 %v778
          %2895 = vmatpush.msra.mxu0 %v770
          %2896 = vmatpush.msra.mxu0 %v762
          %2897 = vmatpush.msra.mxu0 %v754
          %2898 = vmatpush.msra.mxu0 %v746
          %2899 = vmatpush.msra.mxu0 %v738
          %2900 = vmatpush.msra.mxu0 %v730
          %2901 = vmatpush.msra.mxu0 %v722
          %2902 = vmatpush.msra.mxu0 %v714
          %2903 = vmatpush.msra.mxu0 %v706
          %2904 = vmatpush.msra.mxu0 %v698
          %2905 = vmatpush.msra.mxu0 %v690
          %2906 = vmatmul.f32.gmra.mxu0 %v2785
          %v2907 = vpop.f32.mrf.mxu0
          %v2908 = vadd.f32 0.0, %v2907
          %2909 = vdwg.mxu0
          %2910 = vmatpush.msra.mxu0 %v811
          %2911 = vmatpush.msra.mxu0 %v803
          %2912 = vmatpush.msra.mxu0 %v795
          %2913 = vmatpush.msra.mxu0 %v787
          %2914 = vmatpush.msra.mxu0 %v779
          %2915 = vmatpush.msra.mxu0 %v771
          %2916 = vmatpush.msra.mxu0 %v763
          %2917 = vmatpush.msra.mxu0 %v755
          %2918 = vmatpush.msra.mxu0 %v747
          %2919 = vmatpush.msra.mxu0 %v739
          %2920 = vmatpush.msra.mxu0 %v731
          %2921 = vmatpush.msra.mxu0 %v723
          %2922 = vmatpush.msra.mxu0 %v715
          %2923 = vmatpush.msra.mxu0 %v707
          %2924 = vmatpush.msra.mxu0 %v699
          %2925 = vmatpush.msra.mxu0 %v691
          %2926 = vmatmul.f32.gmra.mxu0 %v2785
          %v2927 = vpop.f32.mrf.mxu0
          %v2928 = vadd.f32 0.0, %v2927
          %2929 = vdwg.mxu0
          %2930 = vmatpush.msra.mxu0 %v812
          %2931 = vmatpush.msra.mxu0 %v804
          %2932 = vmatpush.msra.mxu0 %v796
          %2933 = vmatpush.msra.mxu0 %v788
          %2934 = vmatpush.msra.mxu0 %v780
          %2935 = vmatpush.msra.mxu0 %v772
          %2936 = vmatpush.msra.mxu0 %v764
          %2937 = vmatpush.msra.mxu0 %v756
          %2938 = vmatpush.msra.mxu0 %v748
          %2939 = vmatpush.msra.mxu0 %v740
          %2940 = vmatpush.msra.mxu0 %v732
          %2941 = vmatpush.msra.mxu0 %v724
          %2942 = vmatpush.msra.mxu0 %v716
          %2943 = vmatpush.msra.mxu0 %v708
          %2944 = vmatpush.msra.mxu0 %v700
          %2945 = vmatpush.msra.mxu0 %v692
          %2946 = vmatmul.f32.gmra.mxu0 %v2785
          %v2947 = vpop.f32.mrf.mxu0
          %v2948 = vadd.f32 0.0, %v2947
          %2949 = vdwg.mxu0
          %v2958 = vrot.slane %v2828, 4
          %v2959 = vrot.slane %v2868, 4
          %v2960 = vrot.slane %v2908, 4
          %v2961 = vrot.slane %v2948, 4
          %vm2962 = vcmask 1043456
          %v2963 = vsel %vm2962, %v2808, %v2958
          %v2964 = vsel %vm2962, %v2848, %v2959
          %v2965 = vsel %vm2962, %v2888, %v2960
          %v2966 = vsel %vm2962, %v2928, %v2961
          %v2971 = vadd.f32 %v2786, %v2963
          %v2972 = vadd.f32 %v2787, %v2964
          %v2973 = vadd.f32 %v2788, %v2965
          %v2974 = vadd.f32 %v2789, %v2966
          %2975 = vst [vmem:[#allocation5] sm:$0xff] %v2971
          %2976 = vst [vmem:[#allocation5 + $0x8] sm:$0xff] %v2972
          %2977 = vst [vmem:[#allocation5 + $0x10] sm:$0xff] %v2973
          %2978 = vst [vmem:[#allocation5 + $0x18] sm:$0xff] %v2974
        $region108: #{tpu_custom_call.1} parent=83 // pred_fallthru
          _
        %p2979 = scmp.eq.s32.totalorder %s45, 1
        %p2980 = pnand %p2585, %p2979
        %p2981 = pneg %p2980
        // Predicated region
        $region109: #{tpu_custom_call.1} parent=83 // pred_check
          _
        $region110: #{tpu_custom_call.1} parent=83 // pred_check_branch
          %2983 = sbr.rel (%p2980) target = $region112
        $region111: #{tpu_custom_call.1} parent=83 // pred_region
          %v2984 = vld [vmem:[#allocation5] sm:$0xff]
          %v2985 = vld [vmem:[#allocation5 + $0x8] sm:$0xff]
          %v2986 = vld [vmem:[#allocation5 + $0x10] sm:$0xff]
          %v2987 = vld [vmem:[#allocation5 + $0x18] sm:$0xff]
          %2988 = vst [vmem:[#allocation12] sm:$0xff] %v2984
          %2989 = vst [vmem:[#allocation12 + $0x8] sm:$0xff] %v2985
          %2990 = vst [vmem:[#allocation12 + $0x10] sm:$0xff] %v2986
          %2991 = vst [vmem:[#allocation12 + $0x18] sm:$0xff] %v2987
          %v2992 = vld [vmem:[%s5] sm:$0xff]
          %v2993 = vld [vmem:[%s5 + $0x8] sm:$0xff]
          %v2994 = vld [vmem:[%s5 + $0x10] sm:$0xff]
          %v2995 = vld [vmem:[%s5 + $0x18] sm:$0xff]
          %v2996 = vld [vmem:[%s5 + $0x20] sm:$0xff]
          %v2997 = vld [vmem:[%s5 + $0x28] sm:$0xff]
          %v2998 = vld [vmem:[%s5 + $0x30] sm:$0xff]
          %v2999 = vld [vmem:[%s5 + $0x38] sm:$0xff]
          %v3000 = vld [vmem:[%s5 + $0x40] sm:$0xff]
          %v3001 = vld [vmem:[%s5 + $0x48] sm:$0xff]
          %v3002 = vld [vmem:[%s5 + $0x50] sm:$0xff]
          %v3003 = vld [vmem:[%s5 + $0x58] sm:$0xff]
          %v3004 = vld [vmem:[%s5 + $0x60] sm:$0xff]
          %v3005 = vld [vmem:[%s5 + $0x68] sm:$0xff]
          %v3006 = vld [vmem:[%s5 + $0x70] sm:$0xff]
          %v3007 = vld [vmem:[%s5 + $0x78] sm:$0xff]
          %v3008 = vld [vmem:[%s5 + $0x80] sm:$0xff]
          %v3009 = vld [vmem:[%s5 + $0x88] sm:$0xff]
          %v3010 = vld [vmem:[%s5 + $0x90] sm:$0xff]
          %v3011 = vld [vmem:[%s5 + $0x98] sm:$0xff]
          %v3012 = vld [vmem:[%s5 + $0xa0] sm:$0xff]
          %v3013 = vld [vmem:[%s5 + $0xa8] sm:$0xff]
          %v3014 = vld [vmem:[%s5 + $0xb0] sm:$0xff]
          %v3015 = vld [vmem:[%s5 + $0xb8] sm:$0xff]
          %v3016 = vld [vmem:[%s5 + $0xc0] sm:$0xff]
          %v3017 = vld [vmem:[%s5 + $0xc8] sm:$0xff]
          %v3018 = vld [vmem:[%s5 + $0xd0] sm:$0xff]
          %v3019 = vld [vmem:[%s5 + $0xd8] sm:$0xff]
          %v3020 = vld [vmem:[%s5 + $0xe0] sm:$0xff]
          %v3021 = vld [vmem:[%s5 + $0xe8] sm:$0xff]
          %v3022 = vld [vmem:[%s5 + $0xf0] sm:$0xff]
          %v3023 = vld [vmem:[%s5 + $0xf8] sm:$0xff]
          %v3024 = vld [vmem:[%s5 + $0x100] sm:$0xff]
          %v3025 = vld [vmem:[%s5 + $0x108] sm:$0xff]
          %v3026 = vld [vmem:[%s5 + $0x110] sm:$0xff]
          %v3027 = vld [vmem:[%s5 + $0x118] sm:$0xff]
          %v3028 = vld [vmem:[%s5 + $0x120] sm:$0xff]
          %v3029 = vld [vmem:[%s5 + $0x128] sm:$0xff]
          %v3030 = vld [vmem:[%s5 + $0x130] sm:$0xff]
          %v3031 = vld [vmem:[%s5 + $0x138] sm:$0xff]
          %v3032 = vld [vmem:[%s5 + $0x140] sm:$0xff]
          %v3033 = vld [vmem:[%s5 + $0x148] sm:$0xff]
          %v3034 = vld [vmem:[%s5 + $0x150] sm:$0xff]
          %v3035 = vld [vmem:[%s5 + $0x158] sm:$0xff]
          %v3036 = vld [vmem:[%s5 + $0x160] sm:$0xff]
          %v3037 = vld [vmem:[%s5 + $0x168] sm:$0xff]
          %v3038 = vld [vmem:[%s5 + $0x170] sm:$0xff]
          %v3039 = vld [vmem:[%s5 + $0x178] sm:$0xff]
          %v3040 = vld [vmem:[%s5 + $0x180] sm:$0xff]
          %v3041 = vld [vmem:[%s5 + $0x188] sm:$0xff]
          %v3042 = vld [vmem:[%s5 + $0x190] sm:$0xff]
          %v3043 = vld [vmem:[%s5 + $0x198] sm:$0xff]
          %v3044 = vld [vmem:[%s5 + $0x1a0] sm:$0xff]
          %v3045 = vld [vmem:[%s5 + $0x1a8] sm:$0xff]
          %v3046 = vld [vmem:[%s5 + $0x1b0] sm:$0xff]
          %v3047 = vld [vmem:[%s5 + $0x1b8] sm:$0xff]
          %v3048 = vld [vmem:[%s5 + $0x1c0] sm:$0xff]
          %v3049 = vld [vmem:[%s5 + $0x1c8] sm:$0xff]
          %v3050 = vld [vmem:[%s5 + $0x1d0] sm:$0xff]
          %v3051 = vld [vmem:[%s5 + $0x1d8] sm:$0xff]
          %v3052 = vld [vmem:[%s5 + $0x1e0] sm:$0xff]
          %v3053 = vld [vmem:[%s5 + $0x1e8] sm:$0xff]
          %v3054 = vld [vmem:[%s5 + $0x1f0] sm:$0xff]
          %v3055 = vld [vmem:[%s5 + $0x1f8] sm:$0xff]
          %v3056 = vld [vmem:[%s5 + $0x200] sm:$0xff]
          %v3057 = vld [vmem:[%s5 + $0x208] sm:$0xff]
          %v3058 = vld [vmem:[%s5 + $0x210] sm:$0xff]
          %v3059 = vld [vmem:[%s5 + $0x218] sm:$0xff]
          %v3060 = vld [vmem:[%s5 + $0x220] sm:$0xff]
          %v3061 = vld [vmem:[%s5 + $0x228] sm:$0xff]
          %v3062 = vld [vmem:[%s5 + $0x230] sm:$0xff]
          %v3063 = vld [vmem:[%s5 + $0x238] sm:$0xff]
          %v3064 = vld [vmem:[%s5 + $0x240] sm:$0xff]
          %v3065 = vld [vmem:[%s5 + $0x248] sm:$0xff]
          %v3066 = vld [vmem:[%s5 + $0x250] sm:$0xff]
          %v3067 = vld [vmem:[%s5 + $0x258] sm:$0xff]
          %v3068 = vld [vmem:[%s5 + $0x260] sm:$0xff]
          %v3069 = vld [vmem:[%s5 + $0x268] sm:$0xff]
          %v3070 = vld [vmem:[%s5 + $0x270] sm:$0xff]
          %v3071 = vld [vmem:[%s5 + $0x278] sm:$0xff]
          %v3072 = vld [vmem:[%s5 + $0x280] sm:$0xff]
          %v3073 = vld [vmem:[%s5 + $0x288] sm:$0xff]
          %v3074 = vld [vmem:[%s5 + $0x290] sm:$0xff]
          %v3075 = vld [vmem:[%s5 + $0x298] sm:$0xff]
          %v3076 = vld [vmem:[%s5 + $0x2a0] sm:$0xff]
          %v3077 = vld [vmem:[%s5 + $0x2a8] sm:$0xff]
          %v3078 = vld [vmem:[%s5 + $0x2b0] sm:$0xff]
          %v3079 = vld [vmem:[%s5 + $0x2b8] sm:$0xff]
          %v3080 = vld [vmem:[%s5 + $0x2c0] sm:$0xff]
          %v3081 = vld [vmem:[%s5 + $0x2c8] sm:$0xff]
          %v3082 = vld [vmem:[%s5 + $0x2d0] sm:$0xff]
          %v3083 = vld [vmem:[%s5 + $0x2d8] sm:$0xff]
          %v3084 = vld [vmem:[%s5 + $0x2e0] sm:$0xff]
          %v3085 = vld [vmem:[%s5 + $0x2e8] sm:$0xff]
          %v3086 = vld [vmem:[%s5 + $0x2f0] sm:$0xff]
          %v3087 = vld [vmem:[%s5 + $0x2f8] sm:$0xff]
          %v3088 = vld [vmem:[%s5 + $0x300] sm:$0xff]
          %v3089 = vld [vmem:[%s5 + $0x308] sm:$0xff]
          %v3090 = vld [vmem:[%s5 + $0x310] sm:$0xff]
          %v3091 = vld [vmem:[%s5 + $0x318] sm:$0xff]
          %v3092 = vld [vmem:[%s5 + $0x320] sm:$0xff]
          %v3093 = vld [vmem:[%s5 + $0x328] sm:$0xff]
          %v3094 = vld [vmem:[%s5 + $0x330] sm:$0xff]
          %v3095 = vld [vmem:[%s5 + $0x338] sm:$0xff]
          %v3096 = vld [vmem:[%s5 + $0x340] sm:$0xff]
          %v3097 = vld [vmem:[%s5 + $0x348] sm:$0xff]
          %v3098 = vld [vmem:[%s5 + $0x350] sm:$0xff]
          %v3099 = vld [vmem:[%s5 + $0x358] sm:$0xff]
          %v3100 = vld [vmem:[%s5 + $0x360] sm:$0xff]
          %v3101 = vld [vmem:[%s5 + $0x368] sm:$0xff]
          %v3102 = vld [vmem:[%s5 + $0x370] sm:$0xff]
          %v3103 = vld [vmem:[%s5 + $0x378] sm:$0xff]
          %v3104 = vld [vmem:[%s5 + $0x380] sm:$0xff]
          %v3105 = vld [vmem:[%s5 + $0x388] sm:$0xff]
          %v3106 = vld [vmem:[%s5 + $0x390] sm:$0xff]
          %v3107 = vld [vmem:[%s5 + $0x398] sm:$0xff]
          %v3108 = vld [vmem:[%s5 + $0x3a0] sm:$0xff]
          %v3109 = vld [vmem:[%s5 + $0x3a8] sm:$0xff]
          %v3110 = vld [vmem:[%s5 + $0x3b0] sm:$0xff]
          %v3111 = vld [vmem:[%s5 + $0x3b8] sm:$0xff]
          %v3112 = vld [vmem:[%s5 + $0x3c0] sm:$0xff]
          %v3113 = vld [vmem:[%s5 + $0x3c8] sm:$0xff]
          %v3114 = vld [vmem:[%s5 + $0x3d0] sm:$0xff]
          %v3115 = vld [vmem:[%s5 + $0x3d8] sm:$0xff]
          %v3116 = vld [vmem:[%s5 + $0x3e0] sm:$0xff]
          %v3117 = vld [vmem:[%s5 + $0x3e8] sm:$0xff]
          %v3118 = vld [vmem:[%s5 + $0x3f0] sm:$0xff]
          %v3119 = vld [vmem:[%s5 + $0x3f8] sm:$0xff]
          %3124 = vst [vmem:[#allocation1] ss:$2 sm:$0xff] %v2984
          %s3125 = scalar_lea.vmem [#allocation1], 16
          %3126 = vst [vmem:[%s3125] ss:$2 sm:$0xff] %v2985
          %s3127 = scalar_lea.vmem [#allocation1], 32
          %3128 = vst [vmem:[%s3127] ss:$2 sm:$0xff] %v2986
          %s3129 = scalar_lea.vmem [#allocation1], 48
          %3130 = vst [vmem:[%s3129] ss:$2 sm:$0xff] %v2987
          %v3131 = vld.sshfl [vmem:[#allocation1] sm:$0xff pattern:$0x75316420]
          %v3132 = vld.sshfl [vmem:[#allocation1 + $0x8] sm:$0xff pattern:$0x75316420]
          %v3133 = vld.sshfl [vmem:[#allocation1 + $0x10] sm:$0xff pattern:$0x75316420]
          %v3134 = vld.sshfl [vmem:[#allocation1 + $0x18] sm:$0xff pattern:$0x75316420]
          %v3135 = vld.sshfl [vmem:[#allocation1 + $0x20] sm:$0xff pattern:$0x75316420]
          %v3136 = vld.sshfl [vmem:[#allocation1 + $0x28] sm:$0xff pattern:$0x75316420]
          %v3137 = vld.sshfl [vmem:[#allocation1 + $0x30] sm:$0xff pattern:$0x75316420]
          %v3138 = vld.sshfl [vmem:[#allocation1 + $0x38] sm:$0xff pattern:$0x75316420]
          %3147 = vmatpush.msra.mxu0 %v3007
          %3148 = vmatpush.msra.mxu0 %v3006
          %3149 = vmatpush.msra.mxu0 %v3005
          %3150 = vmatpush.msra.mxu0 %v3004
          %3151 = vmatpush.msra.mxu0 %v3003
          %3152 = vmatpush.msra.mxu0 %v3002
          %3153 = vmatpush.msra.mxu0 %v3001
          %3154 = vmatpush.msra.mxu0 %v3000
          %3155 = vmatpush.msra.mxu0 %v2999
          %3156 = vmatpush.msra.mxu0 %v2998
          %3157 = vmatpush.msra.mxu0 %v2997
          %3158 = vmatpush.msra.mxu0 %v2996
          %3159 = vmatpush.msra.mxu0 %v2995
          %3160 = vmatpush.msra.mxu0 %v2994
          %3161 = vmatpush.msra.mxu0 %v2993
          %3162 = vmatpush.msra.mxu0 %v2992
          %3163 = vmatmul.f32.gmra.mxu0 %v3131
          %v3164 = vpop.f32.mrf.mxu0
          %v3165 = vadd.f32 0.0, %v3164
          %3166 = vdwg.mxu0
          %3167 = vmatpush.msra.mxu0 %v3023
          %3168 = vmatpush.msra.mxu0 %v3022
          %3169 = vmatpush.msra.mxu0 %v3021
          %3170 = vmatpush.msra.mxu0 %v3020
          %3171 = vmatpush.msra.mxu0 %v3019
          %3172 = vmatpush.msra.mxu0 %v3018
          %3173 = vmatpush.msra.mxu0 %v3017
          %3174 = vmatpush.msra.mxu0 %v3016
          %3175 = vmatpush.msra.mxu0 %v3015
          %3176 = vmatpush.msra.mxu0 %v3014
          %3177 = vmatpush.msra.mxu0 %v3013
          %3178 = vmatpush.msra.mxu0 %v3012
          %3179 = vmatpush.msra.mxu0 %v3011
          %3180 = vmatpush.msra.mxu0 %v3010
          %3181 = vmatpush.msra.mxu0 %v3009
          %3182 = vmatpush.msra.mxu0 %v3008
          %3183 = vmatmul.f32.gmra.mxu0 %v3132
          %v3184 = vpop.f32.mrf.mxu0
          %v3185 = vadd.f32 %v3165, %v3184
          %3186 = vdwg.mxu0
          %3187 = vmatpush.msra.mxu0 %v3039
          %3188 = vmatpush.msra.mxu0 %v3038
          %3189 = vmatpush.msra.mxu0 %v3037
          %3190 = vmatpush.msra.mxu0 %v3036
          %3191 = vmatpush.msra.mxu0 %v3035
          %3192 = vmatpush.msra.mxu0 %v3034
          %3193 = vmatpush.msra.mxu0 %v3033
          %3194 = vmatpush.msra.mxu0 %v3032
          %3195 = vmatpush.msra.mxu0 %v3031
          %3196 = vmatpush.msra.mxu0 %v3030
          %3197 = vmatpush.msra.mxu0 %v3029
          %3198 = vmatpush.msra.mxu0 %v3028
          %3199 = vmatpush.msra.mxu0 %v3027
          %3200 = vmatpush.msra.mxu0 %v3026
          %3201 = vmatpush.msra.mxu0 %v3025
          %3202 = vmatpush.msra.mxu0 %v3024
          %3203 = vmatmul.f32.gmra.mxu0 %v3133
          %v3204 = vpop.f32.mrf.mxu0
          %v3205 = vadd.f32 %v3185, %v3204
          %3206 = vdwg.mxu0
          %3207 = vmatpush.msra.mxu0 %v3055
          %3208 = vmatpush.msra.mxu0 %v3054
          %3209 = vmatpush.msra.mxu0 %v3053
          %3210 = vmatpush.msra.mxu0 %v3052
          %3211 = vmatpush.msra.mxu0 %v3051
          %3212 = vmatpush.msra.mxu0 %v3050
          %3213 = vmatpush.msra.mxu0 %v3049
          %3214 = vmatpush.msra.mxu0 %v3048
          %3215 = vmatpush.msra.mxu0 %v3047
          %3216 = vmatpush.msra.mxu0 %v3046
          %3217 = vmatpush.msra.mxu0 %v3045
          %3218 = vmatpush.msra.mxu0 %v3044
          %3219 = vmatpush.msra.mxu0 %v3043
          %3220 = vmatpush.msra.mxu0 %v3042
          %3221 = vmatpush.msra.mxu0 %v3041
          %3222 = vmatpush.msra.mxu0 %v3040
          %3223 = vmatmul.f32.gmra.mxu0 %v3134
          %v3224 = vpop.f32.mrf.mxu0
          %v3225 = vadd.f32 %v3205, %v3224
          %3226 = vdwg.mxu0
          %3227 = vmatpush.msra.mxu0 %v3071
          %3228 = vmatpush.msra.mxu0 %v3070
          %3229 = vmatpush.msra.mxu0 %v3069
          %3230 = vmatpush.msra.mxu0 %v3068
          %3231 = vmatpush.msra.mxu0 %v3067
          %3232 = vmatpush.msra.mxu0 %v3066
          %3233 = vmatpush.msra.mxu0 %v3065
          %3234 = vmatpush.msra.mxu0 %v3064
          %3235 = vmatpush.msra.mxu0 %v3063
          %3236 = vmatpush.msra.mxu0 %v3062
          %3237 = vmatpush.msra.mxu0 %v3061
          %3238 = vmatpush.msra.mxu0 %v3060
          %3239 = vmatpush.msra.mxu0 %v3059
          %3240 = vmatpush.msra.mxu0 %v3058
          %3241 = vmatpush.msra.mxu0 %v3057
          %3242 = vmatpush.msra.mxu0 %v3056
          %3243 = vmatmul.f32.gmra.mxu0 %v3135
          %v3244 = vpop.f32.mrf.mxu0
          %v3245 = vadd.f32 %v3225, %v3244
          %3246 = vdwg.mxu0
          %3247 = vmatpush.msra.mxu0 %v3087
          %3248 = vmatpush.msra.mxu0 %v3086
          %3249 = vmatpush.msra.mxu0 %v3085
          %3250 = vmatpush.msra.mxu0 %v3084
          %3251 = vmatpush.msra.mxu0 %v3083
          %3252 = vmatpush.msra.mxu0 %v3082
          %3253 = vmatpush.msra.mxu0 %v3081
          %3254 = vmatpush.msra.mxu0 %v3080
          %3255 = vmatpush.msra.mxu0 %v3079
          %3256 = vmatpush.msra.mxu0 %v3078
          %3257 = vmatpush.msra.mxu0 %v3077
          %3258 = vmatpush.msra.mxu0 %v3076
          %3259 = vmatpush.msra.mxu0 %v3075
          %3260 = vmatpush.msra.mxu0 %v3074
          %3261 = vmatpush.msra.mxu0 %v3073
          %3262 = vmatpush.msra.mxu0 %v3072
          %3263 = vmatmul.f32.gmra.mxu0 %v3136
          %v3264 = vpop.f32.mrf.mxu0
          %v3265 = vadd.f32 %v3245, %v3264
          %3266 = vdwg.mxu0
          %3267 = vmatpush.msra.mxu0 %v3103
          %3268 = vmatpush.msra.mxu0 %v3102
          %3269 = vmatpush.msra.mxu0 %v3101
          %3270 = vmatpush.msra.mxu0 %v3100
          %3271 = vmatpush.msra.mxu0 %v3099
          %3272 = vmatpush.msra.mxu0 %v3098
          %3273 = vmatpush.msra.mxu0 %v3097
          %3274 = vmatpush.msra.mxu0 %v3096
          %3275 = vmatpush.msra.mxu0 %v3095
          %3276 = vmatpush.msra.mxu0 %v3094
          %3277 = vmatpush.msra.mxu0 %v3093
          %3278 = vmatpush.msra.mxu0 %v3092
          %3279 = vmatpush.msra.mxu0 %v3091
          %3280 = vmatpush.msra.mxu0 %v3090
          %3281 = vmatpush.msra.mxu0 %v3089
          %3282 = vmatpush.msra.mxu0 %v3088
          %3283 = vmatmul.f32.gmra.mxu0 %v3137
          %v3284 = vpop.f32.mrf.mxu0
          %v3285 = vadd.f32 %v3265, %v3284
          %3286 = vdwg.mxu0
          %3287 = vmatpush.msra.mxu0 %v3119
          %3288 = vmatpush.msra.mxu0 %v3118
          %3289 = vmatpush.msra.mxu0 %v3117
          %3290 = vmatpush.msra.mxu0 %v3116
          %3291 = vmatpush.msra.mxu0 %v3115
          %3292 = vmatpush.msra.mxu0 %v3114
          %3293 = vmatpush.msra.mxu0 %v3113
          %3294 = vmatpush.msra.mxu0 %v3112
          %3295 = vmatpush.msra.mxu0 %v3111
          %3296 = vmatpush.msra.mxu0 %v3110
          %3297 = vmatpush.msra.mxu0 %v3109
          %3298 = vmatpush.msra.mxu0 %v3108
          %3299 = vmatpush.msra.mxu0 %v3107
          %3300 = vmatpush.msra.mxu0 %v3106
          %3301 = vmatpush.msra.mxu0 %v3105
          %3302 = vmatpush.msra.mxu0 %v3104
          %3303 = vmatmul.f32.gmra.mxu0 %v3138
          %v3304 = vpop.f32.mrf.mxu0
          %v3305 = vadd.f32 %v3285, %v3304
          %3306 = vdwg.mxu0
          %v3307 = vld [vmem:[%s6] sm:$0x1]
          %v3308 = vadd.f32 %v3307, %v3305
          %3310 = vst [vmem:[#allocation1] sm:$0xff] %v3305
          %s3311 = scalar_lea.vmem [#allocation1], 1
          %v3312 = vld [vmem:[%s3311] ss:$9 sm:$0xff]
          %3313 = vrot.lane.b32.xlu0 %v3312, 124
          %v3314 = vpop.permute.xlu0 %3313
          %v3316 = vadd.f32 %v3308, %v3314
          %3317 = vst [vmem:[#allocation1] sm:$0xff] %v3305
          %s3318 = scalar_lea.vmem [#allocation1], 2
          %v3319 = vld [vmem:[%s3318] ss:$9 sm:$0xff]
          %3320 = vrot.lane.b32.xlu0 %v3319, 120
          %v3321 = vpop.permute.xlu0 %3320
          %v3323 = vadd.f32 %v3316, %v3321
          %3324 = vst [vmem:[#allocation1] sm:$0xff] %v3305
          %s3325 = scalar_lea.vmem [#allocation1], 3
          %v3326 = vld [vmem:[%s3325] ss:$9 sm:$0xff]
          %3327 = vrot.lane.b32.xlu0 %v3326, 116
          %v3328 = vpop.permute.xlu0 %3327
          %v3330 = vadd.f32 %v3323, %v3328
          %vm3331 = vcmask 24576
          %3332 = vst.msk [vmem:[#allocation14] sm:$0x1] %vm3331, %v3330
          %v3333 = vld [vmem:[%s7] sm:$0x1]
          %vm3334 = vcmp.lt.f32.partialorder %v3333, 0.5
          %v3335 = vld [vmem:[%s8] sm:$0x1]
          %v3336 = vld [vmem:[%s8 + $0x1] sm:$0x1]
          %v3337 = vsel %vm3334, 1, 0
          %3338 = vset.pattern.permute.xlu0 0
          %3339 = vperm.xlu0 %3338, %v3337
          %v3340 = vpop.permute.xlu0 %3339
          %v3341 = vperm.slane %v3340, 0
          %vm3342 = vcmp.eq.s32.totalorder %v3341, 1
          %v3343 = vsel %vm3342, %v3335, %v3336
          %v3344 = vld [vmem:[%s9] sm:$0x1]
          %3346 = vset.pattern.permute.xlu0 1
          %3347 = vperm.xlu0 %3346, %v3333
          %v3348 = vpop.permute.xlu0 %3347
          %v3350 = vperm.slane %v3348, 0
          %v3351 = vmul.f32 %v3350, %v3344
          %v3352 = vld [vmem:[%s10] sm:$0xf]
          %vm3353 = vcmask 31744
          %v3355 = vsel %vm3353, %v3343, 0
          %vm3357 = vcmask 1043456
          %v3359 = vsel %vm3357, %v3352, 0
          %3361 = vmatpush.msra.mxu0 0.0
          %3362 = vmatpush.msra.mxu0 0.0
          %3363 = vmatpush.msra.mxu0 0.0
          %3364 = vmatpush.msra.mxu0 0.0
          %3365 = vmatpush.msra.mxu0 0.0
          %3366 = vmatpush.msra.mxu0 0.0
          %3367 = vmatpush.msra.mxu0 0.0
          %3368 = vmatpush.msra.mxu0 0.0
          %3369 = vmatpush.msra.mxu0 0.0
          %3370 = vmatpush.msra.mxu0 0.0
          %3371 = vmatpush.msra.mxu0 0.0
          %3372 = vmatpush.msra.mxu0 0.0
          %3373 = vmatpush.msra.mxu0 0.0
          %3374 = vmatpush.msra.mxu0 0.0
          %3375 = vmatpush.msra.mxu0 0.0
          %3376 = vmatpush.msra.mxu0 %v3359
          %3377 = vmatmul.f32.gmra.mxu0 %v3355
          %v3378 = vpop.f32.mrf.mxu0
          %v3379 = vadd.f32 0.0, %v3378
          %3380 = vdwg.mxu0
          %v3381 = vadd.f32 %v3351, %v3379
          %v3382 = vld [vmem:[%s11] sm:$0x1]
          %v3383 = vadd.f32 %v3381, %v3382
          %v3384 = vmax.f32 %v3383, 0.0
          %v3385 = vld [vmem:[%s12] sm:$0xff]
          %v3386 = vld [vmem:[%s12 + $0x8] sm:$0xff]
          %v3387 = vld [vmem:[%s13] sm:$0x1]
          %vm3388 = vcmask 130048
          %v3390 = vsel %vm3388, %v3384, 0
          %3392 = vmatpush.msra.mxu0 0.0
          %3393 = vmatpush.msra.mxu0 0.0
          %3394 = vmatpush.msra.mxu0 0.0
          %3395 = vmatpush.msra.mxu0 0.0
          %3396 = vmatpush.msra.mxu0 0.0
          %3397 = vmatpush.msra.mxu0 0.0
          %3398 = vmatpush.msra.mxu0 0.0
          %3399 = vmatpush.msra.mxu0 0.0
          %3400 = vmatpush.msra.mxu0 0.0
          %3401 = vmatpush.msra.mxu0 0.0
          %3402 = vmatpush.msra.mxu0 0.0
          %3403 = vmatpush.msra.mxu0 0.0
          %3404 = vmatpush.msra.mxu0 0.0
          %3405 = vmatpush.msra.mxu0 0.0
          %3406 = vmatpush.msra.mxu0 %v3386
          %3407 = vmatpush.msra.mxu0 %v3385
          %3408 = vmatmul.f32.gmra.mxu0 %v3390
          %v3409 = vpop.f32.mrf.mxu0
          %v3410 = vadd.f32 %v3387, %v3409
          %3411 = vdwg.mxu0
          %v3412 = vsel %vm3331, %v3410, 0.0
          %3413 = vadd.xlane.f32.xlu0 %v3412
          %v3414 = vpop.xlane.xlu0 %3413
          %v3415 = vrcp.pop 4.0
          %v3416 = vmul.f32 4.0, %v3415
          %v3417 = vsub.f32 1.0, %v3416
          %v3418 = vmul.f32 %v3415, %v3417
          %v3419 = vadd.f32 %v3415, %v3418
          %vm3420 = vweird.f32 %v3415
          %v3421 = vsel %vm3420, %v3415, %v3419
          %v3422 = vmul.f32 %v3414, %v3421
          %v3423 = vsub.f32 %v3410, %v3422
          %v3424 = vmul.f32 %v3423, %v3423
          %v3425 = vsel %vm3331, %v3424, 0.0
          %3426 = vadd.xlane.f32.xlu0 %v3425
          %v3427 = vpop.xlane.xlu0 %3426
          %v3428 = vmul.f32 %v3427, %v3421
          %v3429 = vadd.f32 %v3428, 1e-05
          %v3430 = vrsqrt.pop %v3429
          %v3431 = vmul.f32 %v3430, %v3429
          %v3432 = vmul.f32 %v3431, %v3430
          %v3433 = vmul.f32 0.5, %v3432
          %v3434 = vsub.f32 1.5, %v3433
          %v3435 = vmul.f32 %v3430, %v3434
          %vm3436 = vweird.f32 %v3429
          %vm3437 = vweird.f32 %v3430
          %vm3438 = vmor %vm3436, %vm3437
          %v3439 = vsel %vm3438, %v3430, %v3435
          %v3440 = vmul.f32 %v3423, %v3439
          %v3441 = vld [vmem:[%s14] sm:$0x1]
          %v3442 = vmul.f32 %v3440, %v3441
          %v3443 = vld [vmem:[%s15] sm:$0x1]
          %v3444 = vadd.f32 %v3442, %v3443
          %3445 = vst.msk [vmem:[#allocation15] sm:$0x1] %vm3331, %v3444
          %v3446 = vsub.f32 0.0, %v3444
          %v3447 = vmul.f32 %v3446, 1.442695
          %v3448 = vpow.pop %v3447
          %v3449 = vadd.f32 %v3448, 1.0
          %v3450 = vrcp.pop %v3449
          %v3451 = vmul.f32 %v3449, %v3450
          %v3452 = vsub.f32 1.0, %v3451
          %v3453 = vmul.f32 %v3450, %v3452
          %v3454 = vadd.f32 %v3450, %v3453
          %vm3455 = vweird.f32 %v3449
          %vm3456 = vweird.f32 %v3450
          %vm3457 = vmor %vm3455, %vm3456
          %v3458 = vsel %vm3457, %v3450, %v3454
          %v3459 = vand.u32 2147483647, %v3449
          %vm3460 = vcmp.eq.f32.partialorder %v3459, 8.507059e+37
          %v3461 = vand.u32 %v3449, 2147483648
          %v3462 = vor.u32 1.1754944e-38, %v3461
          %v3463 = vsel %vm3460, %v3462, %v3458
          %v3464 = vmul.f32 1.0, %v3463
          %3465 = vst.msk [vmem:[#allocation17] sm:$0x1] %vm3331, %v3464
        $region112: #{tpu_custom_call.1} parent=83 // pred_fallthru
          _
        // Predicated region
        $region113: #{tpu_custom_call.1} parent=83 // pred_check
          %p3466 = pneg %p406
        $region114: #{tpu_custom_call.1} parent=83 // pred_check_branch
          %3468 = sbr.rel (%p3466) target = $region116
        $region115: #{tpu_custom_call.1} parent=83 // pred_region
          _
        $region116: #{tpu_custom_call.1} parent=83 // pred_fallthru
          _
        // Predicated region
        $region117: #{tpu_custom_call.1} parent=83 // pred_check
          %p3469 = pneg %p427
        $region118: #{tpu_custom_call.1} parent=83 // pred_check_branch
          %3471 = sbr.rel (%p3469) target = $region120
        $region119: #{tpu_custom_call.1} parent=83 // pred_region
          %3473 = vsyncadd [#allocation8], 0
          %s3475 = sshll.u32 [#allocation11], 4
          %s3476 = int_to_ptr.vmem [resolvable:$true] %s3475
          %s3477 = sshll.u32 %s17, 4
          %s3478 = int_to_ptr.hbm [resolvable:$true] %s3477
          %3480 = dma.vmem_to_hbm [thread:$0]  %s3476, 128, %s3478, [#allocation8]
        $region120: #{tpu_custom_call.1} parent=83 // pred_fallthru
          _
        // Predicated region
        $region121: #{tpu_custom_call.1} parent=83 // pred_check
          %p3481 = pneg %p448
        $region122: #{tpu_custom_call.1} parent=83 // pred_check_branch
          %3483 = sbr.rel (%p3481) target = $region124
        $region123: #{tpu_custom_call.1} parent=83 // pred_region
          %3485 = vsyncadd [#allocation13], 0
          %s3487 = sshll.u32 [#allocation12], 4
          %s3488 = int_to_ptr.vmem [resolvable:$true] %s3487
          %s3489 = sshll.u32 %s18, 4
          %s3490 = int_to_ptr.hbm [resolvable:$true] %s3489
          %3492 = dma.vmem_to_hbm [thread:$0]  %s3488, 512, %s3490, [#allocation13]
        $region124: #{tpu_custom_call.1} parent=83 // pred_fallthru
          _
        // Predicated region
        $region125: #{tpu_custom_call.1} parent=83 // pred_check
          %p3493 = pneg %p469
        $region126: #{tpu_custom_call.1} parent=83 // pred_check_branch
          %3495 = sbr.rel (%p3493) target = $region128
        $region127: #{tpu_custom_call.1} parent=83 // pred_region
          %3497 = vsyncadd [#allocation13], 0
          %s3499 = sshll.u32 [#allocation14], 4
          %s3500 = int_to_ptr.vmem [resolvable:$true] %s3499
          %s3501 = sshll.u32 %s19, 4
          %s3502 = int_to_ptr.hbm [resolvable:$true] %s3501
          %3504 = dma.vmem_to_hbm [thread:$0]  %s3500, 16, %s3502, [#allocation13]
        $region128: #{tpu_custom_call.1} parent=83 // pred_fallthru
          _
        // Predicated region
        $region129: #{tpu_custom_call.1} parent=83 // pred_check
          %p3505 = pneg %p490
        $region130: #{tpu_custom_call.1} parent=83 // pred_check_branch
          %3507 = sbr.rel (%p3505) target = $region132
        $region131: #{tpu_custom_call.1} parent=83 // pred_region
          %3509 = vsyncadd [#allocation16], 0
          %s3511 = sshll.u32 [#allocation15], 4
          %s3512 = int_to_ptr.vmem [resolvable:$true] %s3511
          %s3513 = sshll.u32 %s20, 4
          %s3514 = int_to_ptr.hbm [resolvable:$true] %s3513
          %3516 = dma.vmem_to_hbm [thread:$0]  %s3512, 16, %s3514, [#allocation16]
        $region132: #{tpu_custom_call.1} parent=83 // pred_fallthru
          _
        // Predicated region
        $region133: #{tpu_custom_call.1} parent=83 // pred_check
          %p3517 = pneg %p511
        $region134: #{tpu_custom_call.1} parent=83 // pred_check_branch
          %3519 = sbr.rel (%p3517) target = $region136
        $region135: #{tpu_custom_call.1} parent=83 // pred_region
          %3521 = vsyncadd [#allocation16], 0
          %s3523 = sshll.u32 [#allocation17], 4
          %s3524 = int_to_ptr.vmem [resolvable:$true] %s3523
          %s3525 = sshll.u32 %s21, 4
          %s3526 = int_to_ptr.hbm [resolvable:$true] %s3525
          %3528 = dma.vmem_to_hbm [thread:$0]  %s3524, 16, %s3526, [#allocation16]
        $region136: #{tpu_custom_call.1} parent=83 // pred_fallthru
          _
        // Predicated region
        $region137: #{tpu_custom_call.1} parent=83 // pred_check
          %p3529 = pneg %p406
        $region138: #{tpu_custom_call.1} parent=83 // pred_check_branch
          %3531 = sbr.rel (%p3529) target = $region140
        $region139: #{tpu_custom_call.1} parent=83 // pred_region
          _
        $region140: #{tpu_custom_call.1} parent=83 // pred_fallthru
          _
        // Predicated region
        $region141: #{tpu_custom_call.1} parent=83 // pred_check
          %p3532 = pneg %p427
        $region142: #{tpu_custom_call.1} parent=83 // pred_check_branch
          %3534 = sbr.rel (%p3532) target = $region144
        $region143: #{tpu_custom_call.1} parent=83 // pred_region
          %3536 = dma.done [#allocation8], 128
        $region144: #{tpu_custom_call.1} parent=83 // pred_fallthru
          _
        // Predicated region
        $region145: #{tpu_custom_call.1} parent=83 // pred_check
          %p3537 = pneg %p448
        $region146: #{tpu_custom_call.1} parent=83 // pred_check_branch
          %3539 = sbr.rel (%p3537) target = $region148
        $region147: #{tpu_custom_call.1} parent=83 // pred_region
          %3541 = dma.done [#allocation13], 512
        $region148: #{tpu_custom_call.1} parent=83 // pred_fallthru
          _
        // Predicated region
        $region149: #{tpu_custom_call.1} parent=83 // pred_check
          %p3542 = pneg %p469
        $region150: #{tpu_custom_call.1} parent=83 // pred_check_branch
          %3544 = sbr.rel (%p3542) target = $region152
        $region151: #{tpu_custom_call.1} parent=83 // pred_region
          %3546 = dma.done [#allocation13], 16
        $region152: #{tpu_custom_call.1} parent=83 // pred_fallthru
          _
        // Predicated region
        $region153: #{tpu_custom_call.1} parent=83 // pred_check
          %p3547 = pneg %p490
        $region154: #{tpu_custom_call.1} parent=83 // pred_check_branch
          %3549 = sbr.rel (%p3547) target = $region156
        $region155: #{tpu_custom_call.1} parent=83 // pred_region
          %3551 = dma.done [#allocation16], 16
        $region156: #{tpu_custom_call.1} parent=83 // pred_fallthru
          _
        // Predicated region
        $region157: #{tpu_custom_call.1} parent=83 // pred_check
          %p3552 = pneg %p511
        $region158: #{tpu_custom_call.1} parent=83 // pred_check_branch
          %3554 = sbr.rel (%p3552) target = $region160
        $region159: #{tpu_custom_call.1} parent=83 // pred_region
          %3556 = dma.done [#allocation16], 16
        $region160: #{tpu_custom_call.1} parent=83 // pred_fallthru
          _
      $region84: #{tpu_custom_call.1} parent=5 // pred_fallthru
        _
      %p3557 = scmp.le.s32.totalorder 2, %s35
      // Predicated region
      $region161: #{tpu_custom_call.1} parent=5 // pred_check
        %p3558 = pneg %p3557
      $region162: #{tpu_custom_call.1} parent=5 // pred_check_branch
        %3560 = sbr.rel (%p3558) target = $region164
      $region163: #{tpu_custom_call.1} parent=5 // pred_region
        %s3561 = ssub.s32 %s35, 2
      $region164: #{tpu_custom_call.1} parent=5 // pred_fallthru
        _
    $region6: #{tpu_custom_call.1} parent=1 // loop_footer
      %s39 = sadd.s32 1, %s35
    $region7: #{tpu_custom_call.1} parent=1 // loop_footer_branch
      %34 = sbr.rel target = $region3
    $region8: #{tpu_custom_call.1} parent=1 // loop_exit
      _
    %3562 = vsyncpa [#allocation7], 1
    %s3563 = scalar_lea.sflag [#allocation7], 1
    %3564 = vsyncpa %s3563, 1
    %3565 = vsyncpa [#allocation10], 1
    %3566 = vsyncpa [#allocation8], 1
    %s3567 = scalar_lea.sflag [#allocation8], 1
    %3568 = vsyncpa %s3567, 1
    %3569 = vsyncpa [#allocation13], 1
    %3570 = vsyncpa [#allocation16], 1

</llo_original>
